<compile_context>
chip_gen: v6e
topology: v6e:2x2x1
jax: 0.10.0
libtpu: 0.0.40
codegen_flags: <defaults>
</compile_context>

<pallas_src>
import numpy as np
import jax
import jax.numpy as jnp
from jax.experimental import pallas as pl
from jax.experimental.pallas import tpu as pltpu


def make_avgpool_matrix(T, kernel_size, stride, padding):
    """Dense matrix implementing nn.AvgPool1d (count_include_pad=True, ceil_mode=False)."""
    Tp = (T + 2 * padding - kernel_size) // stride + 1
    mat = np.zeros((Tp, T), dtype=np.float32)
    for t in range(Tp):
        for k in range(kernel_size):
            j = t * stride + k - padding
            if 0 <= j < T:
                mat[t, j] += 1.0 / kernel_size
    return jnp.asarray(mat), Tp


def _round_up(x, m):
    return ((x + m - 1) // m) * m


def _pick_batch_tile(N, block_b):
    """Large tile (amortize per-step overhead), multiple of 8, and >=2 grid steps when
    possible so v7x's two TensorCores both get work."""
    if N <= 8:
        return N
    half = _round_up((N + 1) // 2, 8)          # ~ceil(N/2), multiple of 8
    return max(8, min(block_b, half))


def cnn_self_attention_pallas(features, att_mask, params, *, kernel_size, padding,
                              block_b=128, mxu_dtype=jnp.bfloat16):
    """CNNSelfAttention forward pass (eval mode).

    features: (N, T, Cin) channels-last.  att_mask: (N, L3) additive mask.
    params: pool_mat (Tp,T); c{1,2,3}_w (K,Cin|H,H); c{1,2,3}_b (1,H); att_w (1,H);
            att_b (1,1); f1_w (H,H); f1_b (1,H); f2_w (H,O); f2_b (1,O).
    """
    N, T, Cin = features.shape
    K, P = kernel_size, padding
    pool_mat = params["pool_mat"]
    Tp = pool_mat.shape[0]
    H = params["c1_w"].shape[2]
    O = params["f2_w"].shape[1]

    L1 = Tp + 2 * P - K + 1
    L2 = L1 + 2 * P - K + 1
    L3 = L2 + 2 * P - K + 1
    assert att_mask.shape == (N, L3), (att_mask.shape, (N, L3))

    # ---------------- Host-side prep (cheap, once per call) --------------------------
    # AvgPool hoisted out of the kernel as one batched einsum; conv1's zero halo is
    # folded into the pooling matrix so the kernel input is already time-padded.
    Lp = Tp + 2 * P
    pool_pad = jnp.concatenate(
        [jnp.zeros((P, T), jnp.float32), pool_mat.astype(jnp.float32),
         jnp.zeros((P, T), jnp.float32)], axis=0)                      # (Lp, T)
    x_pooled = jnp.einsum("pt,ntc->npc", pool_pad,
                          features.astype(jnp.float32))                # (N, Lp, Cin)

    # att_b is constant over time -> fold into the additive mask (softmax shift).
    mask_f32 = att_mask.astype(jnp.float32) + params["att_b"][0, 0]

    # Pack all weight matrices into one slab (cast once to MXU dtype) and all bias /
    # attention vectors into one small f32 slab -> only 4 kernel inputs.
    itemsize = np.dtype(mxu_dtype).itemsize
    ralign = 8 * max(1, 4 // itemsize)          # sublane-tile row alignment for slab dtype
    CW = max(H, O)
    seg_rows = [K * Cin, K * H, K * H, H, H]
    offs, cur = [], 0
    for r in seg_rows:
        offs.append(cur)
        cur = _round_up(cur + r, ralign)
    OFF_C1, OFF_C2, OFF_C3, OFF_F1, OFF_F2 = offs
    RW = max(cur, ralign)

    wslab = np.zeros((RW, CW), np.float32)
    wslab[OFF_C1:OFF_C1 + K * Cin, :H] = np.asarray(params["c1_w"]).reshape(K * Cin, H)
    wslab[OFF_C2:OFF_C2 + K * H, :H] = np.asarray(params["c2_w"]).reshape(K * H, H)
    wslab[OFF_C3:OFF_C3 + K * H, :H] = np.asarray(params["c3_w"]).reshape(K * H, H)
    wslab[OFF_F1:OFF_F1 + H, :H] = np.asarray(params["f1_w"])
    wslab[OFF_F2:OFF_F2 + H, :O] = np.asarray(params["f2_w"])
    wslab = jnp.asarray(wslab).astype(mxu_dtype)                       # host-side cast, once

    bslab = np.zeros((8, CW), np.float32)
    bslab[0, :H] = np.asarray(params["c1_b"]).reshape(H)
    bslab[1, :H] = np.asarray(params["c2_b"]).reshape(H)
    bslab[2, :H] = np.asarray(params["c3_b"]).reshape(H)
    bslab[3, :H] = np.asarray(params["att_w"]).reshape(H)
    bslab[4, :H] = np.asarray(params["f1_b"]).reshape(H)
    bslab[5, :O] = np.asarray(params["f2_b"]).reshape(O)
    bslab = jnp.asarray(bslab)

    # ---------------- Batch tiling ----------------------------------------------------
    B_TILE = _pick_batch_tile(N, block_b)
    N_pad = ((N + B_TILE - 1) // B_TILE) * B_TILE
    if N_pad != N:
        x_pooled = jnp.pad(x_pooled, ((0, N_pad - N), (0, 0), (0, 0)))
        mask_f32 = jnp.pad(mask_f32, ((0, N_pad - N), (0, 0)))
    # Lane-dense output store (batch on the 128-lane axis) once the tile fills a vreg.
    transposed_out = (B_TILE % 128 == 0)

    def kernel(x_ref, mask_ref, w_ref, b_ref, out_ref):
        B = x_ref.shape[0]

        def mm(a, b):
            # Activations cast at the matmul; weights arrive already in mxu_dtype.
            return jnp.dot(a.astype(mxu_dtype), b, preferred_element_type=jnp.float32)

        def conv(h_pad, w_off, C, Cout, b_row):
            # h_pad: (B, L_out + K - 1, C) f32, time already zero-padded.
            # K-tap accumulate: channel (lane) axis stays aligned; batch folded into M.
            L_out = h_pad.shape[1] - (K - 1)
            acc = jnp.zeros((B * L_out, Cout), jnp.float32)
            for k in range(K):
                lhs = h_pad[:, k:k + L_out, :].reshape(B * L_out, C)
                acc = acc + mm(lhs, w_ref[w_off + k * C: w_off + (k + 1) * C, :Cout])
            acc = acc + b_ref[b_row:b_row + 1, :Cout]
            return acc.reshape(B, L_out, Cout)

        def pad_time(h):
            if P == 0:
                return h
            z = jnp.zeros((B, P, h.shape[2]), jnp.float32)
            return jnp.concatenate([z, h, z], axis=1)

        # TODO(synk): nn.Dropout layers are identity in eval mode; not modeled.
        h1 = jnp.maximum(conv(x_ref[...], OFF_C1, Cin, H, 0), 0.0)          # (B, L1, H)
        h2 = jnp.maximum(conv(pad_time(h1), OFF_C2, H, H, 1), 0.0)          # (B, L2, H)
        h3 = conv(pad_time(h2), OFF_C3, H, H, 2)                            # (B, L3, H)

        # Self-attention pooling (softmax over time; att_b already folded into the mask).
        att_w = b_ref[3:4, :H].reshape(1, 1, H)
        logits = jnp.sum(h3 * att_w, axis=-1) + mask_ref[...]               # (B, L3)
        m = jnp.max(logits, axis=-1, keepdims=True)
        e = jnp.exp(logits - m)
        att = e / jnp.sum(e, axis=-1, keepdims=True)     # exact division; EUP is idle here
        rep = jnp.sum(h3 * att[:, :, None], axis=1)                         # (B, H)

        # Output MLP head.
        hid = jnp.maximum(mm(rep, w_ref[OFF_F1:OFF_F1 + H, :H]) + b_ref[4:5, :H], 0.0)
        out = mm(hid, w_ref[OFF_F2:OFF_F2 + H, :O]) + b_ref[5:6, :O]        # (B, O)
        if transposed_out:
            out_ref[...] = out.T.astype(out_ref.dtype)                      # (O, B) lane-dense
        else:
            out_ref[...] = out.astype(out_ref.dtype)                        # (B, O)

    in_specs = [
        pl.BlockSpec((B_TILE, Lp, Cin), lambda b: (b, 0, 0)),   # pooled (+halo) features
        pl.BlockSpec((B_TILE, L3), lambda b: (b, 0)),           # additive mask (+att_b)
        pl.BlockSpec((RW, CW), lambda b: (0, 0)),               # packed weights (mxu dtype)
        pl.BlockSpec((8, CW), lambda b: (0, 0)),                # packed biases / att vec
    ]
    if transposed_out:
        out_spec = pl.BlockSpec((O, B_TILE), lambda b: (0, b))
        out_shape = jax.ShapeDtypeStruct((O, N_pad), jnp.float32)
    else:
        out_spec = pl.BlockSpec((B_TILE, O), lambda b: (b, 0))
        out_shape = jax.ShapeDtypeStruct((N_pad, O), jnp.float32)

    flops_per_sample = 2 * (L1 * K * Cin * H + (L2 + L3) * K * H * H
                            + 2 * L3 * H + H * H + H * O)
    bytes_accessed = int(4 * N_pad * (Lp * Cin + L3 + O)
                         + RW * CW * itemsize + 8 * CW * 4)

    out = pl.pallas_call(
        kernel,
        out_shape=out_shape,
        grid_spec=pltpu.PrefetchScalarGridSpec(
            num_scalar_prefetch=0,
            grid=(N_pad // B_TILE,),
            in_specs=in_specs,
            out_specs=out_spec,
        ),
        compiler_params=pltpu.CompilerParams(
            dimension_semantics=("parallel",),
            vmem_limit_bytes=32 * 1024 * 1024,
        ),
        cost_estimate=pl.CostEstimate(flops=N_pad * flops_per_sample,
                                      transcendentals=N_pad * (L3 + 1),
                                      bytes_accessed=bytes_accessed),
    )(x_pooled, mask_f32, wslab, bslab)

    if transposed_out:
        out = out.T
    return out[:N]


def reference(features, att_mask, params, *, kernel_size, padding):
    """Pure-JAX reference of the same forward pass (for verification)."""
    K, P = kernel_size, padding
    pool_mat = params["pool_mat"]

    def conv1d(h, w, b):
        L_in = h.shape[0]
        L_out = L_in + 2 * P - K + 1
        hp = jnp.pad(h, ((P, P), (0, 0)))
        acc = jnp.zeros((L_out, w.shape[2]), jnp.float32)
        for k in range(K):
            acc = acc + hp[k:k + L_out, :] @ w[k]
        return acc + b

    def single(x, m):
        pooled = pool_mat @ x
        h1 = jax.nn.relu(conv1d(pooled, params["c1_w"], params["c1_b"]))
        h2 = jax.nn.relu(conv1d(h1, params["c2_w"], params["c2_b"]))
        h3 = conv1d(h2, params["c3_w"], params["c3_b"])
        logits = jnp.sum(h3 * params["att_w"], axis=1) + params["att_b"][0, 0]
        att = jax.nn.softmax(logits + m)[:, None]
        rep = jnp.sum(h3 * att, axis=0)
        hid = jax.nn.relu(rep @ params["f1_w"] + params["f1_b"][0])
        return hid @ params["f2_w"] + params["f2_b"][0]

    return jax.vmap(single)(features, att_mask)


if __name__ == "__main__":
    # Module config: input_dim=16, hidden_dim=32, kernel_size=5, padding=2, pooling=2,
    # dropout ignored (eval), output_dim=8; seq len T=32.
    T = 32
    Cin, H, O = 16, 32, 8
    K, P, STRIDE = 5, 2, 2

    pool_mat, Tp = make_avgpool_matrix(T, K, STRIDE, P)
    L3 = Tp  # with K=5, P=2 every conv preserves length

    key = jax.random.PRNGKey(0)
    ks = jax.random.split(key, 14)
    s = 0.1
    params = {
        "pool_mat": pool_mat,
        "c1_w": jax.random.normal(ks[0], (K, Cin, H), jnp.float32) * s,
        "c1_b": jax.random.normal(ks[1], (1, H), jnp.float32) * s,
        "c2_w": jax.random.normal(ks[2], (K, H, H), jnp.float32) * s,
        "c2_b": jax.random.normal(ks[3], (1, H), jnp.float32) * s,
        "c3_w": jax.random.normal(ks[4], (K, H, H), jnp.float32) * s,
        "c3_b": jax.random.normal(ks[5], (1, H), jnp.float32) * s,
        "att_w": jax.random.normal(ks[6], (1, H), jnp.float32) * s,
        "att_b": jax.random.normal(ks[7], (1, 1), jnp.float32) * s,
        "f1_w": jax.random.normal(ks[8], (H, H), jnp.float32) * s,
        "f1_b": jax.random.normal(ks[9], (1, H), jnp.float32) * s,
        "f2_w": jax.random.normal(ks[10], (H, O), jnp.float32) * s,
        "f2_b": jax.random.normal(ks[11], (1, O), jnp.float32) * s,
    }

    def make_inputs(N, k):
        feats = jax.random.normal(k, (N, T, Cin), jnp.float32)
        lengths = (L3 - (jnp.arange(N) % 5)).astype(jnp.int32)
        mask = jnp.where(jnp.arange(L3)[None, :] < lengths[:, None], 0.0, -1e9)
        return feats, mask.astype(jnp.float32)

    # (1) small batch: B_TILE=8, grid=2, plain output layout, f32 MXU path -> tight tol.
    feats, mask = make_inputs(16, ks[12])
    out = jax.block_until_ready(
        cnn_self_attention_pallas(feats, mask, params, kernel_size=K, padding=P,
                                  block_b=128, mxu_dtype=jnp.float32))
    ref = reference(feats, mask, params, kernel_size=K, padding=P)
    np.testing.assert_allclose(np.asarray(out), np.asarray(ref), rtol=1e-3, atol=1e-4)

    # (2) larger batch: B_TILE=128, grid=2, lane-dense transposed output store,
    #     bf16 MXU operands (production default) -> looser tolerance.
    feats2, mask2 = make_inputs(256, ks[13])
    out2 = jax.block_until_ready(
        cnn_self_attention_pallas(feats2, mask2, params, kernel_size=K, padding=P,
                                  block_b=128, mxu_dtype=jnp.bfloat16))
    ref2 = reference(feats2, mask2, params, kernel_size=K, padding=P)
    np.testing.assert_allclose(np.asarray(out2), np.asarray(ref2), rtol=5e-2, atol=5e-2)

    print("KERNEL_OK")
</pallas_src>

<mosaic_0001>
module attributes {stable_mosaic.version = 11 : i64} {
  func.func @kernel(%arg0: i32, %arg1: memref<8x20x16xf32, #tpu.memory_space<vmem>>, %arg2: memref<8x16xf32, #tpu.memory_space<vmem>>, %arg3: memref<464x32xf32, #tpu.memory_space<vmem>>, %arg4: memref<8x32xf32, #tpu.memory_space<vmem>>, %arg5: memref<8x8xf32, #tpu.memory_space<vmem>>) attributes {dimension_semantics = [#tpu.dimension_semantics<parallel>], iteration_bounds = array<i64: 2>, scalar_prefetch = 0 : i64, scratch_operands = 0 : i64, tpu.core_type = #tpu.core_type<tc>, window_params = [{transform_indices = @transform_0, window_bounds = array<i64: 8, 20, 16>}, {transform_indices = @transform_1, window_bounds = array<i64: 8, 16>}, {pipeline_mode = #tpu.pipeline_mode<synchronous>, transform_indices = @transform_2, window_bounds = array<i64: 464, 32>}, {pipeline_mode = #tpu.pipeline_mode<synchronous>, transform_indices = @transform_3, window_bounds = array<i64: 8, 32>}, {transform_indices = @transform_4, window_bounds = array<i64: 8, 8>}]} {
    %c0 = arith.constant 0 : index
    %c0_0 = arith.constant 0 : index
    %c0_1 = arith.constant 0 : index
    %0 = vector.load %arg1[%c0, %c0_0, %c0_1] : memref<8x20x16xf32, #tpu.memory_space<vmem>>, vector<8x20x16xf32>
    %cst = arith.constant 0.000000e+00 : f32
    %1 = vector.broadcast %cst : f32 to vector<128x32xf32>
    %2 = vector.extract_strided_slice %0 {offsets = [0, 0, 0], sizes = [8, 16, 16], strides = [1, 1, 1]} : vector<8x20x16xf32> to vector<8x16x16xf32>
    %3 = vector.shape_cast %2 : vector<8x16x16xf32> to vector<128x16xf32>
    %c0_2 = arith.constant 0 : index
    %c0_3 = arith.constant 0 : index
    %4 = vector.load %arg3[%c0_2, %c0_3] : memref<464x32xf32, #tpu.memory_space<vmem>>, vector<16x32xf32>
    %cst_4 = arith.constant dense<0.000000e+00> : vector<128x32xf32>
    %5 = tpu.matmul %3, %4, %cst_4 {dimension_numbers = #tpu.dot_dimension_numbers<[1], [0], [0], [1], [0, 0, 1, 1], [], []>} : vector<128x16xf32>, vector<16x32xf32>, vector<128x32xf32> -> vector<128x32xf32>
    %6 = arith.addf %1, %5 : vector<128x32xf32>
    %7 = vector.extract_strided_slice %0 {offsets = [0, 1, 0], sizes = [8, 16, 16], strides = [1, 1, 1]} : vector<8x20x16xf32> to vector<8x16x16xf32>
    %8 = vector.shape_cast %7 : vector<8x16x16xf32> to vector<128x16xf32>
    %c16 = arith.constant 16 : index
    %c0_5 = arith.constant 0 : index
    %9 = vector.load %arg3[%c16, %c0_5] : memref<464x32xf32, #tpu.memory_space<vmem>>, vector<16x32xf32>
    %cst_6 = arith.constant dense<0.000000e+00> : vector<128x32xf32>
    %10 = tpu.matmul %8, %9, %cst_6 {dimension_numbers = #tpu.dot_dimension_numbers<[1], [0], [0], [1], [0, 0, 1, 1], [], []>} : vector<128x16xf32>, vector<16x32xf32>, vector<128x32xf32> -> vector<128x32xf32>
    %11 = arith.addf %6, %10 : vector<128x32xf32>
    %12 = vector.extract_strided_slice %0 {offsets = [0, 2, 0], sizes = [8, 16, 16], strides = [1, 1, 1]} : vector<8x20x16xf32> to vector<8x16x16xf32>
    %13 = vector.shape_cast %12 : vector<8x16x16xf32> to vector<128x16xf32>
    %c32 = arith.constant 32 : index
    %c0_7 = arith.constant 0 : index
    %14 = vector.load %arg3[%c32, %c0_7] : memref<464x32xf32, #tpu.memory_space<vmem>>, vector<16x32xf32>
    %cst_8 = arith.constant dense<0.000000e+00> : vector<128x32xf32>
    %15 = tpu.matmul %13, %14, %cst_8 {dimension_numbers = #tpu.dot_dimension_numbers<[1], [0], [0], [1], [0, 0, 1, 1], [], []>} : vector<128x16xf32>, vector<16x32xf32>, vector<128x32xf32> -> vector<128x32xf32>
    %16 = arith.addf %11, %15 : vector<128x32xf32>
    %17 = vector.extract_strided_slice %0 {offsets = [0, 3, 0], sizes = [8, 16, 16], strides = [1, 1, 1]} : vector<8x20x16xf32> to vector<8x16x16xf32>
    %18 = vector.shape_cast %17 : vector<8x16x16xf32> to vector<128x16xf32>
    %c48 = arith.constant 48 : index
    %c0_9 = arith.constant 0 : index
    %19 = vector.load %arg3[%c48, %c0_9] : memref<464x32xf32, #tpu.memory_space<vmem>>, vector<16x32xf32>
    %cst_10 = arith.constant dense<0.000000e+00> : vector<128x32xf32>
    %20 = tpu.matmul %18, %19, %cst_10 {dimension_numbers = #tpu.dot_dimension_numbers<[1], [0], [0], [1], [0, 0, 1, 1], [], []>} : vector<128x16xf32>, vector<16x32xf32>, vector<128x32xf32> -> vector<128x32xf32>
    %21 = arith.addf %16, %20 : vector<128x32xf32>
    %22 = vector.extract_strided_slice %0 {offsets = [0, 4, 0], sizes = [8, 16, 16], strides = [1, 1, 1]} : vector<8x20x16xf32> to vector<8x16x16xf32>
    %23 = vector.shape_cast %22 : vector<8x16x16xf32> to vector<128x16xf32>
    %c64 = arith.constant 64 : index
    %c0_11 = arith.constant 0 : index
    %24 = vector.load %arg3[%c64, %c0_11] : memref<464x32xf32, #tpu.memory_space<vmem>>, vector<16x32xf32>
    %cst_12 = arith.constant dense<0.000000e+00> : vector<128x32xf32>
    %25 = tpu.matmul %23, %24, %cst_12 {dimension_numbers = #tpu.dot_dimension_numbers<[1], [0], [0], [1], [0, 0, 1, 1], [], []>} : vector<128x16xf32>, vector<16x32xf32>, vector<128x32xf32> -> vector<128x32xf32>
    %26 = arith.addf %21, %25 : vector<128x32xf32>
    %c0_13 = arith.constant 0 : index
    %c0_14 = arith.constant 0 : index
    %27 = vector.load %arg4[%c0_13, %c0_14] : memref<8x32xf32, #tpu.memory_space<vmem>>, vector<1x32xf32>
    %28 = vector.broadcast %27 : vector<1x32xf32> to vector<128x32xf32>
    %29 = arith.addf %26, %28 : vector<128x32xf32>
    %30 = vector.shape_cast %29 : vector<128x32xf32> to vector<8x16x32xf32>
    %cst_15 = arith.constant 0.000000e+00 : f32
    %31 = vector.broadcast %cst_15 : f32 to vector<8x16x32xf32>
    %32 = arith.maximumf %30, %31 : vector<8x16x32xf32>
    %cst_16 = arith.constant 0.000000e+00 : f32
    %33 = vector.broadcast %cst_16 : f32 to vector<8x2x32xf32>
    %34 = tpu.concatenate %33, %32, %33 in 1 : vector<8x2x32xf32>, vector<8x16x32xf32>, vector<8x2x32xf32> -> vector<8x20x32xf32>
    %cst_17 = arith.constant 0.000000e+00 : f32
    %35 = vector.broadcast %cst_17 : f32 to vector<128x32xf32>
    %36 = vector.extract_strided_slice %34 {offsets = [0, 0, 0], sizes = [8, 16, 32], strides = [1, 1, 1]} : vector<8x20x32xf32> to vector<8x16x32xf32>
    %37 = vector.shape_cast %36 : vector<8x16x32xf32> to vector<128x32xf32>
    %c80 = arith.constant 80 : index
    %c0_18 = arith.constant 0 : index
    %38 = vector.load %arg3[%c80, %c0_18] : memref<464x32xf32, #tpu.memory_space<vmem>>, vector<32x32xf32>
    %cst_19 = arith.constant dense<0.000000e+00> : vector<128x32xf32>
    %39 = tpu.matmul %37, %38, %cst_19 {dimension_numbers = #tpu.dot_dimension_numbers<[1], [0], [0], [1], [0, 0, 1, 1], [], []>} : vector<128x32xf32>, vector<32x32xf32>, vector<128x32xf32> -> vector<128x32xf32>
    %40 = arith.addf %35, %39 : vector<128x32xf32>
    %41 = vector.extract_strided_slice %34 {offsets = [0, 1, 0], sizes = [8, 16, 32], strides = [1, 1, 1]} : vector<8x20x32xf32> to vector<8x16x32xf32>
    %42 = vector.shape_cast %41 : vector<8x16x32xf32> to vector<128x32xf32>
    %c112 = arith.constant 112 : index
    %c0_20 = arith.constant 0 : index
    %43 = vector.load %arg3[%c112, %c0_20] : memref<464x32xf32, #tpu.memory_space<vmem>>, vector<32x32xf32>
    %cst_21 = arith.constant dense<0.000000e+00> : vector<128x32xf32>
    %44 = tpu.matmul %42, %43, %cst_21 {dimension_numbers = #tpu.dot_dimension_numbers<[1], [0], [0], [1], [0, 0, 1, 1], [], []>} : vector<128x32xf32>, vector<32x32xf32>, vector<128x32xf32> -> vector<128x32xf32>
    %45 = arith.addf %40, %44 : vector<128x32xf32>
    %46 = vector.extract_strided_slice %34 {offsets = [0, 2, 0], sizes = [8, 16, 32], strides = [1, 1, 1]} : vector<8x20x32xf32> to vector<8x16x32xf32>
    %47 = vector.shape_cast %46 : vector<8x16x32xf32> to vector<128x32xf32>
    %c144 = arith.constant 144 : index
    %c0_22 = arith.constant 0 : index
    %48 = vector.load %arg3[%c144, %c0_22] : memref<464x32xf32, #tpu.memory_space<vmem>>, vector<32x32xf32>
    %cst_23 = arith.constant dense<0.000000e+00> : vector<128x32xf32>
    %49 = tpu.matmul %47, %48, %cst_23 {dimension_numbers = #tpu.dot_dimension_numbers<[1], [0], [0], [1], [0, 0, 1, 1], [], []>} : vector<128x32xf32>, vector<32x32xf32>, vector<128x32xf32> -> vector<128x32xf32>
    %50 = arith.addf %45, %49 : vector<128x32xf32>
    %51 = vector.extract_strided_slice %34 {offsets = [0, 3, 0], sizes = [8, 16, 32], strides = [1, 1, 1]} : vector<8x20x32xf32> to vector<8x16x32xf32>
    %52 = vector.shape_cast %51 : vector<8x16x32xf32> to vector<128x32xf32>
    %c176 = arith.constant 176 : index
    %c0_24 = arith.constant 0 : index
    %53 = vector.load %arg3[%c176, %c0_24] : memref<464x32xf32, #tpu.memory_space<vmem>>, vector<32x32xf32>
    %cst_25 = arith.constant dense<0.000000e+00> : vector<128x32xf32>
    %54 = tpu.matmul %52, %53, %cst_25 {dimension_numbers = #tpu.dot_dimension_numbers<[1], [0], [0], [1], [0, 0, 1, 1], [], []>} : vector<128x32xf32>, vector<32x32xf32>, vector<128x32xf32> -> vector<128x32xf32>
    %55 = arith.addf %50, %54 : vector<128x32xf32>
    %56 = vector.extract_strided_slice %34 {offsets = [0, 4, 0], sizes = [8, 16, 32], strides = [1, 1, 1]} : vector<8x20x32xf32> to vector<8x16x32xf32>
    %57 = vector.shape_cast %56 : vector<8x16x32xf32> to vector<128x32xf32>
    %c208 = arith.constant 208 : index
    %c0_26 = arith.constant 0 : index
    %58 = vector.load %arg3[%c208, %c0_26] : memref<464x32xf32, #tpu.memory_space<vmem>>, vector<32x32xf32>
    %cst_27 = arith.constant dense<0.000000e+00> : vector<128x32xf32>
    %59 = tpu.matmul %57, %58, %cst_27 {dimension_numbers = #tpu.dot_dimension_numbers<[1], [0], [0], [1], [0, 0, 1, 1], [], []>} : vector<128x32xf32>, vector<32x32xf32>, vector<128x32xf32> -> vector<128x32xf32>
    %60 = arith.addf %55, %59 : vector<128x32xf32>
    %c1 = arith.constant 1 : index
    %c0_28 = arith.constant 0 : index
    %61 = vector.load %arg4[%c1, %c0_28] : memref<8x32xf32, #tpu.memory_space<vmem>>, vector<1x32xf32>
    %62 = vector.broadcast %61 : vector<1x32xf32> to vector<128x32xf32>
    %63 = arith.addf %60, %62 : vector<128x32xf32>
    %64 = vector.shape_cast %63 : vector<128x32xf32> to vector<8x16x32xf32>
    %cst_29 = arith.constant 0.000000e+00 : f32
    %65 = vector.broadcast %cst_29 : f32 to vector<8x16x32xf32>
    %66 = arith.maximumf %64, %65 : vector<8x16x32xf32>
    %cst_30 = arith.constant 0.000000e+00 : f32
    %67 = vector.broadcast %cst_30 : f32 to vector<8x2x32xf32>
    %68 = tpu.concatenate %67, %66, %67 in 1 : vector<8x2x32xf32>, vector<8x16x32xf32>, vector<8x2x32xf32> -> vector<8x20x32xf32>
    %cst_31 = arith.constant 0.000000e+00 : f32
    %69 = vector.broadcast %cst_31 : f32 to vector<128x32xf32>
    %70 = vector.extract_strided_slice %68 {offsets = [0, 0, 0], sizes = [8, 16, 32], strides = [1, 1, 1]} : vector<8x20x32xf32> to vector<8x16x32xf32>
    %71 = vector.shape_cast %70 : vector<8x16x32xf32> to vector<128x32xf32>
    %c240 = arith.constant 240 : index
    %c0_32 = arith.constant 0 : index
    %72 = vector.load %arg3[%c240, %c0_32] : memref<464x32xf32, #tpu.memory_space<vmem>>, vector<32x32xf32>
    %cst_33 = arith.constant dense<0.000000e+00> : vector<128x32xf32>
    %73 = tpu.matmul %71, %72, %cst_33 {dimension_numbers = #tpu.dot_dimension_numbers<[1], [0], [0], [1], [0, 0, 1, 1], [], []>} : vector<128x32xf32>, vector<32x32xf32>, vector<128x32xf32> -> vector<128x32xf32>
    %74 = arith.addf %69, %73 : vector<128x32xf32>
    %75 = vector.extract_strided_slice %68 {offsets = [0, 1, 0], sizes = [8, 16, 32], strides = [1, 1, 1]} : vector<8x20x32xf32> to vector<8x16x32xf32>
    %76 = vector.shape_cast %75 : vector<8x16x32xf32> to vector<128x32xf32>
    %c272 = arith.constant 272 : index
    %c0_34 = arith.constant 0 : index
    %77 = vector.load %arg3[%c272, %c0_34] : memref<464x32xf32, #tpu.memory_space<vmem>>, vector<32x32xf32>
    %cst_35 = arith.constant dense<0.000000e+00> : vector<128x32xf32>
    %78 = tpu.matmul %76, %77, %cst_35 {dimension_numbers = #tpu.dot_dimension_numbers<[1], [0], [0], [1], [0, 0, 1, 1], [], []>} : vector<128x32xf32>, vector<32x32xf32>, vector<128x32xf32> -> vector<128x32xf32>
    %79 = arith.addf %74, %78 : vector<128x32xf32>
    %80 = vector.extract_strided_slice %68 {offsets = [0, 2, 0], sizes = [8, 16, 32], strides = [1, 1, 1]} : vector<8x20x32xf32> to vector<8x16x32xf32>
    %81 = vector.shape_cast %80 : vector<8x16x32xf32> to vector<128x32xf32>
    %c304 = arith.constant 304 : index
    %c0_36 = arith.constant 0 : index
    %82 = vector.load %arg3[%c304, %c0_36] : memref<464x32xf32, #tpu.memory_space<vmem>>, vector<32x32xf32>
    %cst_37 = arith.constant dense<0.000000e+00> : vector<128x32xf32>
    %83 = tpu.matmul %81, %82, %cst_37 {dimension_numbers = #tpu.dot_dimension_numbers<[1], [0], [0], [1], [0, 0, 1, 1], [], []>} : vector<128x32xf32>, vector<32x32xf32>, vector<128x32xf32> -> vector<128x32xf32>
    %84 = arith.addf %79, %83 : vector<128x32xf32>
    %85 = vector.extract_strided_slice %68 {offsets = [0, 3, 0], sizes = [8, 16, 32], strides = [1, 1, 1]} : vector<8x20x32xf32> to vector<8x16x32xf32>
    %86 = vector.shape_cast %85 : vector<8x16x32xf32> to vector<128x32xf32>
    %c336 = arith.constant 336 : index
    %c0_38 = arith.constant 0 : index
    %87 = vector.load %arg3[%c336, %c0_38] : memref<464x32xf32, #tpu.memory_space<vmem>>, vector<32x32xf32>
    %cst_39 = arith.constant dense<0.000000e+00> : vector<128x32xf32>
    %88 = tpu.matmul %86, %87, %cst_39 {dimension_numbers = #tpu.dot_dimension_numbers<[1], [0], [0], [1], [0, 0, 1, 1], [], []>} : vector<128x32xf32>, vector<32x32xf32>, vector<128x32xf32> -> vector<128x32xf32>
    %89 = arith.addf %84, %88 : vector<128x32xf32>
    %90 = vector.extract_strided_slice %68 {offsets = [0, 4, 0], sizes = [8, 16, 32], strides = [1, 1, 1]} : vector<8x20x32xf32> to vector<8x16x32xf32>
    %91 = vector.shape_cast %90 : vector<8x16x32xf32> to vector<128x32xf32>
    %c368 = arith.constant 368 : index
    %c0_40 = arith.constant 0 : index
    %92 = vector.load %arg3[%c368, %c0_40] : memref<464x32xf32, #tpu.memory_space<vmem>>, vector<32x32xf32>
    %cst_41 = arith.constant dense<0.000000e+00> : vector<128x32xf32>
    %93 = tpu.matmul %91, %92, %cst_41 {dimension_numbers = #tpu.dot_dimension_numbers<[1], [0], [0], [1], [0, 0, 1, 1], [], []>} : vector<128x32xf32>, vector<32x32xf32>, vector<128x32xf32> -> vector<128x32xf32>
    %94 = arith.addf %89, %93 : vector<128x32xf32>
    %c2 = arith.constant 2 : index
    %c0_42 = arith.constant 0 : index
    %95 = vector.load %arg4[%c2, %c0_42] : memref<8x32xf32, #tpu.memory_space<vmem>>, vector<1x32xf32>
    %96 = vector.broadcast %95 : vector<1x32xf32> to vector<128x32xf32>
    %97 = arith.addf %94, %96 : vector<128x32xf32>
    %98 = vector.shape_cast %97 : vector<128x32xf32> to vector<8x16x32xf32>
    %c3 = arith.constant 3 : index
    %c0_43 = arith.constant 0 : index
    %99 = vector.load %arg4[%c3, %c0_43] : memref<8x32xf32, #tpu.memory_space<vmem>>, vector<1x32xf32>
    %100 = vector.shape_cast %99 : vector<1x32xf32> to vector<1x1x32xf32>
    %101 = vector.broadcast %100 : vector<1x1x32xf32> to vector<8x16x32xf32>
    %102 = arith.mulf %98, %101 : vector<8x16x32xf32>
    %cst_44 = arith.constant dense<0.000000e+00> : vector<8x16xf32>
    %103 = vector.multi_reduction <add>, %102, %cst_44 [2] : vector<8x16x32xf32> to vector<8x16xf32>
    %c0_45 = arith.constant 0 : index
    %c0_46 = arith.constant 0 : index
    %104 = vector.load %arg2[%c0_45, %c0_46] : memref<8x16xf32, #tpu.memory_space<vmem>>, vector<8x16xf32>
    %105 = arith.addf %103, %104 : vector<8x16xf32>
    %cst_47 = arith.constant dense<0xFF800000> : vector<8xf32>
    %106 = vector.multi_reduction <maximumf>, %105, %cst_47 [1] : vector<8x16xf32> to vector<8xf32>
    %107 = vector.shape_cast %106 : vector<8xf32> to vector<8x1xf32>
    %108 = vector.broadcast %107 : vector<8x1xf32> to vector<8x16xf32>
    %109 = arith.subf %105, %108 : vector<8x16xf32>
    %110 = math.exp %109 : vector<8x16xf32>
    %cst_48 = arith.constant dense<0.000000e+00> : vector<8xf32>
    %111 = vector.multi_reduction <add>, %110, %cst_48 [1] : vector<8x16xf32> to vector<8xf32>
    %112 = vector.shape_cast %111 : vector<8xf32> to vector<8x1xf32>
    %113 = vector.broadcast %112 : vector<8x1xf32> to vector<8x16xf32>
    %114 = arith.divf %110, %113 : vector<8x16xf32>
    %115 = vector.shape_cast %114 : vector<8x16xf32> to vector<8x16x1xf32>
    %116 = vector.broadcast %115 : vector<8x16x1xf32> to vector<8x16x32xf32>
    %117 = arith.mulf %98, %116 : vector<8x16x32xf32>
    %cst_49 = arith.constant dense<0.000000e+00> : vector<8x32xf32>
    %118 = vector.multi_reduction <add>, %117, %cst_49 [1] : vector<8x16x32xf32> to vector<8x32xf32>
    %c400 = arith.constant 400 : index
    %c0_50 = arith.constant 0 : index
    %119 = vector.load %arg3[%c400, %c0_50] : memref<464x32xf32, #tpu.memory_space<vmem>>, vector<32x32xf32>
    %cst_51 = arith.constant dense<0.000000e+00> : vector<8x32xf32>
    %120 = tpu.matmul %118, %119, %cst_51 {dimension_numbers = #tpu.dot_dimension_numbers<[1], [0], [0], [1], [0, 0, 1, 1], [], []>} : vector<8x32xf32>, vector<32x32xf32>, vector<8x32xf32> -> vector<8x32xf32>
    %c4 = arith.constant 4 : index
    %c0_52 = arith.constant 0 : index
    %121 = vector.load %arg4[%c4, %c0_52] : memref<8x32xf32, #tpu.memory_space<vmem>>, vector<1x32xf32>
    %122 = vector.broadcast %121 : vector<1x32xf32> to vector<8x32xf32>
    %123 = arith.addf %120, %122 : vector<8x32xf32>
    %cst_53 = arith.constant 0.000000e+00 : f32
    %124 = vector.broadcast %cst_53 : f32 to vector<8x32xf32>
    %125 = arith.maximumf %123, %124 : vector<8x32xf32>
    %c432 = arith.constant 432 : index
    %c0_54 = arith.constant 0 : index
    %126 = vector.load %arg3[%c432, %c0_54] : memref<464x32xf32, #tpu.memory_space<vmem>>, vector<32x8xf32>
    %cst_55 = arith.constant dense<0.000000e+00> : vector<8x8xf32>
    %127 = tpu.matmul %125, %126, %cst_55 {dimension_numbers = #tpu.dot_dimension_numbers<[1], [0], [0], [1], [0, 0, 1, 1], [], []>} : vector<8x32xf32>, vector<32x8xf32>, vector<8x8xf32> -> vector<8x8xf32>
    %c5 = arith.constant 5 : index
    %c0_56 = arith.constant 0 : index
    %128 = vector.load %arg4[%c5, %c0_56] : memref<8x32xf32, #tpu.memory_space<vmem>>, vector<1x8xf32>
    %129 = vector.broadcast %128 : vector<1x8xf32> to vector<8x8xf32>
    %130 = arith.addf %127, %129 : vector<8x8xf32>
    %c0_57 = arith.constant 0 : index
    %c0_58 = arith.constant 0 : index
    %131 = vector.load %arg5[%c0_57, %c0_58] : memref<8x8xf32, #tpu.memory_space<vmem>>, vector<8x8xf32>
    tpu.vector_store %arg5[%c0_57, %c0_58], %130 {strides = array<i32>} : memref<8x8xf32, #tpu.memory_space<vmem>>, vector<8x8xf32>,
    return
  }
  func.func @transform_0(%arg0: i32) -> (i32, i32, i32) {
    %c0_i32 = arith.constant 0 : i32
    %c0_i32_0 = arith.constant 0 : i32
    %c0_i32_1 = arith.constant 0 : i32
    return %arg0, %c0_i32, %c0_i32_0 : i32, i32, i32
  }
  func.func @transform_1(%arg0: i32) -> (i32, i32) {
    %c0_i32 = arith.constant 0 : i32
    %c0_i32_0 = arith.constant 0 : i32
    return %arg0, %c0_i32 : i32, i32
  }
  func.func @transform_2(%arg0: i32) -> (i32, i32) {
    %c0_i32 = arith.constant 0 : i32
    %c0_i32_0 = arith.constant 0 : i32
    %c0_i32_1 = arith.constant 0 : i32
    return %c0_i32, %c0_i32_0 : i32, i32
  }
  func.func @transform_3(%arg0: i32) -> (i32, i32) {
    %c0_i32 = arith.constant 0 : i32
    %c0_i32_0 = arith.constant 0 : i32
    %c0_i32_1 = arith.constant 0 : i32
    return %c0_i32, %c0_i32_0 : i32, i32
  }
  func.func @transform_4(%arg0: i32) -> (i32, i32) {
    %c0_i32 = arith.constant 0 : i32
    %c0_i32_0 = arith.constant 0 : i32
    return %arg0, %c0_i32 : i32, i32
  }
}

</mosaic_0001>

<llo_original>
// kernel: tpu_custom_call.1
$region0: #{tpu_custom_call.1}
  #allocation0 [shape = 'u32[]', space=smem, size = 0x4, offset = 0x4, fixed_abs, tag = 'smem constant byte address 0x4 - core index']
  #allocation1 [shape = 'u32[144,128]{1,0:T(1,128)}', space=vmem, size = 0x12000, scoped, tag = 'internal scratch']
  %s0 = inlined_call_operand.vmem [shape: f32[16,20,16], index: 0, kind: input, shape index: {}]
  %s1 = inlined_call_operand.vmem [shape: f32[16,16], index: 1, kind: input, shape index: {}]
  %s2 = inlined_call_operand.vmem [shape: f32[464,32], index: 2, kind: input, shape index: {}]
  %s3 = inlined_call_operand.vmem [shape: f32[8,32], index: 3, kind: input, shape index: {}]
  %s4 = inlined_call_operand.vmem [shape: f32[16,8], index: 4, kind: output, shape index: {}]
  %s5 = sld [smem:[#allocation0]]
  $region49: #{tpu_custom_call.1} parent=0
    _
  %s7 = ssub.s32 1, %s5
  %s8 = scalar_select 0, %s7, %s5
  loop: start=0, step=1, limit=4
  $region2: #{tpu_custom_call.1} parent=0 // loop_pre_header
    _
  $region3: #{tpu_custom_call.1} parent=0 // loop_header
    %s10 = sphi 0, %s14
    %p11 = scmp.ge.s32.totalorder %s10, 4
    %s20 = sphi 0, %s22
    %s23 = sphi 0, %s20
    %s24 = sphi 0, %s23
    %s40 = sphi 0, %s24
    %s46 = sphi 0, %s48
    %s49 = sphi 0, %s46
    %s50 = sphi 0, %s49
    %s66 = sphi 0, %s50
    %s70 = sphi 0, %s70
    %s72 = sphi 0, %s70
    %s73 = sphi 0, %s72
    %s87 = sphi 0, %s73
    %s91 = sphi 0, %s91
    %s93 = sphi 0, %s91
    %s94 = sphi 0, %s93
    %s108 = sphi 0, %s94
    %s114 = sphi 0, %s116
    %s117 = sphi 0, %s114
    %s118 = sphi 0, %s117
    %s134 = sphi 0, %s118
  $region4: #{tpu_custom_call.1} parent=0 // loop_header_branch
    %13 = sbr.rel (%p11) target = $region8
  $region5: #{tpu_custom_call.1} parent=0 // loop_body
    %s15 = ssub.s32 %s10, 1
    %s16 = ssub.s32 %s10, 2
    %s17 = sadd.s32 %s10, 1
    %s18 = ssub.s32 %s10, %s17
    %p19 = scmp.eq.s32.totalorder %s18, 0
    %s21 = sadd.s32 %s20, 1
    %s22 = scalar_select %p19, %s20, %s21
    %p25 = pneg %p19
    %p26 = scmp.eq.s32.totalorder %s10, 1
    %p27 = por %p25, %p26
    %p28 = scmp.ne.s32.totalorder %s20, %s23
    %p29 = scmp.eq.s32.totalorder %s10, 0
    %p30 = por %p28, %p29
    %p31 = scmp.ne.s32.totalorder %s20, %s23
    %p32 = scmp.eq.s32.totalorder %s15, 1
    %p33 = por %p31, %p32
    %p34 = scmp.ne.s32.totalorder %s23, %s24
    %p35 = scmp.eq.s32.totalorder %s15, 0
    %p36 = por %p34, %p35
    %p37 = scmp.ne.s32.totalorder %s23, %s24
    %p38 = scmp.eq.s32.totalorder %s16, 1
    %p39 = por %p37, %p38
    %p41 = scmp.ne.s32.totalorder %s24, %s40
    %p42 = scmp.eq.s32.totalorder %s16, 0
    %p43 = por %p41, %p42
    %s44 = ssub.s32 %s10, %s17
    %p45 = scmp.eq.s32.totalorder %s44, 0
    %s47 = sadd.s32 %s46, 1
    %s48 = scalar_select %p45, %s46, %s47
    %p51 = pneg %p45
    %p52 = scmp.eq.s32.totalorder %s10, 1
    %p53 = por %p51, %p52
    %p54 = scmp.ne.s32.totalorder %s46, %s49
    %p55 = scmp.eq.s32.totalorder %s10, 0
    %p56 = por %p54, %p55
    %p57 = scmp.ne.s32.totalorder %s46, %s49
    %p58 = scmp.eq.s32.totalorder %s15, 1
    %p59 = por %p57, %p58
    %p60 = scmp.ne.s32.totalorder %s49, %s50
    %p61 = scmp.eq.s32.totalorder %s15, 0
    %p62 = por %p60, %p61
    %p63 = scmp.ne.s32.totalorder %s49, %s50
    %p64 = scmp.eq.s32.totalorder %s16, 1
    %p65 = por %p63, %p64
    %p67 = scmp.ne.s32.totalorder %s50, %s66
    %p68 = scmp.eq.s32.totalorder %s16, 0
    %p69 = por %p67, %p68
    %s71 = sadd.s32 %s70, 1
    %p74 = scmp.eq.s32.totalorder %s10, 1
    %p75 = scmp.ne.s32.totalorder %s70, %s72
    %p76 = scmp.eq.s32.totalorder %s10, 0
    %p77 = por %p75, %p76
    %p78 = scmp.ne.s32.totalorder %s70, %s72
    %p79 = scmp.eq.s32.totalorder %s15, 1
    %p80 = por %p78, %p79
    %p81 = scmp.ne.s32.totalorder %s72, %s73
    %p82 = scmp.eq.s32.totalorder %s15, 0
    %p83 = por %p81, %p82
    %p84 = scmp.ne.s32.totalorder %s72, %s73
    %p85 = scmp.eq.s32.totalorder %s16, 1
    %p86 = por %p84, %p85
    %p88 = scmp.ne.s32.totalorder %s73, %s87
    %p89 = scmp.eq.s32.totalorder %s16, 0
    %p90 = por %p88, %p89
    %s92 = sadd.s32 %s91, 1
    %p95 = scmp.eq.s32.totalorder %s10, 1
    %p96 = scmp.ne.s32.totalorder %s91, %s93
    %p97 = scmp.eq.s32.totalorder %s10, 0
    %p98 = por %p96, %p97
    %p99 = scmp.ne.s32.totalorder %s91, %s93
    %p100 = scmp.eq.s32.totalorder %s15, 1
    %p101 = por %p99, %p100
    %p102 = scmp.ne.s32.totalorder %s93, %s94
    %p103 = scmp.eq.s32.totalorder %s15, 0
    %p104 = por %p102, %p103
    %p105 = scmp.ne.s32.totalorder %s93, %s94
    %p106 = scmp.eq.s32.totalorder %s16, 1
    %p107 = por %p105, %p106
    %p109 = scmp.ne.s32.totalorder %s94, %s108
    %p110 = scmp.eq.s32.totalorder %s16, 0
    %p111 = por %p109, %p110
    %s112 = ssub.s32 %s10, %s17
    %p113 = scmp.eq.s32.totalorder %s112, 0
    %s115 = sadd.s32 %s114, 1
    %s116 = scalar_select %p113, %s114, %s115
    %p119 = pneg %p113
    %p120 = scmp.eq.s32.totalorder %s10, 1
    %p121 = por %p119, %p120
    %p122 = scmp.ne.s32.totalorder %s114, %s117
    %p123 = scmp.eq.s32.totalorder %s10, 0
    %p124 = por %p122, %p123
    %p125 = scmp.ne.s32.totalorder %s114, %s117
    %p126 = scmp.eq.s32.totalorder %s15, 1
    %p127 = por %p125, %p126
    %p128 = scmp.ne.s32.totalorder %s117, %s118
    %p129 = scmp.eq.s32.totalorder %s15, 0
    %p130 = por %p128, %p129
    %p131 = scmp.ne.s32.totalorder %s117, %s118
    %p132 = scmp.eq.s32.totalorder %s16, 1
    %p133 = por %p131, %p132
    %p135 = scmp.ne.s32.totalorder %s118, %s134
    %p136 = scmp.eq.s32.totalorder %s16, 0
    %p137 = por %p135, %p136
    %p138 = scmp.le.s32.totalorder 1, %s10
    %p139 = scmp.lt.s32.totalorder %s10, 3
    %p140 = pnand %p138, %p139
    %p141 = pneg %p140
    // Predicated region
    $region9: #{tpu_custom_call.1} parent=5 // pred_check
      _
    $region10: #{tpu_custom_call.1} parent=5 // pred_check_branch
      %143 = sbr.rel (%p140) target = $region12
    $region11: #{tpu_custom_call.1} parent=5 // pred_region
      %s144 = ssub.s32 %s10, 1
      // Predicated region
      $region13: #{tpu_custom_call.1} parent=11 // pred_check
        %p145 = pneg %p83
      $region14: #{tpu_custom_call.1} parent=11 // pred_check_branch
        %147 = sbr.rel (%p145) target = $region16
      $region15: #{tpu_custom_call.1} parent=11 // pred_region
        _
      $region16: #{tpu_custom_call.1} parent=11 // pred_fallthru
        _
      // Predicated region
      $region17: #{tpu_custom_call.1} parent=11 // pred_check
        %p148 = pneg %p104
      $region18: #{tpu_custom_call.1} parent=11 // pred_check_branch
        %150 = sbr.rel (%p148) target = $region20
      $region19: #{tpu_custom_call.1} parent=11 // pred_region
        _
      $region20: #{tpu_custom_call.1} parent=11 // pred_fallthru
        _
    $region12: #{tpu_custom_call.1} parent=5 // pred_fallthru
      _
    %p151 = scmp.lt.s32.totalorder %s10, 2
    // Predicated region
    $region21: #{tpu_custom_call.1} parent=5 // pred_check
      %p152 = pneg %p151
    $region22: #{tpu_custom_call.1} parent=5 // pred_check_branch
      %154 = sbr.rel (%p152) target = $region24
    $region23: #{tpu_custom_call.1} parent=5 // pred_region
      // Predicated region
      $region25: #{tpu_custom_call.1} parent=23 // pred_check
        %p155 = pneg %p30
      $region26: #{tpu_custom_call.1} parent=23 // pred_check_branch
        %157 = sbr.rel (%p155) target = $region28
      $region27: #{tpu_custom_call.1} parent=23 // pred_region
        %s158 = smul.u32 8, %s10
        %p159 = scmp.lt.s32.totalorder %s158, 15
        %s160 = scalar_select %p159, %s158, 15
        %s161 = smul.addr %s160, 3
        %s162 = smul.addr %s161, 8
        %s163 = scalar_lea.vmem %s0, %s162
        %s164 = smul.u32 8, %s10
      $region28: #{tpu_custom_call.1} parent=23 // pred_fallthru
        _
      // Predicated region
      $region29: #{tpu_custom_call.1} parent=23 // pred_check
        %p165 = pneg %p56
      $region30: #{tpu_custom_call.1} parent=23 // pred_check_branch
        %167 = sbr.rel (%p165) target = $region32
      $region31: #{tpu_custom_call.1} parent=23 // pred_region
        %p168 = scmp.lt.s32.totalorder %s10, 1
        %s169 = scalar_select %p168, %s10, 1
        %s170 = smul.addr %s169, 8
        %s171 = scalar_lea.vmem %s1, %s170
      $region32: #{tpu_custom_call.1} parent=23 // pred_fallthru
        _
    $region24: #{tpu_custom_call.1} parent=5 // pred_fallthru
      _
    %p172 = scmp.le.s32.totalorder 1, %s10
    %p173 = scmp.lt.s32.totalorder %s10, 3
    %p174 = pnand %p172, %p173
    %p175 = pneg %p174
    // Predicated region
    $region33: #{tpu_custom_call.1} parent=5 // pred_check
      _
    $region34: #{tpu_custom_call.1} parent=5 // pred_check_branch
      %177 = sbr.rel (%p174) target = $region36
    $region35: #{tpu_custom_call.1} parent=5 // pred_region
      %s178 = ssub.s32 %s10, 1
      %s179 = smul.u32 8, %s15
      %p180 = scmp.lt.s32.totalorder %s179, 15
      %s181 = scalar_select %p180, %s179, 15
      %s182 = smul.addr %s181, 3
      %s183 = smul.addr %s182, 8
      %s184 = scalar_lea.vmem %s0, %s183
      %p185 = pneg %p36
      %p186 = pneg %p33
      %p187 = scmp.lt.s32.totalorder %s15, 1
      %s188 = scalar_select %p187, %s15, 1
      %s189 = smul.addr %s188, 8
      %s190 = scalar_lea.vmem %s1, %s189
      %p191 = pneg %p62
      %p192 = pneg %p59
      %p193 = pneg %p83
      %p194 = pneg %p80
      %p195 = pneg %p104
      %p196 = pneg %p101
      %p197 = pneg %p130
      %p198 = pneg %p127
      %p199 = scmp.lt.s32.totalorder %s15, 1
      %s200 = scalar_select %p199, %s15, 1
      %s201 = smul.addr %s200, 8
      %s202 = scalar_lea.vmem %s4, %s201
      %s203 = smul.u32 8, %s15
      %p204 = scmp.lt.s32.totalorder %s203, 15
      %s205 = scalar_select %p204, %s203, 15
      %s206 = smul.addr %s205, 3
      %s207 = smul.addr %s206, 8
      %s208 = scalar_lea.vmem %s0, %s207
      %s209 = smul.u32 8, %s15
      %p210 = scmp.lt.s32.totalorder %s15, 1
      %s211 = scalar_select %p210, %s15, 1
      %s212 = smul.addr %s211, 8
      %s213 = scalar_lea.vmem %s1, %s212
      %p214 = scmp.lt.s32.totalorder %s15, 1
      %s215 = scalar_select %p214, %s15, 1
      %s216 = smul.addr %s215, 8
      %s217 = scalar_lea.vmem %s4, %s216
      %v218 = vld [vmem:[%s208] sm:$0xff]
      %v219 = vld [vmem:[%s208 + $0x8] sm:$0xff]
      %v220 = vld [vmem:[%s208 + $0x10] sm:$0xf]
      %v221 = vld [vmem:[%s208 + $0x18] sm:$0xff]
      %v222 = vld [vmem:[%s208 + $0x20] sm:$0xff]
      %v223 = vld [vmem:[%s208 + $0x28] sm:$0xf]
      %v224 = vld [vmem:[%s208 + $0x30] sm:$0xff]
      %v225 = vld [vmem:[%s208 + $0x38] sm:$0xff]
      %v226 = vld [vmem:[%s208 + $0x40] sm:$0xf]
      %v227 = vld [vmem:[%s208 + $0x48] sm:$0xff]
      %v228 = vld [vmem:[%s208 + $0x50] sm:$0xff]
      %v229 = vld [vmem:[%s208 + $0x58] sm:$0xf]
      %v230 = vld [vmem:[%s208 + $0x60] sm:$0xff]
      %v231 = vld [vmem:[%s208 + $0x68] sm:$0xff]
      %v232 = vld [vmem:[%s208 + $0x70] sm:$0xf]
      %v233 = vld [vmem:[%s208 + $0x78] sm:$0xff]
      %v234 = vld [vmem:[%s208 + $0x80] sm:$0xff]
      %v235 = vld [vmem:[%s208 + $0x88] sm:$0xf]
      %v236 = vld [vmem:[%s208 + $0x90] sm:$0xff]
      %v237 = vld [vmem:[%s208 + $0x98] sm:$0xff]
      %v238 = vld [vmem:[%s208 + $0xa0] sm:$0xf]
      %v239 = vld [vmem:[%s208 + $0xa8] sm:$0xff]
      %v240 = vld [vmem:[%s208 + $0xb0] sm:$0xff]
      %v241 = vld [vmem:[%s208 + $0xb8] sm:$0xf]
      %v242 = vld [vmem:[%s2] sm:$0xff]
      %v243 = vld [vmem:[%s2 + $0x8] sm:$0xff]
      %vm268 = vcmask 1046528
      %v269 = vrot.slane %v218, 1
      %v270 = vrot.slane %v219, 1
      %v271 = vsel %vm268, %v269, %v270
      %v272 = vrot.slane %v220, 1
      %v273 = vsel %vm268, %v270, %v272
      %v274 = vrot.slane %v221, 1
      %v275 = vrot.slane %v222, 1
      %v276 = vsel %vm268, %v274, %v275
      %v277 = vrot.slane %v223, 1
      %v278 = vsel %vm268, %v275, %v277
      %v279 = vrot.slane %v224, 1
      %v280 = vrot.slane %v225, 1
      %v281 = vsel %vm268, %v279, %v280
      %v282 = vrot.slane %v226, 1
      %v283 = vsel %vm268, %v280, %v282
      %v284 = vrot.slane %v227, 1
      %v285 = vrot.slane %v228, 1
      %v286 = vsel %vm268, %v284, %v285
      %v287 = vrot.slane %v229, 1
      %v288 = vsel %vm268, %v285, %v287
      %v289 = vrot.slane %v230, 1
      %v290 = vrot.slane %v231, 1
      %v291 = vsel %vm268, %v289, %v290
      %v292 = vrot.slane %v232, 1
      %v293 = vsel %vm268, %v290, %v292
      %v294 = vrot.slane %v233, 1
      %v295 = vrot.slane %v234, 1
      %v296 = vsel %vm268, %v294, %v295
      %v297 = vrot.slane %v235, 1
      %v298 = vsel %vm268, %v295, %v297
      %v299 = vrot.slane %v236, 1
      %v300 = vrot.slane %v237, 1
      %v301 = vsel %vm268, %v299, %v300
      %v302 = vrot.slane %v238, 1
      %v303 = vsel %vm268, %v300, %v302
      %v304 = vrot.slane %v239, 1
      %v305 = vrot.slane %v240, 1
      %v306 = vsel %vm268, %v304, %v305
      %v307 = vrot.slane %v241, 1
      %v308 = vsel %vm268, %v305, %v307
      %v309 = vld [vmem:[%s2 + $0x10] sm:$0xff]
      %v310 = vld [vmem:[%s2 + $0x18] sm:$0xff]
      %vm311 = vcmask 130048
      %v312 = vsel %vm311, %v271, 0
      %v314 = vsel %vm311, %v273, 0
      %v316 = vsel %vm311, %v276, 0
      %v318 = vsel %vm311, %v278, 0
      %v320 = vsel %vm311, %v281, 0
      %v322 = vsel %vm311, %v283, 0
      %v324 = vsel %vm311, %v286, 0
      %v326 = vsel %vm311, %v288, 0
      %v328 = vsel %vm311, %v291, 0
      %v330 = vsel %vm311, %v293, 0
      %v332 = vsel %vm311, %v296, 0
      %v334 = vsel %vm311, %v298, 0
      %v336 = vsel %vm311, %v301, 0
      %v338 = vsel %vm311, %v303, 0
      %v340 = vsel %vm311, %v306, 0
      %v342 = vsel %vm311, %v308, 0
      %344 = vmatprep.subr.mxu0 0.0
      %345 = vmatpush1.msra.mxu0 0.0
      %346 = vmatprep.subr.mxu0 0.0
      %347 = vmatpush1.msra.mxu0 0.0
      %348 = vmatprep.subr.mxu0 0.0
      %349 = vmatpush1.msra.mxu0 0.0
      %350 = vmatprep.subr.mxu0 0.0
      %351 = vmatpush1.msra.mxu0 0.0
      %352 = vmatprep.subr.mxu0 0.0
      %353 = vmatpush1.msra.mxu0 0.0
      %354 = vmatprep.subr.mxu0 0.0
      %355 = vmatpush1.msra.mxu0 0.0
      %356 = vmatprep.subr.mxu0 0.0
      %357 = vmatpush1.msra.mxu0 0.0
      %358 = vmatprep.subr.mxu0 0.0
      %359 = vmatpush1.msra.mxu0 0.0
      %360 = vmatprep.subr.mxu0 0.0
      %361 = vmatpush1.msra.mxu0 0.0
      %362 = vmatprep.subr.mxu0 0.0
      %363 = vmatpush1.msra.mxu0 0.0
      %364 = vmatprep.subr.mxu0 0.0
      %365 = vmatpush1.msra.mxu0 0.0
      %366 = vmatprep.subr.mxu0 0.0
      %367 = vmatpush1.msra.mxu0 0.0
      %368 = vmatprep.subr.mxu0 0.0
      %369 = vmatpush1.msra.mxu0 0.0
      %370 = vmatprep.subr.mxu0 0.0
      %371 = vmatpush1.msra.mxu0 0.0
      %372 = vmatprep.subr.mxu0 0.0
      %373 = vmatpush1.msra.mxu0 %v310
      %374 = vmatprep.subr.mxu0 0.0
      %375 = vmatpush1.msra.mxu0 %v309
      %376 = vmatprep.subr.mxu0 0.0
      %377 = vmatpush2.msra.mxu0 0.0
      %378 = vmatprep.subr.mxu0 0.0
      %379 = vmatpush2.msra.mxu0 0.0
      %380 = vmatprep.subr.mxu0 0.0
      %381 = vmatpush2.msra.mxu0 0.0
      %382 = vmatprep.subr.mxu0 0.0
      %383 = vmatpush2.msra.mxu0 0.0
      %384 = vmatprep.subr.mxu0 0.0
      %385 = vmatpush2.msra.mxu0 0.0
      %386 = vmatprep.subr.mxu0 0.0
      %387 = vmatpush2.msra.mxu0 0.0
      %388 = vmatprep.subr.mxu0 0.0
      %389 = vmatpush2.msra.mxu0 0.0
      %390 = vmatprep.subr.mxu0 0.0
      %391 = vmatpush2.msra.mxu0 0.0
      %392 = vmatprep.subr.mxu0 0.0
      %393 = vmatpush2.msra.mxu0 0.0
      %394 = vmatprep.subr.mxu0 0.0
      %395 = vmatpush2.msra.mxu0 0.0
      %396 = vmatprep.subr.mxu0 0.0
      %397 = vmatpush2.msra.mxu0 0.0
      %398 = vmatprep.subr.mxu0 0.0
      %399 = vmatpush2.msra.mxu0 0.0
      %400 = vmatprep.subr.mxu0 0.0
      %401 = vmatpush2.msra.mxu0 0.0
      %402 = vmatprep.subr.mxu0 0.0
      %403 = vmatpush2.msra.mxu0 0.0
      %404 = vmatprep.subr.mxu0 0.0
      %405 = vmatpush2.msra.mxu0 0.0
      %406 = vmatprep.subr.mxu0 0.0
      %407 = vmatpush2.msra.mxu0 0.0
      %408 = vmatprep.mubr.f32.mxu0 0.0
      %409 = vmatmul.mubr.f32.gmra.mxu0 %v312
      %v410 = vpop.f32.mrf.mxu0
      %v411 = vadd.f32 0.0, %v410
      %v412 = vpop.f32.mrf.mxu0
      %413 = vmatprep.mubr.f32.mxu0 0.0
      %414 = vmatmul.mubr.f32.gmra.mxu0 %v314
      %v415 = vpop.f32.mrf.mxu0
      %v416 = vadd.f32 0.0, %v415
      %v417 = vpop.f32.mrf.mxu0
      %418 = vmatprep.mubr.f32.mxu0 0.0
      %419 = vmatmul.mubr.f32.gmra.mxu0 %v316
      %v420 = vpop.f32.mrf.mxu0
      %v421 = vadd.f32 0.0, %v420
      %v422 = vpop.f32.mrf.mxu0
      %423 = vmatprep.mubr.f32.mxu0 0.0
      %424 = vmatmul.mubr.f32.gmra.mxu0 %v318
      %v425 = vpop.f32.mrf.mxu0
      %v426 = vadd.f32 0.0, %v425
      %v427 = vpop.f32.mrf.mxu0
      %428 = vmatprep.mubr.f32.mxu0 0.0
      %429 = vmatmul.mubr.f32.gmra.mxu0 %v320
      %v430 = vpop.f32.mrf.mxu0
      %v431 = vadd.f32 0.0, %v430
      %v432 = vpop.f32.mrf.mxu0
      %433 = vmatprep.mubr.f32.mxu0 0.0
      %434 = vmatmul.mubr.f32.gmra.mxu0 %v322
      %v435 = vpop.f32.mrf.mxu0
      %v436 = vadd.f32 0.0, %v435
      %v437 = vpop.f32.mrf.mxu0
      %438 = vmatprep.mubr.f32.mxu0 0.0
      %439 = vmatmul.mubr.f32.gmra.mxu0 %v324
      %v440 = vpop.f32.mrf.mxu0
      %v441 = vadd.f32 0.0, %v440
      %v442 = vpop.f32.mrf.mxu0
      %443 = vmatprep.mubr.f32.mxu0 0.0
      %444 = vmatmul.mubr.f32.gmra.mxu0 %v326
      %v445 = vpop.f32.mrf.mxu0
      %v446 = vadd.f32 0.0, %v445
      %v447 = vpop.f32.mrf.mxu0
      %448 = vmatprep.mubr.f32.mxu0 0.0
      %449 = vmatmul.mubr.f32.gmra.mxu0 %v328
      %v450 = vpop.f32.mrf.mxu0
      %v451 = vadd.f32 0.0, %v450
      %v452 = vpop.f32.mrf.mxu0
      %453 = vmatprep.mubr.f32.mxu0 0.0
      %454 = vmatmul.mubr.f32.gmra.mxu0 %v330
      %v455 = vpop.f32.mrf.mxu0
      %v456 = vadd.f32 0.0, %v455
      %v457 = vpop.f32.mrf.mxu0
      %458 = vmatprep.mubr.f32.mxu0 0.0
      %459 = vmatmul.mubr.f32.gmra.mxu0 %v332
      %v460 = vpop.f32.mrf.mxu0
      %v461 = vadd.f32 0.0, %v460
      %v462 = vpop.f32.mrf.mxu0
      %463 = vmatprep.mubr.f32.mxu0 0.0
      %464 = vmatmul.mubr.f32.gmra.mxu0 %v334
      %v465 = vpop.f32.mrf.mxu0
      %v466 = vadd.f32 0.0, %v465
      %v467 = vpop.f32.mrf.mxu0
      %468 = vmatprep.mubr.f32.mxu0 0.0
      %469 = vmatmul.mubr.f32.gmra.mxu0 %v336
      %v470 = vpop.f32.mrf.mxu0
      %v471 = vadd.f32 0.0, %v470
      %v472 = vpop.f32.mrf.mxu0
      %473 = vmatprep.mubr.f32.mxu0 0.0
      %474 = vmatmul.mubr.f32.gmra.mxu0 %v338
      %v475 = vpop.f32.mrf.mxu0
      %v476 = vadd.f32 0.0, %v475
      %v477 = vpop.f32.mrf.mxu0
      %478 = vmatprep.mubr.f32.mxu0 0.0
      %479 = vmatmul.mubr.f32.gmra.mxu0 %v340
      %v480 = vpop.f32.mrf.mxu0
      %v481 = vadd.f32 0.0, %v480
      %v482 = vpop.f32.mrf.mxu0
      %483 = vmatprep.mubr.f32.mxu0 0.0
      %484 = vmatmul.mubr.f32.gmra.mxu0 %v342
      %v485 = vpop.f32.mrf.mxu0
      %v486 = vadd.f32 0.0, %v485
      %v487 = vpop.f32.mrf.mxu0
      %488 = vdwg.mxu0
      %v489 = vsel %vm311, %v218, 0
      %v491 = vsel %vm311, %v219, 0
      %v493 = vsel %vm311, %v221, 0
      %v495 = vsel %vm311, %v222, 0
      %v497 = vsel %vm311, %v224, 0
      %v499 = vsel %vm311, %v225, 0
      %v501 = vsel %vm311, %v227, 0
      %v503 = vsel %vm311, %v228, 0
      %v505 = vsel %vm311, %v230, 0
      %v507 = vsel %vm311, %v231, 0
      %v509 = vsel %vm311, %v233, 0
      %v511 = vsel %vm311, %v234, 0
      %v513 = vsel %vm311, %v236, 0
      %v515 = vsel %vm311, %v237, 0
      %v517 = vsel %vm311, %v239, 0
      %v519 = vsel %vm311, %v240, 0
      %521 = vmatprep.subr.mxu0 0.0
      %522 = vmatpush1.msra.mxu0 0.0
      %523 = vmatprep.subr.mxu0 0.0
      %524 = vmatpush1.msra.mxu0 0.0
      %525 = vmatprep.subr.mxu0 0.0
      %526 = vmatpush1.msra.mxu0 0.0
      %527 = vmatprep.subr.mxu0 0.0
      %528 = vmatpush1.msra.mxu0 0.0
      %529 = vmatprep.subr.mxu0 0.0
      %530 = vmatpush1.msra.mxu0 0.0
      %531 = vmatprep.subr.mxu0 0.0
      %532 = vmatpush1.msra.mxu0 0.0
      %533 = vmatprep.subr.mxu0 0.0
      %534 = vmatpush1.msra.mxu0 0.0
      %535 = vmatprep.subr.mxu0 0.0
      %536 = vmatpush1.msra.mxu0 0.0
      %537 = vmatprep.subr.mxu0 0.0
      %538 = vmatpush1.msra.mxu0 0.0
      %539 = vmatprep.subr.mxu0 0.0
      %540 = vmatpush1.msra.mxu0 0.0
      %541 = vmatprep.subr.mxu0 0.0
      %542 = vmatpush1.msra.mxu0 0.0
      %543 = vmatprep.subr.mxu0 0.0
      %544 = vmatpush1.msra.mxu0 0.0
      %545 = vmatprep.subr.mxu0 0.0
      %546 = vmatpush1.msra.mxu0 0.0
      %547 = vmatprep.subr.mxu0 0.0
      %548 = vmatpush1.msra.mxu0 0.0
      %549 = vmatprep.subr.mxu0 0.0
      %550 = vmatpush1.msra.mxu0 %v243
      %551 = vmatprep.subr.mxu0 0.0
      %552 = vmatpush1.msra.mxu0 %v242
      %553 = vmatprep.subr.mxu0 0.0
      %554 = vmatpush2.msra.mxu0 0.0
      %555 = vmatprep.subr.mxu0 0.0
      %556 = vmatpush2.msra.mxu0 0.0
      %557 = vmatprep.subr.mxu0 0.0
      %558 = vmatpush2.msra.mxu0 0.0
      %559 = vmatprep.subr.mxu0 0.0
      %560 = vmatpush2.msra.mxu0 0.0
      %561 = vmatprep.subr.mxu0 0.0
      %562 = vmatpush2.msra.mxu0 0.0
      %563 = vmatprep.subr.mxu0 0.0
      %564 = vmatpush2.msra.mxu0 0.0
      %565 = vmatprep.subr.mxu0 0.0
      %566 = vmatpush2.msra.mxu0 0.0
      %567 = vmatprep.subr.mxu0 0.0
      %568 = vmatpush2.msra.mxu0 0.0
      %569 = vmatprep.subr.mxu0 0.0
      %570 = vmatpush2.msra.mxu0 0.0
      %571 = vmatprep.subr.mxu0 0.0
      %572 = vmatpush2.msra.mxu0 0.0
      %573 = vmatprep.subr.mxu0 0.0
      %574 = vmatpush2.msra.mxu0 0.0
      %575 = vmatprep.subr.mxu0 0.0
      %576 = vmatpush2.msra.mxu0 0.0
      %577 = vmatprep.subr.mxu0 0.0
      %578 = vmatpush2.msra.mxu0 0.0
      %579 = vmatprep.subr.mxu0 0.0
      %580 = vmatpush2.msra.mxu0 0.0
      %581 = vmatprep.subr.mxu0 0.0
      %582 = vmatpush2.msra.mxu0 0.0
      %583 = vmatprep.subr.mxu0 0.0
      %584 = vmatpush2.msra.mxu0 0.0
      %585 = vmatprep.mubr.f32.mxu0 0.0
      %586 = vmatmul.mubr.f32.gmra.mxu0 %v489
      %v587 = vpop.f32.mrf.mxu0
      %v588 = vadd.f32 %v411, %v587
      %v589 = vpop.f32.mrf.mxu0
      %590 = vmatprep.mubr.f32.mxu0 0.0
      %591 = vmatmul.mubr.f32.gmra.mxu0 %v491
      %v592 = vpop.f32.mrf.mxu0
      %v593 = vadd.f32 %v416, %v592
      %v594 = vpop.f32.mrf.mxu0
      %595 = vmatprep.mubr.f32.mxu0 0.0
      %596 = vmatmul.mubr.f32.gmra.mxu0 %v493
      %v597 = vpop.f32.mrf.mxu0
      %v598 = vadd.f32 %v421, %v597
      %v599 = vpop.f32.mrf.mxu0
      %600 = vmatprep.mubr.f32.mxu0 0.0
      %601 = vmatmul.mubr.f32.gmra.mxu0 %v495
      %v602 = vpop.f32.mrf.mxu0
      %v603 = vadd.f32 %v426, %v602
      %v604 = vpop.f32.mrf.mxu0
      %605 = vmatprep.mubr.f32.mxu0 0.0
      %606 = vmatmul.mubr.f32.gmra.mxu0 %v497
      %v607 = vpop.f32.mrf.mxu0
      %v608 = vadd.f32 %v431, %v607
      %v609 = vpop.f32.mrf.mxu0
      %610 = vmatprep.mubr.f32.mxu0 0.0
      %611 = vmatmul.mubr.f32.gmra.mxu0 %v499
      %v612 = vpop.f32.mrf.mxu0
      %v613 = vadd.f32 %v436, %v612
      %v614 = vpop.f32.mrf.mxu0
      %615 = vmatprep.mubr.f32.mxu0 0.0
      %616 = vmatmul.mubr.f32.gmra.mxu0 %v501
      %v617 = vpop.f32.mrf.mxu0
      %v618 = vadd.f32 %v441, %v617
      %v619 = vpop.f32.mrf.mxu0
      %620 = vmatprep.mubr.f32.mxu0 0.0
      %621 = vmatmul.mubr.f32.gmra.mxu0 %v503
      %v622 = vpop.f32.mrf.mxu0
      %v623 = vadd.f32 %v446, %v622
      %v624 = vpop.f32.mrf.mxu0
      %625 = vmatprep.mubr.f32.mxu0 0.0
      %626 = vmatmul.mubr.f32.gmra.mxu0 %v505
      %v627 = vpop.f32.mrf.mxu0
      %v628 = vadd.f32 %v451, %v627
      %v629 = vpop.f32.mrf.mxu0
      %630 = vmatprep.mubr.f32.mxu0 0.0
      %631 = vmatmul.mubr.f32.gmra.mxu0 %v507
      %v632 = vpop.f32.mrf.mxu0
      %v633 = vadd.f32 %v456, %v632
      %v634 = vpop.f32.mrf.mxu0
      %635 = vmatprep.mubr.f32.mxu0 0.0
      %636 = vmatmul.mubr.f32.gmra.mxu0 %v509
      %v637 = vpop.f32.mrf.mxu0
      %v638 = vadd.f32 %v461, %v637
      %v639 = vpop.f32.mrf.mxu0
      %640 = vmatprep.mubr.f32.mxu0 0.0
      %641 = vmatmul.mubr.f32.gmra.mxu0 %v511
      %v642 = vpop.f32.mrf.mxu0
      %v643 = vadd.f32 %v466, %v642
      %v644 = vpop.f32.mrf.mxu0
      %645 = vmatprep.mubr.f32.mxu0 0.0
      %646 = vmatmul.mubr.f32.gmra.mxu0 %v513
      %v647 = vpop.f32.mrf.mxu0
      %v648 = vadd.f32 %v471, %v647
      %v649 = vpop.f32.mrf.mxu0
      %650 = vmatprep.mubr.f32.mxu0 0.0
      %651 = vmatmul.mubr.f32.gmra.mxu0 %v515
      %v652 = vpop.f32.mrf.mxu0
      %v653 = vadd.f32 %v476, %v652
      %v654 = vpop.f32.mrf.mxu0
      %655 = vmatprep.mubr.f32.mxu0 0.0
      %656 = vmatmul.mubr.f32.gmra.mxu0 %v517
      %v657 = vpop.f32.mrf.mxu0
      %v658 = vadd.f32 %v481, %v657
      %v659 = vpop.f32.mrf.mxu0
      %660 = vmatprep.mubr.f32.mxu0 0.0
      %661 = vmatmul.mubr.f32.gmra.mxu0 %v519
      %v662 = vpop.f32.mrf.mxu0
      %v663 = vadd.f32 %v486, %v662
      %v664 = vpop.f32.mrf.mxu0
      %665 = vdwg.mxu0
      %vm666 = vcmask 1045504
      %v667 = vrot.slane %v218, 2
      %v668 = vrot.slane %v219, 2
      %v669 = vsel %vm666, %v667, %v668
      %v670 = vrot.slane %v220, 2
      %v671 = vsel %vm666, %v668, %v670
      %v672 = vrot.slane %v221, 2
      %v673 = vrot.slane %v222, 2
      %v674 = vsel %vm666, %v672, %v673
      %v675 = vrot.slane %v223, 2
      %v676 = vsel %vm666, %v673, %v675
      %v677 = vrot.slane %v224, 2
      %v678 = vrot.slane %v225, 2
      %v679 = vsel %vm666, %v677, %v678
      %v680 = vrot.slane %v226, 2
      %v681 = vsel %vm666, %v678, %v680
      %v682 = vrot.slane %v227, 2
      %v683 = vrot.slane %v228, 2
      %v684 = vsel %vm666, %v682, %v683
      %v685 = vrot.slane %v229, 2
      %v686 = vsel %vm666, %v683, %v685
      %v687 = vrot.slane %v230, 2
      %v688 = vrot.slane %v231, 2
      %v689 = vsel %vm666, %v687, %v688
      %v690 = vrot.slane %v232, 2
      %v691 = vsel %vm666, %v688, %v690
      %v692 = vrot.slane %v233, 2
      %v693 = vrot.slane %v234, 2
      %v694 = vsel %vm666, %v692, %v693
      %v695 = vrot.slane %v235, 2
      %v696 = vsel %vm666, %v693, %v695
      %v697 = vrot.slane %v236, 2
      %v698 = vrot.slane %v237, 2
      %v699 = vsel %vm666, %v697, %v698
      %v700 = vrot.slane %v238, 2
      %v701 = vsel %vm666, %v698, %v700
      %v702 = vrot.slane %v239, 2
      %v703 = vrot.slane %v240, 2
      %v704 = vsel %vm666, %v702, %v703
      %v705 = vrot.slane %v241, 2
      %v706 = vsel %vm666, %v703, %v705
      %v707 = vld [vmem:[%s2 + $0x20] sm:$0xff]
      %v708 = vld [vmem:[%s2 + $0x28] sm:$0xff]
      %v709 = vsel %vm311, %v669, 0
      %v711 = vsel %vm311, %v671, 0
      %v713 = vsel %vm311, %v674, 0
      %v715 = vsel %vm311, %v676, 0
      %v717 = vsel %vm311, %v679, 0
      %v719 = vsel %vm311, %v681, 0
      %v721 = vsel %vm311, %v684, 0
      %v723 = vsel %vm311, %v686, 0
      %v725 = vsel %vm311, %v689, 0
      %v727 = vsel %vm311, %v691, 0
      %v729 = vsel %vm311, %v694, 0
      %v731 = vsel %vm311, %v696, 0
      %v733 = vsel %vm311, %v699, 0
      %v735 = vsel %vm311, %v701, 0
      %v737 = vsel %vm311, %v704, 0
      %v739 = vsel %vm311, %v706, 0
      %741 = vmatprep.subr.mxu0 0.0
      %742 = vmatpush1.msra.mxu0 0.0
      %743 = vmatprep.subr.mxu0 0.0
      %744 = vmatpush1.msra.mxu0 0.0
      %745 = vmatprep.subr.mxu0 0.0
      %746 = vmatpush1.msra.mxu0 0.0
      %747 = vmatprep.subr.mxu0 0.0
      %748 = vmatpush1.msra.mxu0 0.0
      %749 = vmatprep.subr.mxu0 0.0
      %750 = vmatpush1.msra.mxu0 0.0
      %751 = vmatprep.subr.mxu0 0.0
      %752 = vmatpush1.msra.mxu0 0.0
      %753 = vmatprep.subr.mxu0 0.0
      %754 = vmatpush1.msra.mxu0 0.0
      %755 = vmatprep.subr.mxu0 0.0
      %756 = vmatpush1.msra.mxu0 0.0
      %757 = vmatprep.subr.mxu0 0.0
      %758 = vmatpush1.msra.mxu0 0.0
      %759 = vmatprep.subr.mxu0 0.0
      %760 = vmatpush1.msra.mxu0 0.0
      %761 = vmatprep.subr.mxu0 0.0
      %762 = vmatpush1.msra.mxu0 0.0
      %763 = vmatprep.subr.mxu0 0.0
      %764 = vmatpush1.msra.mxu0 0.0
      %765 = vmatprep.subr.mxu0 0.0
      %766 = vmatpush1.msra.mxu0 0.0
      %767 = vmatprep.subr.mxu0 0.0
      %768 = vmatpush1.msra.mxu0 0.0
      %769 = vmatprep.subr.mxu0 0.0
      %770 = vmatpush1.msra.mxu0 %v708
      %771 = vmatprep.subr.mxu0 0.0
      %772 = vmatpush1.msra.mxu0 %v707
      %773 = vmatprep.subr.mxu0 0.0
      %774 = vmatpush2.msra.mxu0 0.0
      %775 = vmatprep.subr.mxu0 0.0
      %776 = vmatpush2.msra.mxu0 0.0
      %777 = vmatprep.subr.mxu0 0.0
      %778 = vmatpush2.msra.mxu0 0.0
      %779 = vmatprep.subr.mxu0 0.0
      %780 = vmatpush2.msra.mxu0 0.0
      %781 = vmatprep.subr.mxu0 0.0
      %782 = vmatpush2.msra.mxu0 0.0
      %783 = vmatprep.subr.mxu0 0.0
      %784 = vmatpush2.msra.mxu0 0.0
      %785 = vmatprep.subr.mxu0 0.0
      %786 = vmatpush2.msra.mxu0 0.0
      %787 = vmatprep.subr.mxu0 0.0
      %788 = vmatpush2.msra.mxu0 0.0
      %789 = vmatprep.subr.mxu0 0.0
      %790 = vmatpush2.msra.mxu0 0.0
      %791 = vmatprep.subr.mxu0 0.0
      %792 = vmatpush2.msra.mxu0 0.0
      %793 = vmatprep.subr.mxu0 0.0
      %794 = vmatpush2.msra.mxu0 0.0
      %795 = vmatprep.subr.mxu0 0.0
      %796 = vmatpush2.msra.mxu0 0.0
      %797 = vmatprep.subr.mxu0 0.0
      %798 = vmatpush2.msra.mxu0 0.0
      %799 = vmatprep.subr.mxu0 0.0
      %800 = vmatpush2.msra.mxu0 0.0
      %801 = vmatprep.subr.mxu0 0.0
      %802 = vmatpush2.msra.mxu0 0.0
      %803 = vmatprep.subr.mxu0 0.0
      %804 = vmatpush2.msra.mxu0 0.0
      %805 = vmatprep.mubr.f32.mxu0 0.0
      %806 = vmatmul.mubr.f32.gmra.mxu0 %v709
      %v807 = vpop.f32.mrf.mxu0
      %v808 = vadd.f32 0.0, %v807
      %v809 = vpop.f32.mrf.mxu0
      %810 = vmatprep.mubr.f32.mxu0 0.0
      %811 = vmatmul.mubr.f32.gmra.mxu0 %v711
      %v812 = vpop.f32.mrf.mxu0
      %v813 = vadd.f32 0.0, %v812
      %v814 = vpop.f32.mrf.mxu0
      %815 = vmatprep.mubr.f32.mxu0 0.0
      %816 = vmatmul.mubr.f32.gmra.mxu0 %v713
      %v817 = vpop.f32.mrf.mxu0
      %v818 = vadd.f32 0.0, %v817
      %v819 = vpop.f32.mrf.mxu0
      %820 = vmatprep.mubr.f32.mxu0 0.0
      %821 = vmatmul.mubr.f32.gmra.mxu0 %v715
      %v822 = vpop.f32.mrf.mxu0
      %v823 = vadd.f32 0.0, %v822
      %v824 = vpop.f32.mrf.mxu0
      %825 = vmatprep.mubr.f32.mxu0 0.0
      %826 = vmatmul.mubr.f32.gmra.mxu0 %v717
      %v827 = vpop.f32.mrf.mxu0
      %v828 = vadd.f32 0.0, %v827
      %v829 = vpop.f32.mrf.mxu0
      %830 = vmatprep.mubr.f32.mxu0 0.0
      %831 = vmatmul.mubr.f32.gmra.mxu0 %v719
      %v832 = vpop.f32.mrf.mxu0
      %v833 = vadd.f32 0.0, %v832
      %v834 = vpop.f32.mrf.mxu0
      %835 = vmatprep.mubr.f32.mxu0 0.0
      %836 = vmatmul.mubr.f32.gmra.mxu0 %v721
      %v837 = vpop.f32.mrf.mxu0
      %v838 = vadd.f32 0.0, %v837
      %v839 = vpop.f32.mrf.mxu0
      %840 = vmatprep.mubr.f32.mxu0 0.0
      %841 = vmatmul.mubr.f32.gmra.mxu0 %v723
      %v842 = vpop.f32.mrf.mxu0
      %v843 = vadd.f32 0.0, %v842
      %v844 = vpop.f32.mrf.mxu0
      %845 = vmatprep.mubr.f32.mxu0 0.0
      %846 = vmatmul.mubr.f32.gmra.mxu0 %v725
      %v847 = vpop.f32.mrf.mxu0
      %v848 = vadd.f32 0.0, %v847
      %v849 = vpop.f32.mrf.mxu0
      %850 = vmatprep.mubr.f32.mxu0 0.0
      %851 = vmatmul.mubr.f32.gmra.mxu0 %v727
      %v852 = vpop.f32.mrf.mxu0
      %v853 = vadd.f32 0.0, %v852
      %v854 = vpop.f32.mrf.mxu0
      %855 = vmatprep.mubr.f32.mxu0 0.0
      %856 = vmatmul.mubr.f32.gmra.mxu0 %v729
      %v857 = vpop.f32.mrf.mxu0
      %v858 = vadd.f32 0.0, %v857
      %v859 = vpop.f32.mrf.mxu0
      %860 = vmatprep.mubr.f32.mxu0 0.0
      %861 = vmatmul.mubr.f32.gmra.mxu0 %v731
      %v862 = vpop.f32.mrf.mxu0
      %v863 = vadd.f32 0.0, %v862
      %v864 = vpop.f32.mrf.mxu0
      %865 = vmatprep.mubr.f32.mxu0 0.0
      %866 = vmatmul.mubr.f32.gmra.mxu0 %v733
      %v867 = vpop.f32.mrf.mxu0
      %v868 = vadd.f32 0.0, %v867
      %v869 = vpop.f32.mrf.mxu0
      %870 = vmatprep.mubr.f32.mxu0 0.0
      %871 = vmatmul.mubr.f32.gmra.mxu0 %v735
      %v872 = vpop.f32.mrf.mxu0
      %v873 = vadd.f32 0.0, %v872
      %v874 = vpop.f32.mrf.mxu0
      %875 = vmatprep.mubr.f32.mxu0 0.0
      %876 = vmatmul.mubr.f32.gmra.mxu0 %v737
      %v877 = vpop.f32.mrf.mxu0
      %v878 = vadd.f32 0.0, %v877
      %v879 = vpop.f32.mrf.mxu0
      %880 = vmatprep.mubr.f32.mxu0 0.0
      %881 = vmatmul.mubr.f32.gmra.mxu0 %v739
      %v882 = vpop.f32.mrf.mxu0
      %v883 = vadd.f32 0.0, %v882
      %v884 = vpop.f32.mrf.mxu0
      %885 = vdwg.mxu0
      %v886 = vadd.f32 %v588, %v808
      %v887 = vadd.f32 %v593, %v813
      %v888 = vadd.f32 %v598, %v818
      %v889 = vadd.f32 %v603, %v823
      %v890 = vadd.f32 %v608, %v828
      %v891 = vadd.f32 %v613, %v833
      %v892 = vadd.f32 %v618, %v838
      %v893 = vadd.f32 %v623, %v843
      %v894 = vadd.f32 %v628, %v848
      %v895 = vadd.f32 %v633, %v853
      %v896 = vadd.f32 %v638, %v858
      %v897 = vadd.f32 %v643, %v863
      %v898 = vadd.f32 %v648, %v868
      %v899 = vadd.f32 %v653, %v873
      %v900 = vadd.f32 %v658, %v878
      %v901 = vadd.f32 %v663, %v883
      %vm902 = vcmask 1044480
      %v903 = vrot.slane %v218, 3
      %v904 = vrot.slane %v219, 3
      %v905 = vsel %vm902, %v903, %v904
      %v906 = vrot.slane %v220, 3
      %v907 = vsel %vm902, %v904, %v906
      %v908 = vrot.slane %v221, 3
      %v909 = vrot.slane %v222, 3
      %v910 = vsel %vm902, %v908, %v909
      %v911 = vrot.slane %v223, 3
      %v912 = vsel %vm902, %v909, %v911
      %v913 = vrot.slane %v224, 3
      %v914 = vrot.slane %v225, 3
      %v915 = vsel %vm902, %v913, %v914
      %v916 = vrot.slane %v226, 3
      %v917 = vsel %vm902, %v914, %v916
      %v918 = vrot.slane %v227, 3
      %v919 = vrot.slane %v228, 3
      %v920 = vsel %vm902, %v918, %v919
      %v921 = vrot.slane %v229, 3
      %v922 = vsel %vm902, %v919, %v921
      %v923 = vrot.slane %v230, 3
      %v924 = vrot.slane %v231, 3
      %v925 = vsel %vm902, %v923, %v924
      %v926 = vrot.slane %v232, 3
      %v927 = vsel %vm902, %v924, %v926
      %v928 = vrot.slane %v233, 3
      %v929 = vrot.slane %v234, 3
      %v930 = vsel %vm902, %v928, %v929
      %v931 = vrot.slane %v235, 3
      %v932 = vsel %vm902, %v929, %v931
      %v933 = vrot.slane %v236, 3
      %v934 = vrot.slane %v237, 3
      %v935 = vsel %vm902, %v933, %v934
      %v936 = vrot.slane %v238, 3
      %v937 = vsel %vm902, %v934, %v936
      %v938 = vrot.slane %v239, 3
      %v939 = vrot.slane %v240, 3
      %v940 = vsel %vm902, %v938, %v939
      %v941 = vrot.slane %v241, 3
      %v942 = vsel %vm902, %v939, %v941
      %v943 = vld [vmem:[%s2 + $0x30] sm:$0xff]
      %v944 = vld [vmem:[%s2 + $0x38] sm:$0xff]
      %v945 = vsel %vm311, %v905, 0
      %v947 = vsel %vm311, %v907, 0
      %v949 = vsel %vm311, %v910, 0
      %v951 = vsel %vm311, %v912, 0
      %v953 = vsel %vm311, %v915, 0
      %v955 = vsel %vm311, %v917, 0
      %v957 = vsel %vm311, %v920, 0
      %v959 = vsel %vm311, %v922, 0
      %v961 = vsel %vm311, %v925, 0
      %v963 = vsel %vm311, %v927, 0
      %v965 = vsel %vm311, %v930, 0
      %v967 = vsel %vm311, %v932, 0
      %v969 = vsel %vm311, %v935, 0
      %v971 = vsel %vm311, %v937, 0
      %v973 = vsel %vm311, %v940, 0
      %v975 = vsel %vm311, %v942, 0
      %977 = vmatprep.subr.mxu0 0.0
      %978 = vmatpush1.msra.mxu0 0.0
      %979 = vmatprep.subr.mxu0 0.0
      %980 = vmatpush1.msra.mxu0 0.0
      %981 = vmatprep.subr.mxu0 0.0
      %982 = vmatpush1.msra.mxu0 0.0
      %983 = vmatprep.subr.mxu0 0.0
      %984 = vmatpush1.msra.mxu0 0.0
      %985 = vmatprep.subr.mxu0 0.0
      %986 = vmatpush1.msra.mxu0 0.0
      %987 = vmatprep.subr.mxu0 0.0
      %988 = vmatpush1.msra.mxu0 0.0
      %989 = vmatprep.subr.mxu0 0.0
      %990 = vmatpush1.msra.mxu0 0.0
      %991 = vmatprep.subr.mxu0 0.0
      %992 = vmatpush1.msra.mxu0 0.0
      %993 = vmatprep.subr.mxu0 0.0
      %994 = vmatpush1.msra.mxu0 0.0
      %995 = vmatprep.subr.mxu0 0.0
      %996 = vmatpush1.msra.mxu0 0.0
      %997 = vmatprep.subr.mxu0 0.0
      %998 = vmatpush1.msra.mxu0 0.0
      %999 = vmatprep.subr.mxu0 0.0
      %1000 = vmatpush1.msra.mxu0 0.0
      %1001 = vmatprep.subr.mxu0 0.0
      %1002 = vmatpush1.msra.mxu0 0.0
      %1003 = vmatprep.subr.mxu0 0.0
      %1004 = vmatpush1.msra.mxu0 0.0
      %1005 = vmatprep.subr.mxu0 0.0
      %1006 = vmatpush1.msra.mxu0 %v944
      %1007 = vmatprep.subr.mxu0 0.0
      %1008 = vmatpush1.msra.mxu0 %v943
      %1009 = vmatprep.subr.mxu0 0.0
      %1010 = vmatpush2.msra.mxu0 0.0
      %1011 = vmatprep.subr.mxu0 0.0
      %1012 = vmatpush2.msra.mxu0 0.0
      %1013 = vmatprep.subr.mxu0 0.0
      %1014 = vmatpush2.msra.mxu0 0.0
      %1015 = vmatprep.subr.mxu0 0.0
      %1016 = vmatpush2.msra.mxu0 0.0
      %1017 = vmatprep.subr.mxu0 0.0
      %1018 = vmatpush2.msra.mxu0 0.0
      %1019 = vmatprep.subr.mxu0 0.0
      %1020 = vmatpush2.msra.mxu0 0.0
      %1021 = vmatprep.subr.mxu0 0.0
      %1022 = vmatpush2.msra.mxu0 0.0
      %1023 = vmatprep.subr.mxu0 0.0
      %1024 = vmatpush2.msra.mxu0 0.0
      %1025 = vmatprep.subr.mxu0 0.0
      %1026 = vmatpush2.msra.mxu0 0.0
      %1027 = vmatprep.subr.mxu0 0.0
      %1028 = vmatpush2.msra.mxu0 0.0
      %1029 = vmatprep.subr.mxu0 0.0
      %1030 = vmatpush2.msra.mxu0 0.0
      %1031 = vmatprep.subr.mxu0 0.0
      %1032 = vmatpush2.msra.mxu0 0.0
      %1033 = vmatprep.subr.mxu0 0.0
      %1034 = vmatpush2.msra.mxu0 0.0
      %1035 = vmatprep.subr.mxu0 0.0
      %1036 = vmatpush2.msra.mxu0 0.0
      %1037 = vmatprep.subr.mxu0 0.0
      %1038 = vmatpush2.msra.mxu0 0.0
      %1039 = vmatprep.subr.mxu0 0.0
      %1040 = vmatpush2.msra.mxu0 0.0
      %1041 = vmatprep.mubr.f32.mxu0 0.0
      %1042 = vmatmul.mubr.f32.gmra.mxu0 %v945
      %v1043 = vpop.f32.mrf.mxu0
      %v1044 = vadd.f32 0.0, %v1043
      %v1045 = vpop.f32.mrf.mxu0
      %1046 = vmatprep.mubr.f32.mxu0 0.0
      %1047 = vmatmul.mubr.f32.gmra.mxu0 %v947
      %v1048 = vpop.f32.mrf.mxu0
      %v1049 = vadd.f32 0.0, %v1048
      %v1050 = vpop.f32.mrf.mxu0
      %1051 = vmatprep.mubr.f32.mxu0 0.0
      %1052 = vmatmul.mubr.f32.gmra.mxu0 %v949
      %v1053 = vpop.f32.mrf.mxu0
      %v1054 = vadd.f32 0.0, %v1053
      %v1055 = vpop.f32.mrf.mxu0
      %1056 = vmatprep.mubr.f32.mxu0 0.0
      %1057 = vmatmul.mubr.f32.gmra.mxu0 %v951
      %v1058 = vpop.f32.mrf.mxu0
      %v1059 = vadd.f32 0.0, %v1058
      %v1060 = vpop.f32.mrf.mxu0
      %1061 = vmatprep.mubr.f32.mxu0 0.0
      %1062 = vmatmul.mubr.f32.gmra.mxu0 %v953
      %v1063 = vpop.f32.mrf.mxu0
      %v1064 = vadd.f32 0.0, %v1063
      %v1065 = vpop.f32.mrf.mxu0
      %1066 = vmatprep.mubr.f32.mxu0 0.0
      %1067 = vmatmul.mubr.f32.gmra.mxu0 %v955
      %v1068 = vpop.f32.mrf.mxu0
      %v1069 = vadd.f32 0.0, %v1068
      %v1070 = vpop.f32.mrf.mxu0
      %1071 = vmatprep.mubr.f32.mxu0 0.0
      %1072 = vmatmul.mubr.f32.gmra.mxu0 %v957
      %v1073 = vpop.f32.mrf.mxu0
      %v1074 = vadd.f32 0.0, %v1073
      %v1075 = vpop.f32.mrf.mxu0
      %1076 = vmatprep.mubr.f32.mxu0 0.0
      %1077 = vmatmul.mubr.f32.gmra.mxu0 %v959
      %v1078 = vpop.f32.mrf.mxu0
      %v1079 = vadd.f32 0.0, %v1078
      %v1080 = vpop.f32.mrf.mxu0
      %1081 = vmatprep.mubr.f32.mxu0 0.0
      %1082 = vmatmul.mubr.f32.gmra.mxu0 %v961
      %v1083 = vpop.f32.mrf.mxu0
      %v1084 = vadd.f32 0.0, %v1083
      %v1085 = vpop.f32.mrf.mxu0
      %1086 = vmatprep.mubr.f32.mxu0 0.0
      %1087 = vmatmul.mubr.f32.gmra.mxu0 %v963
      %v1088 = vpop.f32.mrf.mxu0
      %v1089 = vadd.f32 0.0, %v1088
      %v1090 = vpop.f32.mrf.mxu0
      %1091 = vmatprep.mubr.f32.mxu0 0.0
      %1092 = vmatmul.mubr.f32.gmra.mxu0 %v965
      %v1093 = vpop.f32.mrf.mxu0
      %v1094 = vadd.f32 0.0, %v1093
      %v1095 = vpop.f32.mrf.mxu0
      %1096 = vmatprep.mubr.f32.mxu0 0.0
      %1097 = vmatmul.mubr.f32.gmra.mxu0 %v967
      %v1098 = vpop.f32.mrf.mxu0
      %v1099 = vadd.f32 0.0, %v1098
      %v1100 = vpop.f32.mrf.mxu0
      %1101 = vmatprep.mubr.f32.mxu0 0.0
      %1102 = vmatmul.mubr.f32.gmra.mxu0 %v969
      %v1103 = vpop.f32.mrf.mxu0
      %v1104 = vadd.f32 0.0, %v1103
      %v1105 = vpop.f32.mrf.mxu0
      %1106 = vmatprep.mubr.f32.mxu0 0.0
      %1107 = vmatmul.mubr.f32.gmra.mxu0 %v971
      %v1108 = vpop.f32.mrf.mxu0
      %v1109 = vadd.f32 0.0, %v1108
      %v1110 = vpop.f32.mrf.mxu0
      %1111 = vmatprep.mubr.f32.mxu0 0.0
      %1112 = vmatmul.mubr.f32.gmra.mxu0 %v973
      %v1113 = vpop.f32.mrf.mxu0
      %v1114 = vadd.f32 0.0, %v1113
      %v1115 = vpop.f32.mrf.mxu0
      %1116 = vmatprep.mubr.f32.mxu0 0.0
      %1117 = vmatmul.mubr.f32.gmra.mxu0 %v975
      %v1118 = vpop.f32.mrf.mxu0
      %v1119 = vadd.f32 0.0, %v1118
      %v1120 = vpop.f32.mrf.mxu0
      %1121 = vdwg.mxu0
      %v1122 = vadd.f32 %v886, %v1044
      %v1123 = vadd.f32 %v887, %v1049
      %v1124 = vadd.f32 %v888, %v1054
      %v1125 = vadd.f32 %v889, %v1059
      %v1126 = vadd.f32 %v890, %v1064
      %v1127 = vadd.f32 %v891, %v1069
      %v1128 = vadd.f32 %v892, %v1074
      %v1129 = vadd.f32 %v893, %v1079
      %v1130 = vadd.f32 %v894, %v1084
      %v1131 = vadd.f32 %v895, %v1089
      %v1132 = vadd.f32 %v896, %v1094
      %v1133 = vadd.f32 %v897, %v1099
      %v1134 = vadd.f32 %v898, %v1104
      %v1135 = vadd.f32 %v899, %v1109
      %v1136 = vadd.f32 %v900, %v1114
      %v1137 = vadd.f32 %v901, %v1119
      %vm1138 = vcmask 1043456
      %v1139 = vrot.slane %v218, 4
      %v1140 = vrot.slane %v219, 4
      %v1141 = vsel %vm1138, %v1139, %v1140
      %v1142 = vrot.slane %v220, 4
      %v1143 = vsel %vm1138, %v1140, %v1142
      %v1144 = vrot.slane %v221, 4
      %v1145 = vrot.slane %v222, 4
      %v1146 = vsel %vm1138, %v1144, %v1145
      %v1147 = vrot.slane %v223, 4
      %v1148 = vsel %vm1138, %v1145, %v1147
      %v1149 = vrot.slane %v224, 4
      %v1150 = vrot.slane %v225, 4
      %v1151 = vsel %vm1138, %v1149, %v1150
      %v1152 = vrot.slane %v226, 4
      %v1153 = vsel %vm1138, %v1150, %v1152
      %v1154 = vrot.slane %v227, 4
      %v1155 = vrot.slane %v228, 4
      %v1156 = vsel %vm1138, %v1154, %v1155
      %v1157 = vrot.slane %v229, 4
      %v1158 = vsel %vm1138, %v1155, %v1157
      %v1159 = vrot.slane %v230, 4
      %v1160 = vrot.slane %v231, 4
      %v1161 = vsel %vm1138, %v1159, %v1160
      %v1162 = vrot.slane %v232, 4
      %v1163 = vsel %vm1138, %v1160, %v1162
      %v1164 = vrot.slane %v233, 4
      %v1165 = vrot.slane %v234, 4
      %v1166 = vsel %vm1138, %v1164, %v1165
      %v1167 = vrot.slane %v235, 4
      %v1168 = vsel %vm1138, %v1165, %v1167
      %v1169 = vrot.slane %v236, 4
      %v1170 = vrot.slane %v237, 4
      %v1171 = vsel %vm1138, %v1169, %v1170
      %v1172 = vrot.slane %v238, 4
      %v1173 = vsel %vm1138, %v1170, %v1172
      %v1174 = vrot.slane %v239, 4
      %v1175 = vrot.slane %v240, 4
      %v1176 = vsel %vm1138, %v1174, %v1175
      %v1177 = vrot.slane %v241, 4
      %v1178 = vsel %vm1138, %v1175, %v1177
      %v1179 = vld [vmem:[%s2 + $0x40] sm:$0xff]
      %v1180 = vld [vmem:[%s2 + $0x48] sm:$0xff]
      %v1181 = vsel %vm311, %v1141, 0
      %v1183 = vsel %vm311, %v1143, 0
      %v1185 = vsel %vm311, %v1146, 0
      %v1187 = vsel %vm311, %v1148, 0
      %v1189 = vsel %vm311, %v1151, 0
      %v1191 = vsel %vm311, %v1153, 0
      %v1193 = vsel %vm311, %v1156, 0
      %v1195 = vsel %vm311, %v1158, 0
      %v1197 = vsel %vm311, %v1161, 0
      %v1199 = vsel %vm311, %v1163, 0
      %v1201 = vsel %vm311, %v1166, 0
      %v1203 = vsel %vm311, %v1168, 0
      %v1205 = vsel %vm311, %v1171, 0
      %v1207 = vsel %vm311, %v1173, 0
      %v1209 = vsel %vm311, %v1176, 0
      %v1211 = vsel %vm311, %v1178, 0
      %1213 = vmatprep.subr.mxu0 0.0
      %1214 = vmatpush1.msra.mxu0 0.0
      %1215 = vmatprep.subr.mxu0 0.0
      %1216 = vmatpush1.msra.mxu0 0.0
      %1217 = vmatprep.subr.mxu0 0.0
      %1218 = vmatpush1.msra.mxu0 0.0
      %1219 = vmatprep.subr.mxu0 0.0
      %1220 = vmatpush1.msra.mxu0 0.0
      %1221 = vmatprep.subr.mxu0 0.0
      %1222 = vmatpush1.msra.mxu0 0.0
      %1223 = vmatprep.subr.mxu0 0.0
      %1224 = vmatpush1.msra.mxu0 0.0
      %1225 = vmatprep.subr.mxu0 0.0
      %1226 = vmatpush1.msra.mxu0 0.0
      %1227 = vmatprep.subr.mxu0 0.0
      %1228 = vmatpush1.msra.mxu0 0.0
      %1229 = vmatprep.subr.mxu0 0.0
      %1230 = vmatpush1.msra.mxu0 0.0
      %1231 = vmatprep.subr.mxu0 0.0
      %1232 = vmatpush1.msra.mxu0 0.0
      %1233 = vmatprep.subr.mxu0 0.0
      %1234 = vmatpush1.msra.mxu0 0.0
      %1235 = vmatprep.subr.mxu0 0.0
      %1236 = vmatpush1.msra.mxu0 0.0
      %1237 = vmatprep.subr.mxu0 0.0
      %1238 = vmatpush1.msra.mxu0 0.0
      %1239 = vmatprep.subr.mxu0 0.0
      %1240 = vmatpush1.msra.mxu0 0.0
      %1241 = vmatprep.subr.mxu0 0.0
      %1242 = vmatpush1.msra.mxu0 %v1180
      %1243 = vmatprep.subr.mxu0 0.0
      %1244 = vmatpush1.msra.mxu0 %v1179
      %1245 = vmatprep.subr.mxu0 0.0
      %1246 = vmatpush2.msra.mxu0 0.0
      %1247 = vmatprep.subr.mxu0 0.0
      %1248 = vmatpush2.msra.mxu0 0.0
      %1249 = vmatprep.subr.mxu0 0.0
      %1250 = vmatpush2.msra.mxu0 0.0
      %1251 = vmatprep.subr.mxu0 0.0
      %1252 = vmatpush2.msra.mxu0 0.0
      %1253 = vmatprep.subr.mxu0 0.0
      %1254 = vmatpush2.msra.mxu0 0.0
      %1255 = vmatprep.subr.mxu0 0.0
      %1256 = vmatpush2.msra.mxu0 0.0
      %1257 = vmatprep.subr.mxu0 0.0
      %1258 = vmatpush2.msra.mxu0 0.0
      %1259 = vmatprep.subr.mxu0 0.0
      %1260 = vmatpush2.msra.mxu0 0.0
      %1261 = vmatprep.subr.mxu0 0.0
      %1262 = vmatpush2.msra.mxu0 0.0
      %1263 = vmatprep.subr.mxu0 0.0
      %1264 = vmatpush2.msra.mxu0 0.0
      %1265 = vmatprep.subr.mxu0 0.0
      %1266 = vmatpush2.msra.mxu0 0.0
      %1267 = vmatprep.subr.mxu0 0.0
      %1268 = vmatpush2.msra.mxu0 0.0
      %1269 = vmatprep.subr.mxu0 0.0
      %1270 = vmatpush2.msra.mxu0 0.0
      %1271 = vmatprep.subr.mxu0 0.0
      %1272 = vmatpush2.msra.mxu0 0.0
      %1273 = vmatprep.subr.mxu0 0.0
      %1274 = vmatpush2.msra.mxu0 0.0
      %1275 = vmatprep.subr.mxu0 0.0
      %1276 = vmatpush2.msra.mxu0 0.0
      %1277 = vmatprep.mubr.f32.mxu0 0.0
      %1278 = vmatmul.mubr.f32.gmra.mxu0 %v1181
      %v1279 = vpop.f32.mrf.mxu0
      %v1280 = vadd.f32 0.0, %v1279
      %v1281 = vpop.f32.mrf.mxu0
      %1282 = vmatprep.mubr.f32.mxu0 0.0
      %1283 = vmatmul.mubr.f32.gmra.mxu0 %v1183
      %v1284 = vpop.f32.mrf.mxu0
      %v1285 = vadd.f32 0.0, %v1284
      %v1286 = vpop.f32.mrf.mxu0
      %1287 = vmatprep.mubr.f32.mxu0 0.0
      %1288 = vmatmul.mubr.f32.gmra.mxu0 %v1185
      %v1289 = vpop.f32.mrf.mxu0
      %v1290 = vadd.f32 0.0, %v1289
      %v1291 = vpop.f32.mrf.mxu0
      %1292 = vmatprep.mubr.f32.mxu0 0.0
      %1293 = vmatmul.mubr.f32.gmra.mxu0 %v1187
      %v1294 = vpop.f32.mrf.mxu0
      %v1295 = vadd.f32 0.0, %v1294
      %v1296 = vpop.f32.mrf.mxu0
      %1297 = vmatprep.mubr.f32.mxu0 0.0
      %1298 = vmatmul.mubr.f32.gmra.mxu0 %v1189
      %v1299 = vpop.f32.mrf.mxu0
      %v1300 = vadd.f32 0.0, %v1299
      %v1301 = vpop.f32.mrf.mxu0
      %1302 = vmatprep.mubr.f32.mxu0 0.0
      %1303 = vmatmul.mubr.f32.gmra.mxu0 %v1191
      %v1304 = vpop.f32.mrf.mxu0
      %v1305 = vadd.f32 0.0, %v1304
      %v1306 = vpop.f32.mrf.mxu0
      %1307 = vmatprep.mubr.f32.mxu0 0.0
      %1308 = vmatmul.mubr.f32.gmra.mxu0 %v1193
      %v1309 = vpop.f32.mrf.mxu0
      %v1310 = vadd.f32 0.0, %v1309
      %v1311 = vpop.f32.mrf.mxu0
      %1312 = vmatprep.mubr.f32.mxu0 0.0
      %1313 = vmatmul.mubr.f32.gmra.mxu0 %v1195
      %v1314 = vpop.f32.mrf.mxu0
      %v1315 = vadd.f32 0.0, %v1314
      %v1316 = vpop.f32.mrf.mxu0
      %1317 = vmatprep.mubr.f32.mxu0 0.0
      %1318 = vmatmul.mubr.f32.gmra.mxu0 %v1197
      %v1319 = vpop.f32.mrf.mxu0
      %v1320 = vadd.f32 0.0, %v1319
      %v1321 = vpop.f32.mrf.mxu0
      %1322 = vmatprep.mubr.f32.mxu0 0.0
      %1323 = vmatmul.mubr.f32.gmra.mxu0 %v1199
      %v1324 = vpop.f32.mrf.mxu0
      %v1325 = vadd.f32 0.0, %v1324
      %v1326 = vpop.f32.mrf.mxu0
      %1327 = vmatprep.mubr.f32.mxu0 0.0
      %1328 = vmatmul.mubr.f32.gmra.mxu0 %v1201
      %v1329 = vpop.f32.mrf.mxu0
      %v1330 = vadd.f32 0.0, %v1329
      %v1331 = vpop.f32.mrf.mxu0
      %1332 = vmatprep.mubr.f32.mxu0 0.0
      %1333 = vmatmul.mubr.f32.gmra.mxu0 %v1203
      %v1334 = vpop.f32.mrf.mxu0
      %v1335 = vadd.f32 0.0, %v1334
      %v1336 = vpop.f32.mrf.mxu0
      %1337 = vmatprep.mubr.f32.mxu0 0.0
      %1338 = vmatmul.mubr.f32.gmra.mxu0 %v1205
      %v1339 = vpop.f32.mrf.mxu0
      %v1340 = vadd.f32 0.0, %v1339
      %v1341 = vpop.f32.mrf.mxu0
      %1342 = vmatprep.mubr.f32.mxu0 0.0
      %1343 = vmatmul.mubr.f32.gmra.mxu0 %v1207
      %v1344 = vpop.f32.mrf.mxu0
      %v1345 = vadd.f32 0.0, %v1344
      %v1346 = vpop.f32.mrf.mxu0
      %1347 = vmatprep.mubr.f32.mxu0 0.0
      %1348 = vmatmul.mubr.f32.gmra.mxu0 %v1209
      %v1349 = vpop.f32.mrf.mxu0
      %v1350 = vadd.f32 0.0, %v1349
      %v1351 = vpop.f32.mrf.mxu0
      %1352 = vmatprep.mubr.f32.mxu0 0.0
      %1353 = vmatmul.mubr.f32.gmra.mxu0 %v1211
      %v1354 = vpop.f32.mrf.mxu0
      %v1355 = vadd.f32 0.0, %v1354
      %v1356 = vpop.f32.mrf.mxu0
      %1357 = vdwg.mxu0
      %v1358 = vadd.f32 %v1122, %v1280
      %v1359 = vadd.f32 %v1123, %v1285
      %v1360 = vadd.f32 %v1124, %v1290
      %v1361 = vadd.f32 %v1125, %v1295
      %v1362 = vadd.f32 %v1126, %v1300
      %v1363 = vadd.f32 %v1127, %v1305
      %v1364 = vadd.f32 %v1128, %v1310
      %v1365 = vadd.f32 %v1129, %v1315
      %v1366 = vadd.f32 %v1130, %v1320
      %v1367 = vadd.f32 %v1131, %v1325
      %v1368 = vadd.f32 %v1132, %v1330
      %v1369 = vadd.f32 %v1133, %v1335
      %v1370 = vadd.f32 %v1134, %v1340
      %v1371 = vadd.f32 %v1135, %v1345
      %v1372 = vadd.f32 %v1136, %v1350
      %v1373 = vadd.f32 %v1137, %v1355
      %v1374 = vld [vmem:[%s3] sm:$0x1]
      %v1375 = vlaneseq
      %v1376 = vshrl.u32 %v1375, 7
      %v1377 = vsub.s32 0, %v1376
      %v1378 = vrot.slane %v1374, %v1377
      %v1379 = vadd.f32 %v1358, %v1378
      %v1380 = vadd.f32 %v1359, %v1378
      %v1381 = vadd.f32 %v1360, %v1378
      %v1382 = vadd.f32 %v1361, %v1378
      %v1383 = vadd.f32 %v1362, %v1378
      %v1384 = vadd.f32 %v1363, %v1378
      %v1385 = vadd.f32 %v1364, %v1378
      %v1386 = vadd.f32 %v1365, %v1378
      %v1387 = vadd.f32 %v1366, %v1378
      %v1388 = vadd.f32 %v1367, %v1378
      %v1389 = vadd.f32 %v1368, %v1378
      %v1390 = vadd.f32 %v1369, %v1378
      %v1391 = vadd.f32 %v1370, %v1378
      %v1392 = vadd.f32 %v1371, %v1378
      %v1393 = vadd.f32 %v1372, %v1378
      %v1394 = vadd.f32 %v1373, %v1378
      %v1395 = vmax.f32 %v1379, 0.0
      %v1396 = vmax.f32 %v1380, 0.0
      %v1397 = vmax.f32 %v1381, 0.0
      %v1398 = vmax.f32 %v1382, 0.0
      %v1399 = vmax.f32 %v1383, 0.0
      %v1400 = vmax.f32 %v1384, 0.0
      %v1401 = vmax.f32 %v1385, 0.0
      %v1402 = vmax.f32 %v1386, 0.0
      %v1403 = vmax.f32 %v1387, 0.0
      %v1404 = vmax.f32 %v1388, 0.0
      %v1405 = vmax.f32 %v1389, 0.0
      %v1406 = vmax.f32 %v1390, 0.0
      %v1407 = vmax.f32 %v1391, 0.0
      %v1408 = vmax.f32 %v1392, 0.0
      %v1409 = vmax.f32 %v1393, 0.0
      %v1410 = vmax.f32 %v1394, 0.0
      %vm1427 = vcmask 1041408
      %v1428 = vrot.slane %v1395, 6
      %v1429 = vrot.slane %v1396, 6
      %v1430 = vsel %vm1427, %v1428, %v1429
      %v1431 = vrot.slane %v1397, 6
      %v1432 = vrot.slane %v1398, 6
      %v1433 = vsel %vm1427, %v1431, %v1432
      %v1434 = vrot.slane %v1399, 6
      %v1435 = vrot.slane %v1400, 6
      %v1436 = vsel %vm1427, %v1434, %v1435
      %v1437 = vrot.slane %v1401, 6
      %v1438 = vrot.slane %v1402, 6
      %v1439 = vsel %vm1427, %v1437, %v1438
      %v1440 = vrot.slane %v1403, 6
      %v1441 = vrot.slane %v1404, 6
      %v1442 = vsel %vm1427, %v1440, %v1441
      %v1443 = vrot.slane %v1405, 6
      %v1444 = vrot.slane %v1406, 6
      %v1445 = vsel %vm1427, %v1443, %v1444
      %v1446 = vrot.slane %v1407, 6
      %v1447 = vrot.slane %v1408, 6
      %v1448 = vsel %vm1427, %v1446, %v1447
      %v1449 = vrot.slane %v1409, 6
      %v1450 = vrot.slane %v1410, 6
      %v1451 = vsel %vm1427, %v1449, %v1450
      %v1468 = vsel %vm1427, 0.0, %v1428
      %v1469 = vsel %vm1427, 0.0, %v1431
      %v1470 = vsel %vm1427, 0.0, %v1434
      %v1471 = vsel %vm1427, 0.0, %v1437
      %v1472 = vsel %vm1427, 0.0, %v1440
      %v1473 = vsel %vm1427, 0.0, %v1443
      %v1474 = vsel %vm1427, 0.0, %v1446
      %v1475 = vsel %vm1427, 0.0, %v1449
      %v1476 = vsel %vm1427, %v1429, 0.0
      %v1477 = vsel %vm1427, %v1432, 0.0
      %v1478 = vsel %vm1427, %v1435, 0.0
      %v1479 = vsel %vm1427, %v1438, 0.0
      %v1480 = vsel %vm1427, %v1441, 0.0
      %v1481 = vsel %vm1427, %v1444, 0.0
      %v1482 = vsel %vm1427, %v1447, 0.0
      %v1483 = vsel %vm1427, %v1450, 0.0
      %v1484 = vld [vmem:[%s2 + $0x50] sm:$0xff]
      %v1485 = vld [vmem:[%s2 + $0x58] sm:$0xff]
      %v1486 = vld [vmem:[%s2 + $0x60] sm:$0xff]
      %v1487 = vld [vmem:[%s2 + $0x68] sm:$0xff]
      %v1504 = vrot.slane %v1468, 1
      %v1505 = vrot.slane %v1430, 1
      %v1506 = vsel %vm268, %v1504, %v1505
      %v1507 = vrot.slane %v1476, 1
      %v1508 = vsel %vm268, %v1505, %v1507
      %v1509 = vrot.slane %v1469, 1
      %v1510 = vrot.slane %v1433, 1
      %v1511 = vsel %vm268, %v1509, %v1510
      %v1512 = vrot.slane %v1477, 1
      %v1513 = vsel %vm268, %v1510, %v1512
      %v1514 = vrot.slane %v1470, 1
      %v1515 = vrot.slane %v1436, 1
      %v1516 = vsel %vm268, %v1514, %v1515
      %v1517 = vrot.slane %v1478, 1
      %v1518 = vsel %vm268, %v1515, %v1517
      %v1519 = vrot.slane %v1471, 1
      %v1520 = vrot.slane %v1439, 1
      %v1521 = vsel %vm268, %v1519, %v1520
      %v1522 = vrot.slane %v1479, 1
      %v1523 = vsel %vm268, %v1520, %v1522
      %v1524 = vrot.slane %v1472, 1
      %v1525 = vrot.slane %v1442, 1
      %v1526 = vsel %vm268, %v1524, %v1525
      %v1527 = vrot.slane %v1480, 1
      %v1528 = vsel %vm268, %v1525, %v1527
      %v1529 = vrot.slane %v1473, 1
      %v1530 = vrot.slane %v1445, 1
      %v1531 = vsel %vm268, %v1529, %v1530
      %v1532 = vrot.slane %v1481, 1
      %v1533 = vsel %vm268, %v1530, %v1532
      %v1534 = vrot.slane %v1474, 1
      %v1535 = vrot.slane %v1448, 1
      %v1536 = vsel %vm268, %v1534, %v1535
      %v1537 = vrot.slane %v1482, 1
      %v1538 = vsel %vm268, %v1535, %v1537
      %v1539 = vrot.slane %v1475, 1
      %v1540 = vrot.slane %v1451, 1
      %v1541 = vsel %vm268, %v1539, %v1540
      %v1542 = vrot.slane %v1483, 1
      %v1543 = vsel %vm268, %v1540, %v1542
      %v1544 = vld [vmem:[%s2 + $0x70] sm:$0xff]
      %v1545 = vld [vmem:[%s2 + $0x78] sm:$0xff]
      %v1546 = vld [vmem:[%s2 + $0x80] sm:$0xff]
      %v1547 = vld [vmem:[%s2 + $0x88] sm:$0xff]
      %vm1548 = vcmask 261120
      %v1549 = vsel %vm1548, %v1506, 0
      %v1551 = vsel %vm1548, %v1508, 0
      %v1553 = vsel %vm1548, %v1511, 0
      %v1555 = vsel %vm1548, %v1513, 0
      %v1557 = vsel %vm1548, %v1516, 0
      %v1559 = vsel %vm1548, %v1518, 0
      %v1561 = vsel %vm1548, %v1521, 0
      %v1563 = vsel %vm1548, %v1523, 0
      %v1565 = vsel %vm1548, %v1526, 0
      %v1567 = vsel %vm1548, %v1528, 0
      %v1569 = vsel %vm1548, %v1531, 0
      %v1571 = vsel %vm1548, %v1533, 0
      %v1573 = vsel %vm1548, %v1536, 0
      %v1575 = vsel %vm1548, %v1538, 0
      %v1577 = vsel %vm1548, %v1541, 0
      %v1579 = vsel %vm1548, %v1543, 0
      %1581 = vmatprep.subr.mxu0 0.0
      %1582 = vmatpush1.msra.mxu0 0.0
      %1583 = vmatprep.subr.mxu0 0.0
      %1584 = vmatpush1.msra.mxu0 0.0
      %1585 = vmatprep.subr.mxu0 0.0
      %1586 = vmatpush1.msra.mxu0 0.0
      %1587 = vmatprep.subr.mxu0 0.0
      %1588 = vmatpush1.msra.mxu0 0.0
      %1589 = vmatprep.subr.mxu0 0.0
      %1590 = vmatpush1.msra.mxu0 0.0
      %1591 = vmatprep.subr.mxu0 0.0
      %1592 = vmatpush1.msra.mxu0 0.0
      %1593 = vmatprep.subr.mxu0 0.0
      %1594 = vmatpush1.msra.mxu0 0.0
      %1595 = vmatprep.subr.mxu0 0.0
      %1596 = vmatpush1.msra.mxu0 0.0
      %1597 = vmatprep.subr.mxu0 0.0
      %1598 = vmatpush1.msra.mxu0 0.0
      %1599 = vmatprep.subr.mxu0 0.0
      %1600 = vmatpush1.msra.mxu0 0.0
      %1601 = vmatprep.subr.mxu0 0.0
      %1602 = vmatpush1.msra.mxu0 0.0
      %1603 = vmatprep.subr.mxu0 0.0
      %1604 = vmatpush1.msra.mxu0 0.0
      %1605 = vmatprep.subr.mxu0 0.0
      %1606 = vmatpush1.msra.mxu0 %v1547
      %1607 = vmatprep.subr.mxu0 0.0
      %1608 = vmatpush1.msra.mxu0 %v1546
      %1609 = vmatprep.subr.mxu0 0.0
      %1610 = vmatpush1.msra.mxu0 %v1545
      %1611 = vmatprep.subr.mxu0 0.0
      %1612 = vmatpush1.msra.mxu0 %v1544
      %1613 = vmatprep.subr.mxu0 0.0
      %1614 = vmatpush2.msra.mxu0 0.0
      %1615 = vmatprep.subr.mxu0 0.0
      %1616 = vmatpush2.msra.mxu0 0.0
      %1617 = vmatprep.subr.mxu0 0.0
      %1618 = vmatpush2.msra.mxu0 0.0
      %1619 = vmatprep.subr.mxu0 0.0
      %1620 = vmatpush2.msra.mxu0 0.0
      %1621 = vmatprep.subr.mxu0 0.0
      %1622 = vmatpush2.msra.mxu0 0.0
      %1623 = vmatprep.subr.mxu0 0.0
      %1624 = vmatpush2.msra.mxu0 0.0
      %1625 = vmatprep.subr.mxu0 0.0
      %1626 = vmatpush2.msra.mxu0 0.0
      %1627 = vmatprep.subr.mxu0 0.0
      %1628 = vmatpush2.msra.mxu0 0.0
      %1629 = vmatprep.subr.mxu0 0.0
      %1630 = vmatpush2.msra.mxu0 0.0
      %1631 = vmatprep.subr.mxu0 0.0
      %1632 = vmatpush2.msra.mxu0 0.0
      %1633 = vmatprep.subr.mxu0 0.0
      %1634 = vmatpush2.msra.mxu0 0.0
      %1635 = vmatprep.subr.mxu0 0.0
      %1636 = vmatpush2.msra.mxu0 0.0
      %1637 = vmatprep.subr.mxu0 0.0
      %1638 = vmatpush2.msra.mxu0 0.0
      %1639 = vmatprep.subr.mxu0 0.0
      %1640 = vmatpush2.msra.mxu0 0.0
      %1641 = vmatprep.subr.mxu0 0.0
      %1642 = vmatpush2.msra.mxu0 0.0
      %1643 = vmatprep.subr.mxu0 0.0
      %1644 = vmatpush2.msra.mxu0 0.0
      %1645 = vmatprep.mubr.f32.mxu0 0.0
      %1646 = vmatmul.mubr.f32.gmra.mxu0 %v1549
      %v1647 = vpop.f32.mrf.mxu0
      %v1648 = vadd.f32 0.0, %v1647
      %v1649 = vpop.f32.mrf.mxu0
      %1650 = vmatprep.mubr.f32.mxu0 0.0
      %1651 = vmatmul.mubr.f32.gmra.mxu0 %v1551
      %v1652 = vpop.f32.mrf.mxu0
      %v1653 = vadd.f32 0.0, %v1652
      %v1654 = vpop.f32.mrf.mxu0
      %1655 = vmatprep.mubr.f32.mxu0 0.0
      %1656 = vmatmul.mubr.f32.gmra.mxu0 %v1553
      %v1657 = vpop.f32.mrf.mxu0
      %v1658 = vadd.f32 0.0, %v1657
      %v1659 = vpop.f32.mrf.mxu0
      %1660 = vmatprep.mubr.f32.mxu0 0.0
      %1661 = vmatmul.mubr.f32.gmra.mxu0 %v1555
      %v1662 = vpop.f32.mrf.mxu0
      %v1663 = vadd.f32 0.0, %v1662
      %v1664 = vpop.f32.mrf.mxu0
      %1665 = vmatprep.mubr.f32.mxu0 0.0
      %1666 = vmatmul.mubr.f32.gmra.mxu0 %v1557
      %v1667 = vpop.f32.mrf.mxu0
      %v1668 = vadd.f32 0.0, %v1667
      %v1669 = vpop.f32.mrf.mxu0
      %1670 = vmatprep.mubr.f32.mxu0 0.0
      %1671 = vmatmul.mubr.f32.gmra.mxu0 %v1559
      %v1672 = vpop.f32.mrf.mxu0
      %v1673 = vadd.f32 0.0, %v1672
      %v1674 = vpop.f32.mrf.mxu0
      %1675 = vmatprep.mubr.f32.mxu0 0.0
      %1676 = vmatmul.mubr.f32.gmra.mxu0 %v1561
      %v1677 = vpop.f32.mrf.mxu0
      %v1678 = vadd.f32 0.0, %v1677
      %v1679 = vpop.f32.mrf.mxu0
      %1680 = vmatprep.mubr.f32.mxu0 0.0
      %1681 = vmatmul.mubr.f32.gmra.mxu0 %v1563
      %v1682 = vpop.f32.mrf.mxu0
      %v1683 = vadd.f32 0.0, %v1682
      %v1684 = vpop.f32.mrf.mxu0
      %1685 = vmatprep.mubr.f32.mxu0 0.0
      %1686 = vmatmul.mubr.f32.gmra.mxu0 %v1565
      %v1687 = vpop.f32.mrf.mxu0
      %v1688 = vadd.f32 0.0, %v1687
      %v1689 = vpop.f32.mrf.mxu0
      %1690 = vmatprep.mubr.f32.mxu0 0.0
      %1691 = vmatmul.mubr.f32.gmra.mxu0 %v1567
      %v1692 = vpop.f32.mrf.mxu0
      %v1693 = vadd.f32 0.0, %v1692
      %v1694 = vpop.f32.mrf.mxu0
      %1695 = vmatprep.mubr.f32.mxu0 0.0
      %1696 = vmatmul.mubr.f32.gmra.mxu0 %v1569
      %v1697 = vpop.f32.mrf.mxu0
      %v1698 = vadd.f32 0.0, %v1697
      %v1699 = vpop.f32.mrf.mxu0
      %1700 = vmatprep.mubr.f32.mxu0 0.0
      %1701 = vmatmul.mubr.f32.gmra.mxu0 %v1571
      %v1702 = vpop.f32.mrf.mxu0
      %v1703 = vadd.f32 0.0, %v1702
      %v1704 = vpop.f32.mrf.mxu0
      %1705 = vmatprep.mubr.f32.mxu0 0.0
      %1706 = vmatmul.mubr.f32.gmra.mxu0 %v1573
      %v1707 = vpop.f32.mrf.mxu0
      %v1708 = vadd.f32 0.0, %v1707
      %v1709 = vpop.f32.mrf.mxu0
      %1710 = vmatprep.mubr.f32.mxu0 0.0
      %1711 = vmatmul.mubr.f32.gmra.mxu0 %v1575
      %v1712 = vpop.f32.mrf.mxu0
      %v1713 = vadd.f32 0.0, %v1712
      %v1714 = vpop.f32.mrf.mxu0
      %1715 = vmatprep.mubr.f32.mxu0 0.0
      %1716 = vmatmul.mubr.f32.gmra.mxu0 %v1577
      %v1717 = vpop.f32.mrf.mxu0
      %v1718 = vadd.f32 0.0, %v1717
      %v1719 = vpop.f32.mrf.mxu0
      %1720 = vmatprep.mubr.f32.mxu0 0.0
      %1721 = vmatmul.mubr.f32.gmra.mxu0 %v1579
      %v1722 = vpop.f32.mrf.mxu0
      %v1723 = vadd.f32 0.0, %v1722
      %v1724 = vpop.f32.mrf.mxu0
      %1725 = vdwg.mxu0
      %v1726 = vsel %vm1548, %v1468, 0
      %v1728 = vsel %vm1548, %v1430, 0
      %v1730 = vsel %vm1548, %v1469, 0
      %v1732 = vsel %vm1548, %v1433, 0
      %v1734 = vsel %vm1548, %v1470, 0
      %v1736 = vsel %vm1548, %v1436, 0
      %v1738 = vsel %vm1548, %v1471, 0
      %v1740 = vsel %vm1548, %v1439, 0
      %v1742 = vsel %vm1548, %v1472, 0
      %v1744 = vsel %vm1548, %v1442, 0
      %v1746 = vsel %vm1548, %v1473, 0
      %v1748 = vsel %vm1548, %v1445, 0
      %v1750 = vsel %vm1548, %v1474, 0
      %v1752 = vsel %vm1548, %v1448, 0
      %v1754 = vsel %vm1548, %v1475, 0
      %v1756 = vsel %vm1548, %v1451, 0
      %1758 = vmatprep.subr.mxu0 0.0
      %1759 = vmatpush1.msra.mxu0 0.0
      %1760 = vmatprep.subr.mxu0 0.0
      %1761 = vmatpush1.msra.mxu0 0.0
      %1762 = vmatprep.subr.mxu0 0.0
      %1763 = vmatpush1.msra.mxu0 0.0
      %1764 = vmatprep.subr.mxu0 0.0
      %1765 = vmatpush1.msra.mxu0 0.0
      %1766 = vmatprep.subr.mxu0 0.0
      %1767 = vmatpush1.msra.mxu0 0.0
      %1768 = vmatprep.subr.mxu0 0.0
      %1769 = vmatpush1.msra.mxu0 0.0
      %1770 = vmatprep.subr.mxu0 0.0
      %1771 = vmatpush1.msra.mxu0 0.0
      %1772 = vmatprep.subr.mxu0 0.0
      %1773 = vmatpush1.msra.mxu0 0.0
      %1774 = vmatprep.subr.mxu0 0.0
      %1775 = vmatpush1.msra.mxu0 0.0
      %1776 = vmatprep.subr.mxu0 0.0
      %1777 = vmatpush1.msra.mxu0 0.0
      %1778 = vmatprep.subr.mxu0 0.0
      %1779 = vmatpush1.msra.mxu0 0.0
      %1780 = vmatprep.subr.mxu0 0.0
      %1781 = vmatpush1.msra.mxu0 0.0
      %1782 = vmatprep.subr.mxu0 0.0
      %1783 = vmatpush1.msra.mxu0 %v1487
      %1784 = vmatprep.subr.mxu0 0.0
      %1785 = vmatpush1.msra.mxu0 %v1486
      %1786 = vmatprep.subr.mxu0 0.0
      %1787 = vmatpush1.msra.mxu0 %v1485
      %1788 = vmatprep.subr.mxu0 0.0
      %1789 = vmatpush1.msra.mxu0 %v1484
      %1790 = vmatprep.subr.mxu0 0.0
      %1791 = vmatpush2.msra.mxu0 0.0
      %1792 = vmatprep.subr.mxu0 0.0
      %1793 = vmatpush2.msra.mxu0 0.0
      %1794 = vmatprep.subr.mxu0 0.0
      %1795 = vmatpush2.msra.mxu0 0.0
      %1796 = vmatprep.subr.mxu0 0.0
      %1797 = vmatpush2.msra.mxu0 0.0
      %1798 = vmatprep.subr.mxu0 0.0
      %1799 = vmatpush2.msra.mxu0 0.0
      %1800 = vmatprep.subr.mxu0 0.0
      %1801 = vmatpush2.msra.mxu0 0.0
      %1802 = vmatprep.subr.mxu0 0.0
      %1803 = vmatpush2.msra.mxu0 0.0
      %1804 = vmatprep.subr.mxu0 0.0
      %1805 = vmatpush2.msra.mxu0 0.0
      %1806 = vmatprep.subr.mxu0 0.0
      %1807 = vmatpush2.msra.mxu0 0.0
      %1808 = vmatprep.subr.mxu0 0.0
      %1809 = vmatpush2.msra.mxu0 0.0
      %1810 = vmatprep.subr.mxu0 0.0
      %1811 = vmatpush2.msra.mxu0 0.0
      %1812 = vmatprep.subr.mxu0 0.0
      %1813 = vmatpush2.msra.mxu0 0.0
      %1814 = vmatprep.subr.mxu0 0.0
      %1815 = vmatpush2.msra.mxu0 0.0
      %1816 = vmatprep.subr.mxu0 0.0
      %1817 = vmatpush2.msra.mxu0 0.0
      %1818 = vmatprep.subr.mxu0 0.0
      %1819 = vmatpush2.msra.mxu0 0.0
      %1820 = vmatprep.subr.mxu0 0.0
      %1821 = vmatpush2.msra.mxu0 0.0
      %1822 = vmatprep.mubr.f32.mxu0 0.0
      %1823 = vmatmul.mubr.f32.gmra.mxu0 %v1726
      %v1824 = vpop.f32.mrf.mxu0
      %v1825 = vadd.f32 %v1648, %v1824
      %v1826 = vpop.f32.mrf.mxu0
      %1827 = vmatprep.mubr.f32.mxu0 0.0
      %1828 = vmatmul.mubr.f32.gmra.mxu0 %v1728
      %v1829 = vpop.f32.mrf.mxu0
      %v1830 = vadd.f32 %v1653, %v1829
      %v1831 = vpop.f32.mrf.mxu0
      %1832 = vmatprep.mubr.f32.mxu0 0.0
      %1833 = vmatmul.mubr.f32.gmra.mxu0 %v1730
      %v1834 = vpop.f32.mrf.mxu0
      %v1835 = vadd.f32 %v1658, %v1834
      %v1836 = vpop.f32.mrf.mxu0
      %1837 = vmatprep.mubr.f32.mxu0 0.0
      %1838 = vmatmul.mubr.f32.gmra.mxu0 %v1732
      %v1839 = vpop.f32.mrf.mxu0
      %v1840 = vadd.f32 %v1663, %v1839
      %v1841 = vpop.f32.mrf.mxu0
      %1842 = vmatprep.mubr.f32.mxu0 0.0
      %1843 = vmatmul.mubr.f32.gmra.mxu0 %v1734
      %v1844 = vpop.f32.mrf.mxu0
      %v1845 = vadd.f32 %v1668, %v1844
      %v1846 = vpop.f32.mrf.mxu0
      %1847 = vmatprep.mubr.f32.mxu0 0.0
      %1848 = vmatmul.mubr.f32.gmra.mxu0 %v1736
      %v1849 = vpop.f32.mrf.mxu0
      %v1850 = vadd.f32 %v1673, %v1849
      %v1851 = vpop.f32.mrf.mxu0
      %1852 = vmatprep.mubr.f32.mxu0 0.0
      %1853 = vmatmul.mubr.f32.gmra.mxu0 %v1738
      %v1854 = vpop.f32.mrf.mxu0
      %v1855 = vadd.f32 %v1678, %v1854
      %v1856 = vpop.f32.mrf.mxu0
      %1857 = vmatprep.mubr.f32.mxu0 0.0
      %1858 = vmatmul.mubr.f32.gmra.mxu0 %v1740
      %v1859 = vpop.f32.mrf.mxu0
      %v1860 = vadd.f32 %v1683, %v1859
      %v1861 = vpop.f32.mrf.mxu0
      %1862 = vmatprep.mubr.f32.mxu0 0.0
      %1863 = vmatmul.mubr.f32.gmra.mxu0 %v1742
      %v1864 = vpop.f32.mrf.mxu0
      %v1865 = vadd.f32 %v1688, %v1864
      %v1866 = vpop.f32.mrf.mxu0
      %1867 = vmatprep.mubr.f32.mxu0 0.0
      %1868 = vmatmul.mubr.f32.gmra.mxu0 %v1744
      %v1869 = vpop.f32.mrf.mxu0
      %v1870 = vadd.f32 %v1693, %v1869
      %v1871 = vpop.f32.mrf.mxu0
      %1872 = vmatprep.mubr.f32.mxu0 0.0
      %1873 = vmatmul.mubr.f32.gmra.mxu0 %v1746
      %v1874 = vpop.f32.mrf.mxu0
      %v1875 = vadd.f32 %v1698, %v1874
      %v1876 = vpop.f32.mrf.mxu0
      %1877 = vmatprep.mubr.f32.mxu0 0.0
      %1878 = vmatmul.mubr.f32.gmra.mxu0 %v1748
      %v1879 = vpop.f32.mrf.mxu0
      %v1880 = vadd.f32 %v1703, %v1879
      %v1881 = vpop.f32.mrf.mxu0
      %1882 = vmatprep.mubr.f32.mxu0 0.0
      %1883 = vmatmul.mubr.f32.gmra.mxu0 %v1750
      %v1884 = vpop.f32.mrf.mxu0
      %v1885 = vadd.f32 %v1708, %v1884
      %v1886 = vpop.f32.mrf.mxu0
      %1887 = vmatprep.mubr.f32.mxu0 0.0
      %1888 = vmatmul.mubr.f32.gmra.mxu0 %v1752
      %v1889 = vpop.f32.mrf.mxu0
      %v1890 = vadd.f32 %v1713, %v1889
      %v1891 = vpop.f32.mrf.mxu0
      %1892 = vmatprep.mubr.f32.mxu0 0.0
      %1893 = vmatmul.mubr.f32.gmra.mxu0 %v1754
      %v1894 = vpop.f32.mrf.mxu0
      %v1895 = vadd.f32 %v1718, %v1894
      %v1896 = vpop.f32.mrf.mxu0
      %1897 = vmatprep.mubr.f32.mxu0 0.0
      %1898 = vmatmul.mubr.f32.gmra.mxu0 %v1756
      %v1899 = vpop.f32.mrf.mxu0
      %v1900 = vadd.f32 %v1723, %v1899
      %v1901 = vpop.f32.mrf.mxu0
      %1902 = vdwg.mxu0
      %v1903 = vrot.slane %v1468, 2
      %v1904 = vrot.slane %v1430, 2
      %v1905 = vsel %vm666, %v1903, %v1904
      %v1906 = vrot.slane %v1476, 2
      %v1907 = vsel %vm666, %v1904, %v1906
      %v1908 = vrot.slane %v1469, 2
      %v1909 = vrot.slane %v1433, 2
      %v1910 = vsel %vm666, %v1908, %v1909
      %v1911 = vrot.slane %v1477, 2
      %v1912 = vsel %vm666, %v1909, %v1911
      %v1913 = vrot.slane %v1470, 2
      %v1914 = vrot.slane %v1436, 2
      %v1915 = vsel %vm666, %v1913, %v1914
      %v1916 = vrot.slane %v1478, 2
      %v1917 = vsel %vm666, %v1914, %v1916
      %v1918 = vrot.slane %v1471, 2
      %v1919 = vrot.slane %v1439, 2
      %v1920 = vsel %vm666, %v1918, %v1919
      %v1921 = vrot.slane %v1479, 2
      %v1922 = vsel %vm666, %v1919, %v1921
      %v1923 = vrot.slane %v1472, 2
      %v1924 = vrot.slane %v1442, 2
      %v1925 = vsel %vm666, %v1923, %v1924
      %v1926 = vrot.slane %v1480, 2
      %v1927 = vsel %vm666, %v1924, %v1926
      %v1928 = vrot.slane %v1473, 2
      %v1929 = vrot.slane %v1445, 2
      %v1930 = vsel %vm666, %v1928, %v1929
      %v1931 = vrot.slane %v1481, 2
      %v1932 = vsel %vm666, %v1929, %v1931
      %v1933 = vrot.slane %v1474, 2
      %v1934 = vrot.slane %v1448, 2
      %v1935 = vsel %vm666, %v1933, %v1934
      %v1936 = vrot.slane %v1482, 2
      %v1937 = vsel %vm666, %v1934, %v1936
      %v1938 = vrot.slane %v1475, 2
      %v1939 = vrot.slane %v1451, 2
      %v1940 = vsel %vm666, %v1938, %v1939
      %v1941 = vrot.slane %v1483, 2
      %v1942 = vsel %vm666, %v1939, %v1941
      %v1943 = vld [vmem:[%s2 + $0x90] sm:$0xff]
      %v1944 = vld [vmem:[%s2 + $0x98] sm:$0xff]
      %v1945 = vld [vmem:[%s2 + $0xa0] sm:$0xff]
      %v1946 = vld [vmem:[%s2 + $0xa8] sm:$0xff]
      %v1947 = vsel %vm1548, %v1905, 0
      %v1949 = vsel %vm1548, %v1907, 0
      %v1951 = vsel %vm1548, %v1910, 0
      %v1953 = vsel %vm1548, %v1912, 0
      %v1955 = vsel %vm1548, %v1915, 0
      %v1957 = vsel %vm1548, %v1917, 0
      %v1959 = vsel %vm1548, %v1920, 0
      %v1961 = vsel %vm1548, %v1922, 0
      %v1963 = vsel %vm1548, %v1925, 0
      %v1965 = vsel %vm1548, %v1927, 0
      %v1967 = vsel %vm1548, %v1930, 0
      %v1969 = vsel %vm1548, %v1932, 0
      %v1971 = vsel %vm1548, %v1935, 0
      %v1973 = vsel %vm1548, %v1937, 0
      %v1975 = vsel %vm1548, %v1940, 0
      %v1977 = vsel %vm1548, %v1942, 0
      %1979 = vmatprep.subr.mxu0 0.0
      %1980 = vmatpush1.msra.mxu0 0.0
      %1981 = vmatprep.subr.mxu0 0.0
      %1982 = vmatpush1.msra.mxu0 0.0
      %1983 = vmatprep.subr.mxu0 0.0
      %1984 = vmatpush1.msra.mxu0 0.0
      %1985 = vmatprep.subr.mxu0 0.0
      %1986 = vmatpush1.msra.mxu0 0.0
      %1987 = vmatprep.subr.mxu0 0.0
      %1988 = vmatpush1.msra.mxu0 0.0
      %1989 = vmatprep.subr.mxu0 0.0
      %1990 = vmatpush1.msra.mxu0 0.0
      %1991 = vmatprep.subr.mxu0 0.0
      %1992 = vmatpush1.msra.mxu0 0.0
      %1993 = vmatprep.subr.mxu0 0.0
      %1994 = vmatpush1.msra.mxu0 0.0
      %1995 = vmatprep.subr.mxu0 0.0
      %1996 = vmatpush1.msra.mxu0 0.0
      %1997 = vmatprep.subr.mxu0 0.0
      %1998 = vmatpush1.msra.mxu0 0.0
      %1999 = vmatprep.subr.mxu0 0.0
      %2000 = vmatpush1.msra.mxu0 0.0
      %2001 = vmatprep.subr.mxu0 0.0
      %2002 = vmatpush1.msra.mxu0 0.0
      %2003 = vmatprep.subr.mxu0 0.0
      %2004 = vmatpush1.msra.mxu0 %v1946
      %2005 = vmatprep.subr.mxu0 0.0
      %2006 = vmatpush1.msra.mxu0 %v1945
      %2007 = vmatprep.subr.mxu0 0.0
      %2008 = vmatpush1.msra.mxu0 %v1944
      %2009 = vmatprep.subr.mxu0 0.0
      %2010 = vmatpush1.msra.mxu0 %v1943
      %2011 = vmatprep.subr.mxu0 0.0
      %2012 = vmatpush2.msra.mxu0 0.0
      %2013 = vmatprep.subr.mxu0 0.0
      %2014 = vmatpush2.msra.mxu0 0.0
      %2015 = vmatprep.subr.mxu0 0.0
      %2016 = vmatpush2.msra.mxu0 0.0
      %2017 = vmatprep.subr.mxu0 0.0
      %2018 = vmatpush2.msra.mxu0 0.0
      %2019 = vmatprep.subr.mxu0 0.0
      %2020 = vmatpush2.msra.mxu0 0.0
      %2021 = vmatprep.subr.mxu0 0.0
      %2022 = vmatpush2.msra.mxu0 0.0
      %2023 = vmatprep.subr.mxu0 0.0
      %2024 = vmatpush2.msra.mxu0 0.0
      %2025 = vmatprep.subr.mxu0 0.0
      %2026 = vmatpush2.msra.mxu0 0.0
      %2027 = vmatprep.subr.mxu0 0.0
      %2028 = vmatpush2.msra.mxu0 0.0
      %2029 = vmatprep.subr.mxu0 0.0
      %2030 = vmatpush2.msra.mxu0 0.0
      %2031 = vmatprep.subr.mxu0 0.0
      %2032 = vmatpush2.msra.mxu0 0.0
      %2033 = vmatprep.subr.mxu0 0.0
      %2034 = vmatpush2.msra.mxu0 0.0
      %2035 = vmatprep.subr.mxu0 0.0
      %2036 = vmatpush2.msra.mxu0 0.0
      %2037 = vmatprep.subr.mxu0 0.0
      %2038 = vmatpush2.msra.mxu0 0.0
      %2039 = vmatprep.subr.mxu0 0.0
      %2040 = vmatpush2.msra.mxu0 0.0
      %2041 = vmatprep.subr.mxu0 0.0
      %2042 = vmatpush2.msra.mxu0 0.0
      %2043 = vmatprep.mubr.f32.mxu0 0.0
      %2044 = vmatmul.mubr.f32.gmra.mxu0 %v1947
      %v2045 = vpop.f32.mrf.mxu0
      %v2046 = vadd.f32 0.0, %v2045
      %v2047 = vpop.f32.mrf.mxu0
      %2048 = vmatprep.mubr.f32.mxu0 0.0
      %2049 = vmatmul.mubr.f32.gmra.mxu0 %v1949
      %v2050 = vpop.f32.mrf.mxu0
      %v2051 = vadd.f32 0.0, %v2050
      %v2052 = vpop.f32.mrf.mxu0
      %2053 = vmatprep.mubr.f32.mxu0 0.0
      %2054 = vmatmul.mubr.f32.gmra.mxu0 %v1951
      %v2055 = vpop.f32.mrf.mxu0
      %v2056 = vadd.f32 0.0, %v2055
      %v2057 = vpop.f32.mrf.mxu0
      %2058 = vmatprep.mubr.f32.mxu0 0.0
      %2059 = vmatmul.mubr.f32.gmra.mxu0 %v1953
      %v2060 = vpop.f32.mrf.mxu0
      %v2061 = vadd.f32 0.0, %v2060
      %v2062 = vpop.f32.mrf.mxu0
      %2063 = vmatprep.mubr.f32.mxu0 0.0
      %2064 = vmatmul.mubr.f32.gmra.mxu0 %v1955
      %v2065 = vpop.f32.mrf.mxu0
      %v2066 = vadd.f32 0.0, %v2065
      %v2067 = vpop.f32.mrf.mxu0
      %2068 = vmatprep.mubr.f32.mxu0 0.0
      %2069 = vmatmul.mubr.f32.gmra.mxu0 %v1957
      %v2070 = vpop.f32.mrf.mxu0
      %v2071 = vadd.f32 0.0, %v2070
      %v2072 = vpop.f32.mrf.mxu0
      %2073 = vmatprep.mubr.f32.mxu0 0.0
      %2074 = vmatmul.mubr.f32.gmra.mxu0 %v1959
      %v2075 = vpop.f32.mrf.mxu0
      %v2076 = vadd.f32 0.0, %v2075
      %v2077 = vpop.f32.mrf.mxu0
      %2078 = vmatprep.mubr.f32.mxu0 0.0
      %2079 = vmatmul.mubr.f32.gmra.mxu0 %v1961
      %v2080 = vpop.f32.mrf.mxu0
      %v2081 = vadd.f32 0.0, %v2080
      %v2082 = vpop.f32.mrf.mxu0
      %2083 = vmatprep.mubr.f32.mxu0 0.0
      %2084 = vmatmul.mubr.f32.gmra.mxu0 %v1963
      %v2085 = vpop.f32.mrf.mxu0
      %v2086 = vadd.f32 0.0, %v2085
      %v2087 = vpop.f32.mrf.mxu0
      %2088 = vmatprep.mubr.f32.mxu0 0.0
      %2089 = vmatmul.mubr.f32.gmra.mxu0 %v1965
      %v2090 = vpop.f32.mrf.mxu0
      %v2091 = vadd.f32 0.0, %v2090
      %v2092 = vpop.f32.mrf.mxu0
      %2093 = vmatprep.mubr.f32.mxu0 0.0
      %2094 = vmatmul.mubr.f32.gmra.mxu0 %v1967
      %v2095 = vpop.f32.mrf.mxu0
      %v2096 = vadd.f32 0.0, %v2095
      %v2097 = vpop.f32.mrf.mxu0
      %2098 = vmatprep.mubr.f32.mxu0 0.0
      %2099 = vmatmul.mubr.f32.gmra.mxu0 %v1969
      %v2100 = vpop.f32.mrf.mxu0
      %v2101 = vadd.f32 0.0, %v2100
      %v2102 = vpop.f32.mrf.mxu0
      %2103 = vmatprep.mubr.f32.mxu0 0.0
      %2104 = vmatmul.mubr.f32.gmra.mxu0 %v1971
      %v2105 = vpop.f32.mrf.mxu0
      %v2106 = vadd.f32 0.0, %v2105
      %v2107 = vpop.f32.mrf.mxu0
      %2108 = vmatprep.mubr.f32.mxu0 0.0
      %2109 = vmatmul.mubr.f32.gmra.mxu0 %v1973
      %v2110 = vpop.f32.mrf.mxu0
      %v2111 = vadd.f32 0.0, %v2110
      %v2112 = vpop.f32.mrf.mxu0
      %2113 = vmatprep.mubr.f32.mxu0 0.0
      %2114 = vmatmul.mubr.f32.gmra.mxu0 %v1975
      %v2115 = vpop.f32.mrf.mxu0
      %v2116 = vadd.f32 0.0, %v2115
      %v2117 = vpop.f32.mrf.mxu0
      %2118 = vmatprep.mubr.f32.mxu0 0.0
      %2119 = vmatmul.mubr.f32.gmra.mxu0 %v1977
      %v2120 = vpop.f32.mrf.mxu0
      %v2121 = vadd.f32 0.0, %v2120
      %v2122 = vpop.f32.mrf.mxu0
      %2123 = vdwg.mxu0
      %v2124 = vadd.f32 %v1825, %v2046
      %v2125 = vadd.f32 %v1830, %v2051
      %v2126 = vadd.f32 %v1835, %v2056
      %v2127 = vadd.f32 %v1840, %v2061
      %v2128 = vadd.f32 %v1845, %v2066
      %v2129 = vadd.f32 %v1850, %v2071
      %v2130 = vadd.f32 %v1855, %v2076
      %v2131 = vadd.f32 %v1860, %v2081
      %v2132 = vadd.f32 %v1865, %v2086
      %v2133 = vadd.f32 %v1870, %v2091
      %v2134 = vadd.f32 %v1875, %v2096
      %v2135 = vadd.f32 %v1880, %v2101
      %v2136 = vadd.f32 %v1885, %v2106
      %v2137 = vadd.f32 %v1890, %v2111
      %v2138 = vadd.f32 %v1895, %v2116
      %v2139 = vadd.f32 %v1900, %v2121
      %v2140 = vrot.slane %v1468, 3
      %v2141 = vrot.slane %v1430, 3
      %v2142 = vsel %vm902, %v2140, %v2141
      %v2143 = vrot.slane %v1476, 3
      %v2144 = vsel %vm902, %v2141, %v2143
      %v2145 = vrot.slane %v1469, 3
      %v2146 = vrot.slane %v1433, 3
      %v2147 = vsel %vm902, %v2145, %v2146
      %v2148 = vrot.slane %v1477, 3
      %v2149 = vsel %vm902, %v2146, %v2148
      %v2150 = vrot.slane %v1470, 3
      %v2151 = vrot.slane %v1436, 3
      %v2152 = vsel %vm902, %v2150, %v2151
      %v2153 = vrot.slane %v1478, 3
      %v2154 = vsel %vm902, %v2151, %v2153
      %v2155 = vrot.slane %v1471, 3
      %v2156 = vrot.slane %v1439, 3
      %v2157 = vsel %vm902, %v2155, %v2156
      %v2158 = vrot.slane %v1479, 3
      %v2159 = vsel %vm902, %v2156, %v2158
      %v2160 = vrot.slane %v1472, 3
      %v2161 = vrot.slane %v1442, 3
      %v2162 = vsel %vm902, %v2160, %v2161
      %v2163 = vrot.slane %v1480, 3
      %v2164 = vsel %vm902, %v2161, %v2163
      %v2165 = vrot.slane %v1473, 3
      %v2166 = vrot.slane %v1445, 3
      %v2167 = vsel %vm902, %v2165, %v2166
      %v2168 = vrot.slane %v1481, 3
      %v2169 = vsel %vm902, %v2166, %v2168
      %v2170 = vrot.slane %v1474, 3
      %v2171 = vrot.slane %v1448, 3
      %v2172 = vsel %vm902, %v2170, %v2171
      %v2173 = vrot.slane %v1482, 3
      %v2174 = vsel %vm902, %v2171, %v2173
      %v2175 = vrot.slane %v1475, 3
      %v2176 = vrot.slane %v1451, 3
      %v2177 = vsel %vm902, %v2175, %v2176
      %v2178 = vrot.slane %v1483, 3
      %v2179 = vsel %vm902, %v2176, %v2178
      %v2180 = vld [vmem:[%s2 + $0xb0] sm:$0xff]
      %v2181 = vld [vmem:[%s2 + $0xb8] sm:$0xff]
      %v2182 = vld [vmem:[%s2 + $0xc0] sm:$0xff]
      %v2183 = vld [vmem:[%s2 + $0xc8] sm:$0xff]
      %v2184 = vsel %vm1548, %v2142, 0
      %v2186 = vsel %vm1548, %v2144, 0
      %v2188 = vsel %vm1548, %v2147, 0
      %v2190 = vsel %vm1548, %v2149, 0
      %v2192 = vsel %vm1548, %v2152, 0
      %v2194 = vsel %vm1548, %v2154, 0
      %v2196 = vsel %vm1548, %v2157, 0
      %v2198 = vsel %vm1548, %v2159, 0
      %v2200 = vsel %vm1548, %v2162, 0
      %v2202 = vsel %vm1548, %v2164, 0
      %v2204 = vsel %vm1548, %v2167, 0
      %v2206 = vsel %vm1548, %v2169, 0
      %v2208 = vsel %vm1548, %v2172, 0
      %v2210 = vsel %vm1548, %v2174, 0
      %v2212 = vsel %vm1548, %v2177, 0
      %v2214 = vsel %vm1548, %v2179, 0
      %2216 = vmatprep.subr.mxu0 0.0
      %2217 = vmatpush1.msra.mxu0 0.0
      %2218 = vmatprep.subr.mxu0 0.0
      %2219 = vmatpush1.msra.mxu0 0.0
      %2220 = vmatprep.subr.mxu0 0.0
      %2221 = vmatpush1.msra.mxu0 0.0
      %2222 = vmatprep.subr.mxu0 0.0
      %2223 = vmatpush1.msra.mxu0 0.0
      %2224 = vmatprep.subr.mxu0 0.0
      %2225 = vmatpush1.msra.mxu0 0.0
      %2226 = vmatprep.subr.mxu0 0.0
      %2227 = vmatpush1.msra.mxu0 0.0
      %2228 = vmatprep.subr.mxu0 0.0
      %2229 = vmatpush1.msra.mxu0 0.0
      %2230 = vmatprep.subr.mxu0 0.0
      %2231 = vmatpush1.msra.mxu0 0.0
      %2232 = vmatprep.subr.mxu0 0.0
      %2233 = vmatpush1.msra.mxu0 0.0
      %2234 = vmatprep.subr.mxu0 0.0
      %2235 = vmatpush1.msra.mxu0 0.0
      %2236 = vmatprep.subr.mxu0 0.0
      %2237 = vmatpush1.msra.mxu0 0.0
      %2238 = vmatprep.subr.mxu0 0.0
      %2239 = vmatpush1.msra.mxu0 0.0
      %2240 = vmatprep.subr.mxu0 0.0
      %2241 = vmatpush1.msra.mxu0 %v2183
      %2242 = vmatprep.subr.mxu0 0.0
      %2243 = vmatpush1.msra.mxu0 %v2182
      %2244 = vmatprep.subr.mxu0 0.0
      %2245 = vmatpush1.msra.mxu0 %v2181
      %2246 = vmatprep.subr.mxu0 0.0
      %2247 = vmatpush1.msra.mxu0 %v2180
      %2248 = vmatprep.subr.mxu0 0.0
      %2249 = vmatpush2.msra.mxu0 0.0
      %2250 = vmatprep.subr.mxu0 0.0
      %2251 = vmatpush2.msra.mxu0 0.0
      %2252 = vmatprep.subr.mxu0 0.0
      %2253 = vmatpush2.msra.mxu0 0.0
      %2254 = vmatprep.subr.mxu0 0.0
      %2255 = vmatpush2.msra.mxu0 0.0
      %2256 = vmatprep.subr.mxu0 0.0
      %2257 = vmatpush2.msra.mxu0 0.0
      %2258 = vmatprep.subr.mxu0 0.0
      %2259 = vmatpush2.msra.mxu0 0.0
      %2260 = vmatprep.subr.mxu0 0.0
      %2261 = vmatpush2.msra.mxu0 0.0
      %2262 = vmatprep.subr.mxu0 0.0
      %2263 = vmatpush2.msra.mxu0 0.0
      %2264 = vmatprep.subr.mxu0 0.0
      %2265 = vmatpush2.msra.mxu0 0.0
      %2266 = vmatprep.subr.mxu0 0.0
      %2267 = vmatpush2.msra.mxu0 0.0
      %2268 = vmatprep.subr.mxu0 0.0
      %2269 = vmatpush2.msra.mxu0 0.0
      %2270 = vmatprep.subr.mxu0 0.0
      %2271 = vmatpush2.msra.mxu0 0.0
      %2272 = vmatprep.subr.mxu0 0.0
      %2273 = vmatpush2.msra.mxu0 0.0
      %2274 = vmatprep.subr.mxu0 0.0
      %2275 = vmatpush2.msra.mxu0 0.0
      %2276 = vmatprep.subr.mxu0 0.0
      %2277 = vmatpush2.msra.mxu0 0.0
      %2278 = vmatprep.subr.mxu0 0.0
      %2279 = vmatpush2.msra.mxu0 0.0
      %2280 = vmatprep.mubr.f32.mxu0 0.0
      %2281 = vmatmul.mubr.f32.gmra.mxu0 %v2184
      %v2282 = vpop.f32.mrf.mxu0
      %v2283 = vadd.f32 0.0, %v2282
      %v2284 = vpop.f32.mrf.mxu0
      %2285 = vmatprep.mubr.f32.mxu0 0.0
      %2286 = vmatmul.mubr.f32.gmra.mxu0 %v2186
      %v2287 = vpop.f32.mrf.mxu0
      %v2288 = vadd.f32 0.0, %v2287
      %v2289 = vpop.f32.mrf.mxu0
      %2290 = vmatprep.mubr.f32.mxu0 0.0
      %2291 = vmatmul.mubr.f32.gmra.mxu0 %v2188
      %v2292 = vpop.f32.mrf.mxu0
      %v2293 = vadd.f32 0.0, %v2292
      %v2294 = vpop.f32.mrf.mxu0
      %2295 = vmatprep.mubr.f32.mxu0 0.0
      %2296 = vmatmul.mubr.f32.gmra.mxu0 %v2190
      %v2297 = vpop.f32.mrf.mxu0
      %v2298 = vadd.f32 0.0, %v2297
      %v2299 = vpop.f32.mrf.mxu0
      %2300 = vmatprep.mubr.f32.mxu0 0.0
      %2301 = vmatmul.mubr.f32.gmra.mxu0 %v2192
      %v2302 = vpop.f32.mrf.mxu0
      %v2303 = vadd.f32 0.0, %v2302
      %v2304 = vpop.f32.mrf.mxu0
      %2305 = vmatprep.mubr.f32.mxu0 0.0
      %2306 = vmatmul.mubr.f32.gmra.mxu0 %v2194
      %v2307 = vpop.f32.mrf.mxu0
      %v2308 = vadd.f32 0.0, %v2307
      %v2309 = vpop.f32.mrf.mxu0
      %2310 = vmatprep.mubr.f32.mxu0 0.0
      %2311 = vmatmul.mubr.f32.gmra.mxu0 %v2196
      %v2312 = vpop.f32.mrf.mxu0
      %v2313 = vadd.f32 0.0, %v2312
      %v2314 = vpop.f32.mrf.mxu0
      %2315 = vmatprep.mubr.f32.mxu0 0.0
      %2316 = vmatmul.mubr.f32.gmra.mxu0 %v2198
      %v2317 = vpop.f32.mrf.mxu0
      %v2318 = vadd.f32 0.0, %v2317
      %v2319 = vpop.f32.mrf.mxu0
      %2320 = vmatprep.mubr.f32.mxu0 0.0
      %2321 = vmatmul.mubr.f32.gmra.mxu0 %v2200
      %v2322 = vpop.f32.mrf.mxu0
      %v2323 = vadd.f32 0.0, %v2322
      %v2324 = vpop.f32.mrf.mxu0
      %2325 = vmatprep.mubr.f32.mxu0 0.0
      %2326 = vmatmul.mubr.f32.gmra.mxu0 %v2202
      %v2327 = vpop.f32.mrf.mxu0
      %v2328 = vadd.f32 0.0, %v2327
      %v2329 = vpop.f32.mrf.mxu0
      %2330 = vmatprep.mubr.f32.mxu0 0.0
      %2331 = vmatmul.mubr.f32.gmra.mxu0 %v2204
      %v2332 = vpop.f32.mrf.mxu0
      %v2333 = vadd.f32 0.0, %v2332
      %v2334 = vpop.f32.mrf.mxu0
      %2335 = vmatprep.mubr.f32.mxu0 0.0
      %2336 = vmatmul.mubr.f32.gmra.mxu0 %v2206
      %v2337 = vpop.f32.mrf.mxu0
      %v2338 = vadd.f32 0.0, %v2337
      %v2339 = vpop.f32.mrf.mxu0
      %2340 = vmatprep.mubr.f32.mxu0 0.0
      %2341 = vmatmul.mubr.f32.gmra.mxu0 %v2208
      %v2342 = vpop.f32.mrf.mxu0
      %v2343 = vadd.f32 0.0, %v2342
      %v2344 = vpop.f32.mrf.mxu0
      %2345 = vmatprep.mubr.f32.mxu0 0.0
      %2346 = vmatmul.mubr.f32.gmra.mxu0 %v2210
      %v2347 = vpop.f32.mrf.mxu0
      %v2348 = vadd.f32 0.0, %v2347
      %v2349 = vpop.f32.mrf.mxu0
      %2350 = vmatprep.mubr.f32.mxu0 0.0
      %2351 = vmatmul.mubr.f32.gmra.mxu0 %v2212
      %v2352 = vpop.f32.mrf.mxu0
      %v2353 = vadd.f32 0.0, %v2352
      %v2354 = vpop.f32.mrf.mxu0
      %2355 = vmatprep.mubr.f32.mxu0 0.0
      %2356 = vmatmul.mubr.f32.gmra.mxu0 %v2214
      %v2357 = vpop.f32.mrf.mxu0
      %v2358 = vadd.f32 0.0, %v2357
      %v2359 = vpop.f32.mrf.mxu0
      %2360 = vdwg.mxu0
      %v2361 = vadd.f32 %v2124, %v2283
      %v2362 = vadd.f32 %v2125, %v2288
      %v2363 = vadd.f32 %v2126, %v2293
      %v2364 = vadd.f32 %v2127, %v2298
      %v2365 = vadd.f32 %v2128, %v2303
      %v2366 = vadd.f32 %v2129, %v2308
      %v2367 = vadd.f32 %v2130, %v2313
      %v2368 = vadd.f32 %v2131, %v2318
      %v2369 = vadd.f32 %v2132, %v2323
      %v2370 = vadd.f32 %v2133, %v2328
      %v2371 = vadd.f32 %v2134, %v2333
      %v2372 = vadd.f32 %v2135, %v2338
      %v2373 = vadd.f32 %v2136, %v2343
      %v2374 = vadd.f32 %v2137, %v2348
      %v2375 = vadd.f32 %v2138, %v2353
      %v2376 = vadd.f32 %v2139, %v2358
      %v2377 = vrot.slane %v1468, 4
      %v2378 = vrot.slane %v1430, 4
      %v2379 = vsel %vm1138, %v2377, %v2378
      %v2380 = vrot.slane %v1476, 4
      %v2381 = vsel %vm1138, %v2378, %v2380
      %v2382 = vrot.slane %v1469, 4
      %v2383 = vrot.slane %v1433, 4
      %v2384 = vsel %vm1138, %v2382, %v2383
      %v2385 = vrot.slane %v1477, 4
      %v2386 = vsel %vm1138, %v2383, %v2385
      %v2387 = vrot.slane %v1470, 4
      %v2388 = vrot.slane %v1436, 4
      %v2389 = vsel %vm1138, %v2387, %v2388
      %v2390 = vrot.slane %v1478, 4
      %v2391 = vsel %vm1138, %v2388, %v2390
      %v2392 = vrot.slane %v1471, 4
      %v2393 = vrot.slane %v1439, 4
      %v2394 = vsel %vm1138, %v2392, %v2393
      %v2395 = vrot.slane %v1479, 4
      %v2396 = vsel %vm1138, %v2393, %v2395
      %v2397 = vrot.slane %v1472, 4
      %v2398 = vrot.slane %v1442, 4
      %v2399 = vsel %vm1138, %v2397, %v2398
      %v2400 = vrot.slane %v1480, 4
      %v2401 = vsel %vm1138, %v2398, %v2400
      %v2402 = vrot.slane %v1473, 4
      %v2403 = vrot.slane %v1445, 4
      %v2404 = vsel %vm1138, %v2402, %v2403
      %v2405 = vrot.slane %v1481, 4
      %v2406 = vsel %vm1138, %v2403, %v2405
      %v2407 = vrot.slane %v1474, 4
      %v2408 = vrot.slane %v1448, 4
      %v2409 = vsel %vm1138, %v2407, %v2408
      %v2410 = vrot.slane %v1482, 4
      %v2411 = vsel %vm1138, %v2408, %v2410
      %v2412 = vrot.slane %v1475, 4
      %v2413 = vrot.slane %v1451, 4
      %v2414 = vsel %vm1138, %v2412, %v2413
      %v2415 = vrot.slane %v1483, 4
      %v2416 = vsel %vm1138, %v2413, %v2415
      %v2417 = vld [vmem:[%s2 + $0xd0] sm:$0xff]
      %v2418 = vld [vmem:[%s2 + $0xd8] sm:$0xff]
      %v2419 = vld [vmem:[%s2 + $0xe0] sm:$0xff]
      %v2420 = vld [vmem:[%s2 + $0xe8] sm:$0xff]
      %v2421 = vsel %vm1548, %v2379, 0
      %v2423 = vsel %vm1548, %v2381, 0
      %v2425 = vsel %vm1548, %v2384, 0
      %v2427 = vsel %vm1548, %v2386, 0
      %v2429 = vsel %vm1548, %v2389, 0
      %v2431 = vsel %vm1548, %v2391, 0
      %v2433 = vsel %vm1548, %v2394, 0
      %v2435 = vsel %vm1548, %v2396, 0
      %v2437 = vsel %vm1548, %v2399, 0
      %v2439 = vsel %vm1548, %v2401, 0
      %v2441 = vsel %vm1548, %v2404, 0
      %v2443 = vsel %vm1548, %v2406, 0
      %v2445 = vsel %vm1548, %v2409, 0
      %v2447 = vsel %vm1548, %v2411, 0
      %v2449 = vsel %vm1548, %v2414, 0
      %v2451 = vsel %vm1548, %v2416, 0
      %2453 = vmatprep.subr.mxu0 0.0
      %2454 = vmatpush1.msra.mxu0 0.0
      %2455 = vmatprep.subr.mxu0 0.0
      %2456 = vmatpush1.msra.mxu0 0.0
      %2457 = vmatprep.subr.mxu0 0.0
      %2458 = vmatpush1.msra.mxu0 0.0
      %2459 = vmatprep.subr.mxu0 0.0
      %2460 = vmatpush1.msra.mxu0 0.0
      %2461 = vmatprep.subr.mxu0 0.0
      %2462 = vmatpush1.msra.mxu0 0.0
      %2463 = vmatprep.subr.mxu0 0.0
      %2464 = vmatpush1.msra.mxu0 0.0
      %2465 = vmatprep.subr.mxu0 0.0
      %2466 = vmatpush1.msra.mxu0 0.0
      %2467 = vmatprep.subr.mxu0 0.0
      %2468 = vmatpush1.msra.mxu0 0.0
      %2469 = vmatprep.subr.mxu0 0.0
      %2470 = vmatpush1.msra.mxu0 0.0
      %2471 = vmatprep.subr.mxu0 0.0
      %2472 = vmatpush1.msra.mxu0 0.0
      %2473 = vmatprep.subr.mxu0 0.0
      %2474 = vmatpush1.msra.mxu0 0.0
      %2475 = vmatprep.subr.mxu0 0.0
      %2476 = vmatpush1.msra.mxu0 0.0
      %2477 = vmatprep.subr.mxu0 0.0
      %2478 = vmatpush1.msra.mxu0 %v2420
      %2479 = vmatprep.subr.mxu0 0.0
      %2480 = vmatpush1.msra.mxu0 %v2419
      %2481 = vmatprep.subr.mxu0 0.0
      %2482 = vmatpush1.msra.mxu0 %v2418
      %2483 = vmatprep.subr.mxu0 0.0
      %2484 = vmatpush1.msra.mxu0 %v2417
      %2485 = vmatprep.subr.mxu0 0.0
      %2486 = vmatpush2.msra.mxu0 0.0
      %2487 = vmatprep.subr.mxu0 0.0
      %2488 = vmatpush2.msra.mxu0 0.0
      %2489 = vmatprep.subr.mxu0 0.0
      %2490 = vmatpush2.msra.mxu0 0.0
      %2491 = vmatprep.subr.mxu0 0.0
      %2492 = vmatpush2.msra.mxu0 0.0
      %2493 = vmatprep.subr.mxu0 0.0
      %2494 = vmatpush2.msra.mxu0 0.0
      %2495 = vmatprep.subr.mxu0 0.0
      %2496 = vmatpush2.msra.mxu0 0.0
      %2497 = vmatprep.subr.mxu0 0.0
      %2498 = vmatpush2.msra.mxu0 0.0
      %2499 = vmatprep.subr.mxu0 0.0
      %2500 = vmatpush2.msra.mxu0 0.0
      %2501 = vmatprep.subr.mxu0 0.0
      %2502 = vmatpush2.msra.mxu0 0.0
      %2503 = vmatprep.subr.mxu0 0.0
      %2504 = vmatpush2.msra.mxu0 0.0
      %2505 = vmatprep.subr.mxu0 0.0
      %2506 = vmatpush2.msra.mxu0 0.0
      %2507 = vmatprep.subr.mxu0 0.0
      %2508 = vmatpush2.msra.mxu0 0.0
      %2509 = vmatprep.subr.mxu0 0.0
      %2510 = vmatpush2.msra.mxu0 0.0
      %2511 = vmatprep.subr.mxu0 0.0
      %2512 = vmatpush2.msra.mxu0 0.0
      %2513 = vmatprep.subr.mxu0 0.0
      %2514 = vmatpush2.msra.mxu0 0.0
      %2515 = vmatprep.subr.mxu0 0.0
      %2516 = vmatpush2.msra.mxu0 0.0
      %2517 = vmatprep.mubr.f32.mxu0 0.0
      %2518 = vmatmul.mubr.f32.gmra.mxu0 %v2421
      %v2519 = vpop.f32.mrf.mxu0
      %v2520 = vadd.f32 0.0, %v2519
      %v2521 = vpop.f32.mrf.mxu0
      %2522 = vmatprep.mubr.f32.mxu0 0.0
      %2523 = vmatmul.mubr.f32.gmra.mxu0 %v2423
      %v2524 = vpop.f32.mrf.mxu0
      %v2525 = vadd.f32 0.0, %v2524
      %v2526 = vpop.f32.mrf.mxu0
      %2527 = vmatprep.mubr.f32.mxu0 0.0
      %2528 = vmatmul.mubr.f32.gmra.mxu0 %v2425
      %v2529 = vpop.f32.mrf.mxu0
      %v2530 = vadd.f32 0.0, %v2529
      %v2531 = vpop.f32.mrf.mxu0
      %2532 = vmatprep.mubr.f32.mxu0 0.0
      %2533 = vmatmul.mubr.f32.gmra.mxu0 %v2427
      %v2534 = vpop.f32.mrf.mxu0
      %v2535 = vadd.f32 0.0, %v2534
      %v2536 = vpop.f32.mrf.mxu0
      %2537 = vmatprep.mubr.f32.mxu0 0.0
      %2538 = vmatmul.mubr.f32.gmra.mxu0 %v2429
      %v2539 = vpop.f32.mrf.mxu0
      %v2540 = vadd.f32 0.0, %v2539
      %v2541 = vpop.f32.mrf.mxu0
      %2542 = vmatprep.mubr.f32.mxu0 0.0
      %2543 = vmatmul.mubr.f32.gmra.mxu0 %v2431
      %v2544 = vpop.f32.mrf.mxu0
      %v2545 = vadd.f32 0.0, %v2544
      %v2546 = vpop.f32.mrf.mxu0
      %2547 = vmatprep.mubr.f32.mxu0 0.0
      %2548 = vmatmul.mubr.f32.gmra.mxu0 %v2433
      %v2549 = vpop.f32.mrf.mxu0
      %v2550 = vadd.f32 0.0, %v2549
      %v2551 = vpop.f32.mrf.mxu0
      %2552 = vmatprep.mubr.f32.mxu0 0.0
      %2553 = vmatmul.mubr.f32.gmra.mxu0 %v2435
      %v2554 = vpop.f32.mrf.mxu0
      %v2555 = vadd.f32 0.0, %v2554
      %v2556 = vpop.f32.mrf.mxu0
      %2557 = vmatprep.mubr.f32.mxu0 0.0
      %2558 = vmatmul.mubr.f32.gmra.mxu0 %v2437
      %v2559 = vpop.f32.mrf.mxu0
      %v2560 = vadd.f32 0.0, %v2559
      %v2561 = vpop.f32.mrf.mxu0
      %2562 = vmatprep.mubr.f32.mxu0 0.0
      %2563 = vmatmul.mubr.f32.gmra.mxu0 %v2439
      %v2564 = vpop.f32.mrf.mxu0
      %v2565 = vadd.f32 0.0, %v2564
      %v2566 = vpop.f32.mrf.mxu0
      %2567 = vmatprep.mubr.f32.mxu0 0.0
      %2568 = vmatmul.mubr.f32.gmra.mxu0 %v2441
      %v2569 = vpop.f32.mrf.mxu0
      %v2570 = vadd.f32 0.0, %v2569
      %v2571 = vpop.f32.mrf.mxu0
      %2572 = vmatprep.mubr.f32.mxu0 0.0
      %2573 = vmatmul.mubr.f32.gmra.mxu0 %v2443
      %v2574 = vpop.f32.mrf.mxu0
      %v2575 = vadd.f32 0.0, %v2574
      %v2576 = vpop.f32.mrf.mxu0
      %2577 = vmatprep.mubr.f32.mxu0 0.0
      %2578 = vmatmul.mubr.f32.gmra.mxu0 %v2445
      %v2579 = vpop.f32.mrf.mxu0
      %v2580 = vadd.f32 0.0, %v2579
      %v2581 = vpop.f32.mrf.mxu0
      %2582 = vmatprep.mubr.f32.mxu0 0.0
      %2583 = vmatmul.mubr.f32.gmra.mxu0 %v2447
      %v2584 = vpop.f32.mrf.mxu0
      %v2585 = vadd.f32 0.0, %v2584
      %v2586 = vpop.f32.mrf.mxu0
      %2587 = vmatprep.mubr.f32.mxu0 0.0
      %2588 = vmatmul.mubr.f32.gmra.mxu0 %v2449
      %v2589 = vpop.f32.mrf.mxu0
      %v2590 = vadd.f32 0.0, %v2589
      %v2591 = vpop.f32.mrf.mxu0
      %2592 = vmatprep.mubr.f32.mxu0 0.0
      %2593 = vmatmul.mubr.f32.gmra.mxu0 %v2451
      %v2594 = vpop.f32.mrf.mxu0
      %v2595 = vadd.f32 0.0, %v2594
      %v2596 = vpop.f32.mrf.mxu0
      %2597 = vdwg.mxu0
      %v2598 = vadd.f32 %v2361, %v2520
      %v2599 = vadd.f32 %v2362, %v2525
      %v2600 = vadd.f32 %v2363, %v2530
      %v2601 = vadd.f32 %v2364, %v2535
      %v2602 = vadd.f32 %v2365, %v2540
      %v2603 = vadd.f32 %v2366, %v2545
      %v2604 = vadd.f32 %v2367, %v2550
      %v2605 = vadd.f32 %v2368, %v2555
      %v2606 = vadd.f32 %v2369, %v2560
      %v2607 = vadd.f32 %v2370, %v2565
      %v2608 = vadd.f32 %v2371, %v2570
      %v2609 = vadd.f32 %v2372, %v2575
      %v2610 = vadd.f32 %v2373, %v2580
      %v2611 = vadd.f32 %v2374, %v2585
      %v2612 = vadd.f32 %v2375, %v2590
      %v2613 = vadd.f32 %v2376, %v2595
      %v2614 = vld [vmem:[%s3 + $0x1] sm:$0x1]
      %v2615 = vlaneseq
      %v2616 = vshrl.u32 %v2615, 7
      %v2617 = vsub.s32 0, %v2616
      %v2618 = vrot.slane %v2614, %v2617
      %v2619 = vadd.f32 %v2598, %v2618
      %v2620 = vadd.f32 %v2599, %v2618
      %v2621 = vadd.f32 %v2600, %v2618
      %v2622 = vadd.f32 %v2601, %v2618
      %v2623 = vadd.f32 %v2602, %v2618
      %v2624 = vadd.f32 %v2603, %v2618
      %v2625 = vadd.f32 %v2604, %v2618
      %v2626 = vadd.f32 %v2605, %v2618
      %v2627 = vadd.f32 %v2606, %v2618
      %v2628 = vadd.f32 %v2607, %v2618
      %v2629 = vadd.f32 %v2608, %v2618
      %v2630 = vadd.f32 %v2609, %v2618
      %v2631 = vadd.f32 %v2610, %v2618
      %v2632 = vadd.f32 %v2611, %v2618
      %v2633 = vadd.f32 %v2612, %v2618
      %v2634 = vadd.f32 %v2613, %v2618
      %v2635 = vmax.f32 %v2619, 0.0
      %v2636 = vmax.f32 %v2620, 0.0
      %v2637 = vmax.f32 %v2621, 0.0
      %v2638 = vmax.f32 %v2622, 0.0
      %v2639 = vmax.f32 %v2623, 0.0
      %v2640 = vmax.f32 %v2624, 0.0
      %v2641 = vmax.f32 %v2625, 0.0
      %v2642 = vmax.f32 %v2626, 0.0
      %v2643 = vmax.f32 %v2627, 0.0
      %v2644 = vmax.f32 %v2628, 0.0
      %v2645 = vmax.f32 %v2629, 0.0
      %v2646 = vmax.f32 %v2630, 0.0
      %v2647 = vmax.f32 %v2631, 0.0
      %v2648 = vmax.f32 %v2632, 0.0
      %v2649 = vmax.f32 %v2633, 0.0
      %v2650 = vmax.f32 %v2634, 0.0
      %v2667 = vrot.slane %v2635, 6
      %v2668 = vrot.slane %v2636, 6
      %v2669 = vsel %vm1427, %v2667, %v2668
      %v2670 = vrot.slane %v2637, 6
      %v2671 = vrot.slane %v2638, 6
      %v2672 = vsel %vm1427, %v2670, %v2671
      %v2673 = vrot.slane %v2639, 6
      %v2674 = vrot.slane %v2640, 6
      %v2675 = vsel %vm1427, %v2673, %v2674
      %v2676 = vrot.slane %v2641, 6
      %v2677 = vrot.slane %v2642, 6
      %v2678 = vsel %vm1427, %v2676, %v2677
      %v2679 = vrot.slane %v2643, 6
      %v2680 = vrot.slane %v2644, 6
      %v2681 = vsel %vm1427, %v2679, %v2680
      %v2682 = vrot.slane %v2645, 6
      %v2683 = vrot.slane %v2646, 6
      %v2684 = vsel %vm1427, %v2682, %v2683
      %v2685 = vrot.slane %v2647, 6
      %v2686 = vrot.slane %v2648, 6
      %v2687 = vsel %vm1427, %v2685, %v2686
      %v2688 = vrot.slane %v2649, 6
      %v2689 = vrot.slane %v2650, 6
      %v2690 = vsel %vm1427, %v2688, %v2689
      %v2707 = vsel %vm1427, 0.0, %v2667
      %v2708 = vsel %vm1427, 0.0, %v2670
      %v2709 = vsel %vm1427, 0.0, %v2673
      %v2710 = vsel %vm1427, 0.0, %v2676
      %v2711 = vsel %vm1427, 0.0, %v2679
      %v2712 = vsel %vm1427, 0.0, %v2682
      %v2713 = vsel %vm1427, 0.0, %v2685
      %v2714 = vsel %vm1427, 0.0, %v2688
      %v2715 = vsel %vm1427, %v2668, 0.0
      %v2716 = vsel %vm1427, %v2671, 0.0
      %v2717 = vsel %vm1427, %v2674, 0.0
      %v2718 = vsel %vm1427, %v2677, 0.0
      %v2719 = vsel %vm1427, %v2680, 0.0
      %v2720 = vsel %vm1427, %v2683, 0.0
      %v2721 = vsel %vm1427, %v2686, 0.0
      %v2722 = vsel %vm1427, %v2689, 0.0
      %v2723 = vld [vmem:[%s2 + $0xf0] sm:$0xff]
      %v2724 = vld [vmem:[%s2 + $0xf8] sm:$0xff]
      %v2725 = vld [vmem:[%s2 + $0x100] sm:$0xff]
      %v2726 = vld [vmem:[%s2 + $0x108] sm:$0xff]
      %v2743 = vrot.slane %v2707, 1
      %v2744 = vrot.slane %v2669, 1
      %v2745 = vsel %vm268, %v2743, %v2744
      %v2746 = vrot.slane %v2715, 1
      %v2747 = vsel %vm268, %v2744, %v2746
      %v2748 = vrot.slane %v2708, 1
      %v2749 = vrot.slane %v2672, 1
      %v2750 = vsel %vm268, %v2748, %v2749
      %v2751 = vrot.slane %v2716, 1
      %v2752 = vsel %vm268, %v2749, %v2751
      %v2753 = vrot.slane %v2709, 1
      %v2754 = vrot.slane %v2675, 1
      %v2755 = vsel %vm268, %v2753, %v2754
      %v2756 = vrot.slane %v2717, 1
      %v2757 = vsel %vm268, %v2754, %v2756
      %v2758 = vrot.slane %v2710, 1
      %v2759 = vrot.slane %v2678, 1
      %v2760 = vsel %vm268, %v2758, %v2759
      %v2761 = vrot.slane %v2718, 1
      %v2762 = vsel %vm268, %v2759, %v2761
      %v2763 = vrot.slane %v2711, 1
      %v2764 = vrot.slane %v2681, 1
      %v2765 = vsel %vm268, %v2763, %v2764
      %v2766 = vrot.slane %v2719, 1
      %v2767 = vsel %vm268, %v2764, %v2766
      %v2768 = vrot.slane %v2712, 1
      %v2769 = vrot.slane %v2684, 1
      %v2770 = vsel %vm268, %v2768, %v2769
      %v2771 = vrot.slane %v2720, 1
      %v2772 = vsel %vm268, %v2769, %v2771
      %v2773 = vrot.slane %v2713, 1
      %v2774 = vrot.slane %v2687, 1
      %v2775 = vsel %vm268, %v2773, %v2774
      %v2776 = vrot.slane %v2721, 1
      %v2777 = vsel %vm268, %v2774, %v2776
      %v2778 = vrot.slane %v2714, 1
      %v2779 = vrot.slane %v2690, 1
      %v2780 = vsel %vm268, %v2778, %v2779
      %v2781 = vrot.slane %v2722, 1
      %v2782 = vsel %vm268, %v2779, %v2781
      %v2783 = vld [vmem:[%s2 + $0x110] sm:$0xff]
      %v2784 = vld [vmem:[%s2 + $0x118] sm:$0xff]
      %v2785 = vld [vmem:[%s2 + $0x120] sm:$0xff]
      %v2786 = vld [vmem:[%s2 + $0x128] sm:$0xff]
      %v2787 = vsel %vm1548, %v2745, 0
      %v2789 = vsel %vm1548, %v2747, 0
      %v2791 = vsel %vm1548, %v2750, 0
      %v2793 = vsel %vm1548, %v2752, 0
      %v2795 = vsel %vm1548, %v2755, 0
      %v2797 = vsel %vm1548, %v2757, 0
      %v2799 = vsel %vm1548, %v2760, 0
      %v2801 = vsel %vm1548, %v2762, 0
      %v2803 = vsel %vm1548, %v2765, 0
      %v2805 = vsel %vm1548, %v2767, 0
      %v2807 = vsel %vm1548, %v2770, 0
      %v2809 = vsel %vm1548, %v2772, 0
      %v2811 = vsel %vm1548, %v2775, 0
      %v2813 = vsel %vm1548, %v2777, 0
      %v2815 = vsel %vm1548, %v2780, 0
      %v2817 = vsel %vm1548, %v2782, 0
      %2819 = vmatprep.subr.mxu0 0.0
      %2820 = vmatpush1.msra.mxu0 0.0
      %2821 = vmatprep.subr.mxu0 0.0
      %2822 = vmatpush1.msra.mxu0 0.0
      %2823 = vmatprep.subr.mxu0 0.0
      %2824 = vmatpush1.msra.mxu0 0.0
      %2825 = vmatprep.subr.mxu0 0.0
      %2826 = vmatpush1.msra.mxu0 0.0
      %2827 = vmatprep.subr.mxu0 0.0
      %2828 = vmatpush1.msra.mxu0 0.0
      %2829 = vmatprep.subr.mxu0 0.0
      %2830 = vmatpush1.msra.mxu0 0.0
      %2831 = vmatprep.subr.mxu0 0.0
      %2832 = vmatpush1.msra.mxu0 0.0
      %2833 = vmatprep.subr.mxu0 0.0
      %2834 = vmatpush1.msra.mxu0 0.0
      %2835 = vmatprep.subr.mxu0 0.0
      %2836 = vmatpush1.msra.mxu0 0.0
      %2837 = vmatprep.subr.mxu0 0.0
      %2838 = vmatpush1.msra.mxu0 0.0
      %2839 = vmatprep.subr.mxu0 0.0
      %2840 = vmatpush1.msra.mxu0 0.0
      %2841 = vmatprep.subr.mxu0 0.0
      %2842 = vmatpush1.msra.mxu0 0.0
      %2843 = vmatprep.subr.mxu0 0.0
      %2844 = vmatpush1.msra.mxu0 %v2786
      %2845 = vmatprep.subr.mxu0 0.0
      %2846 = vmatpush1.msra.mxu0 %v2785
      %2847 = vmatprep.subr.mxu0 0.0
      %2848 = vmatpush1.msra.mxu0 %v2784
      %2849 = vmatprep.subr.mxu0 0.0
      %2850 = vmatpush1.msra.mxu0 %v2783
      %2851 = vmatprep.subr.mxu0 0.0
      %2852 = vmatpush2.msra.mxu0 0.0
      %2853 = vmatprep.subr.mxu0 0.0
      %2854 = vmatpush2.msra.mxu0 0.0
      %2855 = vmatprep.subr.mxu0 0.0
      %2856 = vmatpush2.msra.mxu0 0.0
      %2857 = vmatprep.subr.mxu0 0.0
      %2858 = vmatpush2.msra.mxu0 0.0
      %2859 = vmatprep.subr.mxu0 0.0
      %2860 = vmatpush2.msra.mxu0 0.0
      %2861 = vmatprep.subr.mxu0 0.0
      %2862 = vmatpush2.msra.mxu0 0.0
      %2863 = vmatprep.subr.mxu0 0.0
      %2864 = vmatpush2.msra.mxu0 0.0
      %2865 = vmatprep.subr.mxu0 0.0
      %2866 = vmatpush2.msra.mxu0 0.0
      %2867 = vmatprep.subr.mxu0 0.0
      %2868 = vmatpush2.msra.mxu0 0.0
      %2869 = vmatprep.subr.mxu0 0.0
      %2870 = vmatpush2.msra.mxu0 0.0
      %2871 = vmatprep.subr.mxu0 0.0
      %2872 = vmatpush2.msra.mxu0 0.0
      %2873 = vmatprep.subr.mxu0 0.0
      %2874 = vmatpush2.msra.mxu0 0.0
      %2875 = vmatprep.subr.mxu0 0.0
      %2876 = vmatpush2.msra.mxu0 0.0
      %2877 = vmatprep.subr.mxu0 0.0
      %2878 = vmatpush2.msra.mxu0 0.0
      %2879 = vmatprep.subr.mxu0 0.0
      %2880 = vmatpush2.msra.mxu0 0.0
      %2881 = vmatprep.subr.mxu0 0.0
      %2882 = vmatpush2.msra.mxu0 0.0
      %2883 = vmatprep.mubr.f32.mxu0 0.0
      %2884 = vmatmul.mubr.f32.gmra.mxu0 %v2787
      %v2885 = vpop.f32.mrf.mxu0
      %v2886 = vadd.f32 0.0, %v2885
      %v2887 = vpop.f32.mrf.mxu0
      %2888 = vmatprep.mubr.f32.mxu0 0.0
      %2889 = vmatmul.mubr.f32.gmra.mxu0 %v2789
      %v2890 = vpop.f32.mrf.mxu0
      %v2891 = vadd.f32 0.0, %v2890
      %v2892 = vpop.f32.mrf.mxu0
      %2893 = vmatprep.mubr.f32.mxu0 0.0
      %2894 = vmatmul.mubr.f32.gmra.mxu0 %v2791
      %v2895 = vpop.f32.mrf.mxu0
      %v2896 = vadd.f32 0.0, %v2895
      %v2897 = vpop.f32.mrf.mxu0
      %2898 = vmatprep.mubr.f32.mxu0 0.0
      %2899 = vmatmul.mubr.f32.gmra.mxu0 %v2793
      %v2900 = vpop.f32.mrf.mxu0
      %v2901 = vadd.f32 0.0, %v2900
      %v2902 = vpop.f32.mrf.mxu0
      %2903 = vmatprep.mubr.f32.mxu0 0.0
      %2904 = vmatmul.mubr.f32.gmra.mxu0 %v2795
      %v2905 = vpop.f32.mrf.mxu0
      %v2906 = vadd.f32 0.0, %v2905
      %v2907 = vpop.f32.mrf.mxu0
      %2908 = vmatprep.mubr.f32.mxu0 0.0
      %2909 = vmatmul.mubr.f32.gmra.mxu0 %v2797
      %v2910 = vpop.f32.mrf.mxu0
      %v2911 = vadd.f32 0.0, %v2910
      %v2912 = vpop.f32.mrf.mxu0
      %2913 = vmatprep.mubr.f32.mxu0 0.0
      %2914 = vmatmul.mubr.f32.gmra.mxu0 %v2799
      %v2915 = vpop.f32.mrf.mxu0
      %v2916 = vadd.f32 0.0, %v2915
      %v2917 = vpop.f32.mrf.mxu0
      %2918 = vmatprep.mubr.f32.mxu0 0.0
      %2919 = vmatmul.mubr.f32.gmra.mxu0 %v2801
      %v2920 = vpop.f32.mrf.mxu0
      %v2921 = vadd.f32 0.0, %v2920
      %v2922 = vpop.f32.mrf.mxu0
      %2923 = vmatprep.mubr.f32.mxu0 0.0
      %2924 = vmatmul.mubr.f32.gmra.mxu0 %v2803
      %v2925 = vpop.f32.mrf.mxu0
      %v2926 = vadd.f32 0.0, %v2925
      %v2927 = vpop.f32.mrf.mxu0
      %2928 = vmatprep.mubr.f32.mxu0 0.0
      %2929 = vmatmul.mubr.f32.gmra.mxu0 %v2805
      %v2930 = vpop.f32.mrf.mxu0
      %v2931 = vadd.f32 0.0, %v2930
      %v2932 = vpop.f32.mrf.mxu0
      %2933 = vmatprep.mubr.f32.mxu0 0.0
      %2934 = vmatmul.mubr.f32.gmra.mxu0 %v2807
      %v2935 = vpop.f32.mrf.mxu0
      %v2936 = vadd.f32 0.0, %v2935
      %v2937 = vpop.f32.mrf.mxu0
      %2938 = vmatprep.mubr.f32.mxu0 0.0
      %2939 = vmatmul.mubr.f32.gmra.mxu0 %v2809
      %v2940 = vpop.f32.mrf.mxu0
      %v2941 = vadd.f32 0.0, %v2940
      %v2942 = vpop.f32.mrf.mxu0
      %2943 = vmatprep.mubr.f32.mxu0 0.0
      %2944 = vmatmul.mubr.f32.gmra.mxu0 %v2811
      %v2945 = vpop.f32.mrf.mxu0
      %v2946 = vadd.f32 0.0, %v2945
      %v2947 = vpop.f32.mrf.mxu0
      %2948 = vmatprep.mubr.f32.mxu0 0.0
      %2949 = vmatmul.mubr.f32.gmra.mxu0 %v2813
      %v2950 = vpop.f32.mrf.mxu0
      %v2951 = vadd.f32 0.0, %v2950
      %v2952 = vpop.f32.mrf.mxu0
      %2953 = vmatprep.mubr.f32.mxu0 0.0
      %2954 = vmatmul.mubr.f32.gmra.mxu0 %v2815
      %v2955 = vpop.f32.mrf.mxu0
      %v2956 = vadd.f32 0.0, %v2955
      %v2957 = vpop.f32.mrf.mxu0
      %2958 = vmatprep.mubr.f32.mxu0 0.0
      %2959 = vmatmul.mubr.f32.gmra.mxu0 %v2817
      %v2960 = vpop.f32.mrf.mxu0
      %v2961 = vadd.f32 0.0, %v2960
      %v2962 = vpop.f32.mrf.mxu0
      %2963 = vdwg.mxu0
      %v2964 = vsel %vm1548, %v2707, 0
      %v2966 = vsel %vm1548, %v2669, 0
      %v2968 = vsel %vm1548, %v2708, 0
      %v2970 = vsel %vm1548, %v2672, 0
      %v2972 = vsel %vm1548, %v2709, 0
      %v2974 = vsel %vm1548, %v2675, 0
      %v2976 = vsel %vm1548, %v2710, 0
      %v2978 = vsel %vm1548, %v2678, 0
      %v2980 = vsel %vm1548, %v2711, 0
      %v2982 = vsel %vm1548, %v2681, 0
      %v2984 = vsel %vm1548, %v2712, 0
      %v2986 = vsel %vm1548, %v2684, 0
      %v2988 = vsel %vm1548, %v2713, 0
      %v2990 = vsel %vm1548, %v2687, 0
      %v2992 = vsel %vm1548, %v2714, 0
      %v2994 = vsel %vm1548, %v2690, 0
      %2996 = vmatprep.subr.mxu0 0.0
      %2997 = vmatpush1.msra.mxu0 0.0
      %2998 = vmatprep.subr.mxu0 0.0
      %2999 = vmatpush1.msra.mxu0 0.0
      %3000 = vmatprep.subr.mxu0 0.0
      %3001 = vmatpush1.msra.mxu0 0.0
      %3002 = vmatprep.subr.mxu0 0.0
      %3003 = vmatpush1.msra.mxu0 0.0
      %3004 = vmatprep.subr.mxu0 0.0
      %3005 = vmatpush1.msra.mxu0 0.0
      %3006 = vmatprep.subr.mxu0 0.0
      %3007 = vmatpush1.msra.mxu0 0.0
      %3008 = vmatprep.subr.mxu0 0.0
      %3009 = vmatpush1.msra.mxu0 0.0
      %3010 = vmatprep.subr.mxu0 0.0
      %3011 = vmatpush1.msra.mxu0 0.0
      %3012 = vmatprep.subr.mxu0 0.0
      %3013 = vmatpush1.msra.mxu0 0.0
      %3014 = vmatprep.subr.mxu0 0.0
      %3015 = vmatpush1.msra.mxu0 0.0
      %3016 = vmatprep.subr.mxu0 0.0
      %3017 = vmatpush1.msra.mxu0 0.0
      %3018 = vmatprep.subr.mxu0 0.0
      %3019 = vmatpush1.msra.mxu0 0.0
      %3020 = vmatprep.subr.mxu0 0.0
      %3021 = vmatpush1.msra.mxu0 %v2726
      %3022 = vmatprep.subr.mxu0 0.0
      %3023 = vmatpush1.msra.mxu0 %v2725
      %3024 = vmatprep.subr.mxu0 0.0
      %3025 = vmatpush1.msra.mxu0 %v2724
      %3026 = vmatprep.subr.mxu0 0.0
      %3027 = vmatpush1.msra.mxu0 %v2723
      %3028 = vmatprep.subr.mxu0 0.0
      %3029 = vmatpush2.msra.mxu0 0.0
      %3030 = vmatprep.subr.mxu0 0.0
      %3031 = vmatpush2.msra.mxu0 0.0
      %3032 = vmatprep.subr.mxu0 0.0
      %3033 = vmatpush2.msra.mxu0 0.0
      %3034 = vmatprep.subr.mxu0 0.0
      %3035 = vmatpush2.msra.mxu0 0.0
      %3036 = vmatprep.subr.mxu0 0.0
      %3037 = vmatpush2.msra.mxu0 0.0
      %3038 = vmatprep.subr.mxu0 0.0
      %3039 = vmatpush2.msra.mxu0 0.0
      %3040 = vmatprep.subr.mxu0 0.0
      %3041 = vmatpush2.msra.mxu0 0.0
      %3042 = vmatprep.subr.mxu0 0.0
      %3043 = vmatpush2.msra.mxu0 0.0
      %3044 = vmatprep.subr.mxu0 0.0
      %3045 = vmatpush2.msra.mxu0 0.0
      %3046 = vmatprep.subr.mxu0 0.0
      %3047 = vmatpush2.msra.mxu0 0.0
      %3048 = vmatprep.subr.mxu0 0.0
      %3049 = vmatpush2.msra.mxu0 0.0
      %3050 = vmatprep.subr.mxu0 0.0
      %3051 = vmatpush2.msra.mxu0 0.0
      %3052 = vmatprep.subr.mxu0 0.0
      %3053 = vmatpush2.msra.mxu0 0.0
      %3054 = vmatprep.subr.mxu0 0.0
      %3055 = vmatpush2.msra.mxu0 0.0
      %3056 = vmatprep.subr.mxu0 0.0
      %3057 = vmatpush2.msra.mxu0 0.0
      %3058 = vmatprep.subr.mxu0 0.0
      %3059 = vmatpush2.msra.mxu0 0.0
      %3060 = vmatprep.mubr.f32.mxu0 0.0
      %3061 = vmatmul.mubr.f32.gmra.mxu0 %v2964
      %v3062 = vpop.f32.mrf.mxu0
      %v3063 = vadd.f32 %v2886, %v3062
      %v3064 = vpop.f32.mrf.mxu0
      %3065 = vmatprep.mubr.f32.mxu0 0.0
      %3066 = vmatmul.mubr.f32.gmra.mxu0 %v2966
      %v3067 = vpop.f32.mrf.mxu0
      %v3068 = vadd.f32 %v2891, %v3067
      %v3069 = vpop.f32.mrf.mxu0
      %3070 = vmatprep.mubr.f32.mxu0 0.0
      %3071 = vmatmul.mubr.f32.gmra.mxu0 %v2968
      %v3072 = vpop.f32.mrf.mxu0
      %v3073 = vadd.f32 %v2896, %v3072
      %v3074 = vpop.f32.mrf.mxu0
      %3075 = vmatprep.mubr.f32.mxu0 0.0
      %3076 = vmatmul.mubr.f32.gmra.mxu0 %v2970
      %v3077 = vpop.f32.mrf.mxu0
      %v3078 = vadd.f32 %v2901, %v3077
      %v3079 = vpop.f32.mrf.mxu0
      %3080 = vmatprep.mubr.f32.mxu0 0.0
      %3081 = vmatmul.mubr.f32.gmra.mxu0 %v2972
      %v3082 = vpop.f32.mrf.mxu0
      %v3083 = vadd.f32 %v2906, %v3082
      %v3084 = vpop.f32.mrf.mxu0
      %3085 = vmatprep.mubr.f32.mxu0 0.0
      %3086 = vmatmul.mubr.f32.gmra.mxu0 %v2974
      %v3087 = vpop.f32.mrf.mxu0
      %v3088 = vadd.f32 %v2911, %v3087
      %v3089 = vpop.f32.mrf.mxu0
      %3090 = vmatprep.mubr.f32.mxu0 0.0
      %3091 = vmatmul.mubr.f32.gmra.mxu0 %v2976
      %v3092 = vpop.f32.mrf.mxu0
      %v3093 = vadd.f32 %v2916, %v3092
      %v3094 = vpop.f32.mrf.mxu0
      %3095 = vmatprep.mubr.f32.mxu0 0.0
      %3096 = vmatmul.mubr.f32.gmra.mxu0 %v2978
      %v3097 = vpop.f32.mrf.mxu0
      %v3098 = vadd.f32 %v2921, %v3097
      %v3099 = vpop.f32.mrf.mxu0
      %3100 = vmatprep.mubr.f32.mxu0 0.0
      %3101 = vmatmul.mubr.f32.gmra.mxu0 %v2980
      %v3102 = vpop.f32.mrf.mxu0
      %v3103 = vadd.f32 %v2926, %v3102
      %v3104 = vpop.f32.mrf.mxu0
      %3105 = vmatprep.mubr.f32.mxu0 0.0
      %3106 = vmatmul.mubr.f32.gmra.mxu0 %v2982
      %v3107 = vpop.f32.mrf.mxu0
      %v3108 = vadd.f32 %v2931, %v3107
      %v3109 = vpop.f32.mrf.mxu0
      %3110 = vmatprep.mubr.f32.mxu0 0.0
      %3111 = vmatmul.mubr.f32.gmra.mxu0 %v2984
      %v3112 = vpop.f32.mrf.mxu0
      %v3113 = vadd.f32 %v2936, %v3112
      %v3114 = vpop.f32.mrf.mxu0
      %3115 = vmatprep.mubr.f32.mxu0 0.0
      %3116 = vmatmul.mubr.f32.gmra.mxu0 %v2986
      %v3117 = vpop.f32.mrf.mxu0
      %v3118 = vadd.f32 %v2941, %v3117
      %v3119 = vpop.f32.mrf.mxu0
      %3120 = vmatprep.mubr.f32.mxu0 0.0
      %3121 = vmatmul.mubr.f32.gmra.mxu0 %v2988
      %v3122 = vpop.f32.mrf.mxu0
      %v3123 = vadd.f32 %v2946, %v3122
      %v3124 = vpop.f32.mrf.mxu0
      %3125 = vmatprep.mubr.f32.mxu0 0.0
      %3126 = vmatmul.mubr.f32.gmra.mxu0 %v2990
      %v3127 = vpop.f32.mrf.mxu0
      %v3128 = vadd.f32 %v2951, %v3127
      %v3129 = vpop.f32.mrf.mxu0
      %3130 = vmatprep.mubr.f32.mxu0 0.0
      %3131 = vmatmul.mubr.f32.gmra.mxu0 %v2992
      %v3132 = vpop.f32.mrf.mxu0
      %v3133 = vadd.f32 %v2956, %v3132
      %v3134 = vpop.f32.mrf.mxu0
      %3135 = vmatprep.mubr.f32.mxu0 0.0
      %3136 = vmatmul.mubr.f32.gmra.mxu0 %v2994
      %v3137 = vpop.f32.mrf.mxu0
      %v3138 = vadd.f32 %v2961, %v3137
      %v3139 = vpop.f32.mrf.mxu0
      %3140 = vdwg.mxu0
      %v3141 = vrot.slane %v2707, 2
      %v3142 = vrot.slane %v2669, 2
      %v3143 = vsel %vm666, %v3141, %v3142
      %v3144 = vrot.slane %v2715, 2
      %v3145 = vsel %vm666, %v3142, %v3144
      %v3146 = vrot.slane %v2708, 2
      %v3147 = vrot.slane %v2672, 2
      %v3148 = vsel %vm666, %v3146, %v3147
      %v3149 = vrot.slane %v2716, 2
      %v3150 = vsel %vm666, %v3147, %v3149
      %v3151 = vrot.slane %v2709, 2
      %v3152 = vrot.slane %v2675, 2
      %v3153 = vsel %vm666, %v3151, %v3152
      %v3154 = vrot.slane %v2717, 2
      %v3155 = vsel %vm666, %v3152, %v3154
      %v3156 = vrot.slane %v2710, 2
      %v3157 = vrot.slane %v2678, 2
      %v3158 = vsel %vm666, %v3156, %v3157
      %v3159 = vrot.slane %v2718, 2
      %v3160 = vsel %vm666, %v3157, %v3159
      %v3161 = vrot.slane %v2711, 2
      %v3162 = vrot.slane %v2681, 2
      %v3163 = vsel %vm666, %v3161, %v3162
      %v3164 = vrot.slane %v2719, 2
      %v3165 = vsel %vm666, %v3162, %v3164
      %v3166 = vrot.slane %v2712, 2
      %v3167 = vrot.slane %v2684, 2
      %v3168 = vsel %vm666, %v3166, %v3167
      %v3169 = vrot.slane %v2720, 2
      %v3170 = vsel %vm666, %v3167, %v3169
      %v3171 = vrot.slane %v2713, 2
      %v3172 = vrot.slane %v2687, 2
      %v3173 = vsel %vm666, %v3171, %v3172
      %v3174 = vrot.slane %v2721, 2
      %v3175 = vsel %vm666, %v3172, %v3174
      %v3176 = vrot.slane %v2714, 2
      %v3177 = vrot.slane %v2690, 2
      %v3178 = vsel %vm666, %v3176, %v3177
      %v3179 = vrot.slane %v2722, 2
      %v3180 = vsel %vm666, %v3177, %v3179
      %v3181 = vld [vmem:[%s2 + $0x130] sm:$0xff]
      %v3182 = vld [vmem:[%s2 + $0x138] sm:$0xff]
      %v3183 = vld [vmem:[%s2 + $0x140] sm:$0xff]
      %v3184 = vld [vmem:[%s2 + $0x148] sm:$0xff]
      %v3185 = vsel %vm1548, %v3143, 0
      %v3187 = vsel %vm1548, %v3145, 0
      %v3189 = vsel %vm1548, %v3148, 0
      %v3191 = vsel %vm1548, %v3150, 0
      %v3193 = vsel %vm1548, %v3153, 0
      %v3195 = vsel %vm1548, %v3155, 0
      %v3197 = vsel %vm1548, %v3158, 0
      %v3199 = vsel %vm1548, %v3160, 0
      %v3201 = vsel %vm1548, %v3163, 0
      %v3203 = vsel %vm1548, %v3165, 0
      %v3205 = vsel %vm1548, %v3168, 0
      %v3207 = vsel %vm1548, %v3170, 0
      %v3209 = vsel %vm1548, %v3173, 0
      %v3211 = vsel %vm1548, %v3175, 0
      %v3213 = vsel %vm1548, %v3178, 0
      %v3215 = vsel %vm1548, %v3180, 0
      %3217 = vmatprep.subr.mxu0 0.0
      %3218 = vmatpush1.msra.mxu0 0.0
      %3219 = vmatprep.subr.mxu0 0.0
      %3220 = vmatpush1.msra.mxu0 0.0
      %3221 = vmatprep.subr.mxu0 0.0
      %3222 = vmatpush1.msra.mxu0 0.0
      %3223 = vmatprep.subr.mxu0 0.0
      %3224 = vmatpush1.msra.mxu0 0.0
      %3225 = vmatprep.subr.mxu0 0.0
      %3226 = vmatpush1.msra.mxu0 0.0
      %3227 = vmatprep.subr.mxu0 0.0
      %3228 = vmatpush1.msra.mxu0 0.0
      %3229 = vmatprep.subr.mxu0 0.0
      %3230 = vmatpush1.msra.mxu0 0.0
      %3231 = vmatprep.subr.mxu0 0.0
      %3232 = vmatpush1.msra.mxu0 0.0
      %3233 = vmatprep.subr.mxu0 0.0
      %3234 = vmatpush1.msra.mxu0 0.0
      %3235 = vmatprep.subr.mxu0 0.0
      %3236 = vmatpush1.msra.mxu0 0.0
      %3237 = vmatprep.subr.mxu0 0.0
      %3238 = vmatpush1.msra.mxu0 0.0
      %3239 = vmatprep.subr.mxu0 0.0
      %3240 = vmatpush1.msra.mxu0 0.0
      %3241 = vmatprep.subr.mxu0 0.0
      %3242 = vmatpush1.msra.mxu0 %v3184
      %3243 = vmatprep.subr.mxu0 0.0
      %3244 = vmatpush1.msra.mxu0 %v3183
      %3245 = vmatprep.subr.mxu0 0.0
      %3246 = vmatpush1.msra.mxu0 %v3182
      %3247 = vmatprep.subr.mxu0 0.0
      %3248 = vmatpush1.msra.mxu0 %v3181
      %3249 = vmatprep.subr.mxu0 0.0
      %3250 = vmatpush2.msra.mxu0 0.0
      %3251 = vmatprep.subr.mxu0 0.0
      %3252 = vmatpush2.msra.mxu0 0.0
      %3253 = vmatprep.subr.mxu0 0.0
      %3254 = vmatpush2.msra.mxu0 0.0
      %3255 = vmatprep.subr.mxu0 0.0
      %3256 = vmatpush2.msra.mxu0 0.0
      %3257 = vmatprep.subr.mxu0 0.0
      %3258 = vmatpush2.msra.mxu0 0.0
      %3259 = vmatprep.subr.mxu0 0.0
      %3260 = vmatpush2.msra.mxu0 0.0
      %3261 = vmatprep.subr.mxu0 0.0
      %3262 = vmatpush2.msra.mxu0 0.0
      %3263 = vmatprep.subr.mxu0 0.0
      %3264 = vmatpush2.msra.mxu0 0.0
      %3265 = vmatprep.subr.mxu0 0.0
      %3266 = vmatpush2.msra.mxu0 0.0
      %3267 = vmatprep.subr.mxu0 0.0
      %3268 = vmatpush2.msra.mxu0 0.0
      %3269 = vmatprep.subr.mxu0 0.0
      %3270 = vmatpush2.msra.mxu0 0.0
      %3271 = vmatprep.subr.mxu0 0.0
      %3272 = vmatpush2.msra.mxu0 0.0
      %3273 = vmatprep.subr.mxu0 0.0
      %3274 = vmatpush2.msra.mxu0 0.0
      %3275 = vmatprep.subr.mxu0 0.0
      %3276 = vmatpush2.msra.mxu0 0.0
      %3277 = vmatprep.subr.mxu0 0.0
      %3278 = vmatpush2.msra.mxu0 0.0
      %3279 = vmatprep.subr.mxu0 0.0
      %3280 = vmatpush2.msra.mxu0 0.0
      %3281 = vmatprep.mubr.f32.mxu0 0.0
      %3282 = vmatmul.mubr.f32.gmra.mxu0 %v3185
      %v3283 = vpop.f32.mrf.mxu0
      %v3284 = vadd.f32 0.0, %v3283
      %v3285 = vpop.f32.mrf.mxu0
      %3286 = vmatprep.mubr.f32.mxu0 0.0
      %3287 = vmatmul.mubr.f32.gmra.mxu0 %v3187
      %v3288 = vpop.f32.mrf.mxu0
      %v3289 = vadd.f32 0.0, %v3288
      %v3290 = vpop.f32.mrf.mxu0
      %3291 = vmatprep.mubr.f32.mxu0 0.0
      %3292 = vmatmul.mubr.f32.gmra.mxu0 %v3189
      %v3293 = vpop.f32.mrf.mxu0
      %v3294 = vadd.f32 0.0, %v3293
      %v3295 = vpop.f32.mrf.mxu0
      %3296 = vmatprep.mubr.f32.mxu0 0.0
      %3297 = vmatmul.mubr.f32.gmra.mxu0 %v3191
      %v3298 = vpop.f32.mrf.mxu0
      %v3299 = vadd.f32 0.0, %v3298
      %v3300 = vpop.f32.mrf.mxu0
      %3301 = vmatprep.mubr.f32.mxu0 0.0
      %3302 = vmatmul.mubr.f32.gmra.mxu0 %v3193
      %v3303 = vpop.f32.mrf.mxu0
      %v3304 = vadd.f32 0.0, %v3303
      %v3305 = vpop.f32.mrf.mxu0
      %3306 = vmatprep.mubr.f32.mxu0 0.0
      %3307 = vmatmul.mubr.f32.gmra.mxu0 %v3195
      %v3308 = vpop.f32.mrf.mxu0
      %v3309 = vadd.f32 0.0, %v3308
      %v3310 = vpop.f32.mrf.mxu0
      %3311 = vmatprep.mubr.f32.mxu0 0.0
      %3312 = vmatmul.mubr.f32.gmra.mxu0 %v3197
      %v3313 = vpop.f32.mrf.mxu0
      %v3314 = vadd.f32 0.0, %v3313
      %v3315 = vpop.f32.mrf.mxu0
      %3316 = vmatprep.mubr.f32.mxu0 0.0
      %3317 = vmatmul.mubr.f32.gmra.mxu0 %v3199
      %v3318 = vpop.f32.mrf.mxu0
      %v3319 = vadd.f32 0.0, %v3318
      %v3320 = vpop.f32.mrf.mxu0
      %3321 = vmatprep.mubr.f32.mxu0 0.0
      %3322 = vmatmul.mubr.f32.gmra.mxu0 %v3201
      %v3323 = vpop.f32.mrf.mxu0
      %v3324 = vadd.f32 0.0, %v3323
      %v3325 = vpop.f32.mrf.mxu0
      %3326 = vmatprep.mubr.f32.mxu0 0.0
      %3327 = vmatmul.mubr.f32.gmra.mxu0 %v3203
      %v3328 = vpop.f32.mrf.mxu0
      %v3329 = vadd.f32 0.0, %v3328
      %v3330 = vpop.f32.mrf.mxu0
      %3331 = vmatprep.mubr.f32.mxu0 0.0
      %3332 = vmatmul.mubr.f32.gmra.mxu0 %v3205
      %v3333 = vpop.f32.mrf.mxu0
      %v3334 = vadd.f32 0.0, %v3333
      %v3335 = vpop.f32.mrf.mxu0
      %3336 = vmatprep.mubr.f32.mxu0 0.0
      %3337 = vmatmul.mubr.f32.gmra.mxu0 %v3207
      %v3338 = vpop.f32.mrf.mxu0
      %v3339 = vadd.f32 0.0, %v3338
      %v3340 = vpop.f32.mrf.mxu0
      %3341 = vmatprep.mubr.f32.mxu0 0.0
      %3342 = vmatmul.mubr.f32.gmra.mxu0 %v3209
      %v3343 = vpop.f32.mrf.mxu0
      %v3344 = vadd.f32 0.0, %v3343
      %v3345 = vpop.f32.mrf.mxu0
      %3346 = vmatprep.mubr.f32.mxu0 0.0
      %3347 = vmatmul.mubr.f32.gmra.mxu0 %v3211
      %v3348 = vpop.f32.mrf.mxu0
      %v3349 = vadd.f32 0.0, %v3348
      %v3350 = vpop.f32.mrf.mxu0
      %3351 = vmatprep.mubr.f32.mxu0 0.0
      %3352 = vmatmul.mubr.f32.gmra.mxu0 %v3213
      %v3353 = vpop.f32.mrf.mxu0
      %v3354 = vadd.f32 0.0, %v3353
      %v3355 = vpop.f32.mrf.mxu0
      %3356 = vmatprep.mubr.f32.mxu0 0.0
      %3357 = vmatmul.mubr.f32.gmra.mxu0 %v3215
      %v3358 = vpop.f32.mrf.mxu0
      %v3359 = vadd.f32 0.0, %v3358
      %v3360 = vpop.f32.mrf.mxu0
      %3361 = vdwg.mxu0
      %v3362 = vadd.f32 %v3063, %v3284
      %v3363 = vadd.f32 %v3068, %v3289
      %v3364 = vadd.f32 %v3073, %v3294
      %v3365 = vadd.f32 %v3078, %v3299
      %v3366 = vadd.f32 %v3083, %v3304
      %v3367 = vadd.f32 %v3088, %v3309
      %v3368 = vadd.f32 %v3093, %v3314
      %v3369 = vadd.f32 %v3098, %v3319
      %v3370 = vadd.f32 %v3103, %v3324
      %v3371 = vadd.f32 %v3108, %v3329
      %v3372 = vadd.f32 %v3113, %v3334
      %v3373 = vadd.f32 %v3118, %v3339
      %v3374 = vadd.f32 %v3123, %v3344
      %v3375 = vadd.f32 %v3128, %v3349
      %v3376 = vadd.f32 %v3133, %v3354
      %v3377 = vadd.f32 %v3138, %v3359
      %v3378 = vrot.slane %v2707, 3
      %v3379 = vrot.slane %v2669, 3
      %v3380 = vsel %vm902, %v3378, %v3379
      %v3381 = vrot.slane %v2715, 3
      %v3382 = vsel %vm902, %v3379, %v3381
      %v3383 = vrot.slane %v2708, 3
      %v3384 = vrot.slane %v2672, 3
      %v3385 = vsel %vm902, %v3383, %v3384
      %v3386 = vrot.slane %v2716, 3
      %v3387 = vsel %vm902, %v3384, %v3386
      %v3388 = vrot.slane %v2709, 3
      %v3389 = vrot.slane %v2675, 3
      %v3390 = vsel %vm902, %v3388, %v3389
      %v3391 = vrot.slane %v2717, 3
      %v3392 = vsel %vm902, %v3389, %v3391
      %v3393 = vrot.slane %v2710, 3
      %v3394 = vrot.slane %v2678, 3
      %v3395 = vsel %vm902, %v3393, %v3394
      %v3396 = vrot.slane %v2718, 3
      %v3397 = vsel %vm902, %v3394, %v3396
      %v3398 = vrot.slane %v2711, 3
      %v3399 = vrot.slane %v2681, 3
      %v3400 = vsel %vm902, %v3398, %v3399
      %v3401 = vrot.slane %v2719, 3
      %v3402 = vsel %vm902, %v3399, %v3401
      %v3403 = vrot.slane %v2712, 3
      %v3404 = vrot.slane %v2684, 3
      %v3405 = vsel %vm902, %v3403, %v3404
      %v3406 = vrot.slane %v2720, 3
      %v3407 = vsel %vm902, %v3404, %v3406
      %v3408 = vrot.slane %v2713, 3
      %v3409 = vrot.slane %v2687, 3
      %v3410 = vsel %vm902, %v3408, %v3409
      %v3411 = vrot.slane %v2721, 3
      %v3412 = vsel %vm902, %v3409, %v3411
      %v3413 = vrot.slane %v2714, 3
      %v3414 = vrot.slane %v2690, 3
      %v3415 = vsel %vm902, %v3413, %v3414
      %v3416 = vrot.slane %v2722, 3
      %v3417 = vsel %vm902, %v3414, %v3416
      %v3418 = vld [vmem:[%s2 + $0x150] sm:$0xff]
      %v3419 = vld [vmem:[%s2 + $0x158] sm:$0xff]
      %v3420 = vld [vmem:[%s2 + $0x160] sm:$0xff]
      %v3421 = vld [vmem:[%s2 + $0x168] sm:$0xff]
      %v3422 = vsel %vm1548, %v3380, 0
      %v3424 = vsel %vm1548, %v3382, 0
      %v3426 = vsel %vm1548, %v3385, 0
      %v3428 = vsel %vm1548, %v3387, 0
      %v3430 = vsel %vm1548, %v3390, 0
      %v3432 = vsel %vm1548, %v3392, 0
      %v3434 = vsel %vm1548, %v3395, 0
      %v3436 = vsel %vm1548, %v3397, 0
      %v3438 = vsel %vm1548, %v3400, 0
      %v3440 = vsel %vm1548, %v3402, 0
      %v3442 = vsel %vm1548, %v3405, 0
      %v3444 = vsel %vm1548, %v3407, 0
      %v3446 = vsel %vm1548, %v3410, 0
      %v3448 = vsel %vm1548, %v3412, 0
      %v3450 = vsel %vm1548, %v3415, 0
      %v3452 = vsel %vm1548, %v3417, 0
      %3454 = vmatprep.subr.mxu0 0.0
      %3455 = vmatpush1.msra.mxu0 0.0
      %3456 = vmatprep.subr.mxu0 0.0
      %3457 = vmatpush1.msra.mxu0 0.0
      %3458 = vmatprep.subr.mxu0 0.0
      %3459 = vmatpush1.msra.mxu0 0.0
      %3460 = vmatprep.subr.mxu0 0.0
      %3461 = vmatpush1.msra.mxu0 0.0
      %3462 = vmatprep.subr.mxu0 0.0
      %3463 = vmatpush1.msra.mxu0 0.0
      %3464 = vmatprep.subr.mxu0 0.0
      %3465 = vmatpush1.msra.mxu0 0.0
      %3466 = vmatprep.subr.mxu0 0.0
      %3467 = vmatpush1.msra.mxu0 0.0
      %3468 = vmatprep.subr.mxu0 0.0
      %3469 = vmatpush1.msra.mxu0 0.0
      %3470 = vmatprep.subr.mxu0 0.0
      %3471 = vmatpush1.msra.mxu0 0.0
      %3472 = vmatprep.subr.mxu0 0.0
      %3473 = vmatpush1.msra.mxu0 0.0
      %3474 = vmatprep.subr.mxu0 0.0
      %3475 = vmatpush1.msra.mxu0 0.0
      %3476 = vmatprep.subr.mxu0 0.0
      %3477 = vmatpush1.msra.mxu0 0.0
      %3478 = vmatprep.subr.mxu0 0.0
      %3479 = vmatpush1.msra.mxu0 %v3421
      %3480 = vmatprep.subr.mxu0 0.0
      %3481 = vmatpush1.msra.mxu0 %v3420
      %3482 = vmatprep.subr.mxu0 0.0
      %3483 = vmatpush1.msra.mxu0 %v3419
      %3484 = vmatprep.subr.mxu0 0.0
      %3485 = vmatpush1.msra.mxu0 %v3418
      %3486 = vmatprep.subr.mxu0 0.0
      %3487 = vmatpush2.msra.mxu0 0.0
      %3488 = vmatprep.subr.mxu0 0.0
      %3489 = vmatpush2.msra.mxu0 0.0
      %3490 = vmatprep.subr.mxu0 0.0
      %3491 = vmatpush2.msra.mxu0 0.0
      %3492 = vmatprep.subr.mxu0 0.0
      %3493 = vmatpush2.msra.mxu0 0.0
      %3494 = vmatprep.subr.mxu0 0.0
      %3495 = vmatpush2.msra.mxu0 0.0
      %3496 = vmatprep.subr.mxu0 0.0
      %3497 = vmatpush2.msra.mxu0 0.0
      %3498 = vmatprep.subr.mxu0 0.0
      %3499 = vmatpush2.msra.mxu0 0.0
      %3500 = vmatprep.subr.mxu0 0.0
      %3501 = vmatpush2.msra.mxu0 0.0
      %3502 = vmatprep.subr.mxu0 0.0
      %3503 = vmatpush2.msra.mxu0 0.0
      %3504 = vmatprep.subr.mxu0 0.0
      %3505 = vmatpush2.msra.mxu0 0.0
      %3506 = vmatprep.subr.mxu0 0.0
      %3507 = vmatpush2.msra.mxu0 0.0
      %3508 = vmatprep.subr.mxu0 0.0
      %3509 = vmatpush2.msra.mxu0 0.0
      %3510 = vmatprep.subr.mxu0 0.0
      %3511 = vmatpush2.msra.mxu0 0.0
      %3512 = vmatprep.subr.mxu0 0.0
      %3513 = vmatpush2.msra.mxu0 0.0
      %3514 = vmatprep.subr.mxu0 0.0
      %3515 = vmatpush2.msra.mxu0 0.0
      %3516 = vmatprep.subr.mxu0 0.0
      %3517 = vmatpush2.msra.mxu0 0.0
      %3518 = vmatprep.mubr.f32.mxu0 0.0
      %3519 = vmatmul.mubr.f32.gmra.mxu0 %v3422
      %v3520 = vpop.f32.mrf.mxu0
      %v3521 = vadd.f32 0.0, %v3520
      %v3522 = vpop.f32.mrf.mxu0
      %3523 = vmatprep.mubr.f32.mxu0 0.0
      %3524 = vmatmul.mubr.f32.gmra.mxu0 %v3424
      %v3525 = vpop.f32.mrf.mxu0
      %v3526 = vadd.f32 0.0, %v3525
      %v3527 = vpop.f32.mrf.mxu0
      %3528 = vmatprep.mubr.f32.mxu0 0.0
      %3529 = vmatmul.mubr.f32.gmra.mxu0 %v3426
      %v3530 = vpop.f32.mrf.mxu0
      %v3531 = vadd.f32 0.0, %v3530
      %v3532 = vpop.f32.mrf.mxu0
      %3533 = vmatprep.mubr.f32.mxu0 0.0
      %3534 = vmatmul.mubr.f32.gmra.mxu0 %v3428
      %v3535 = vpop.f32.mrf.mxu0
      %v3536 = vadd.f32 0.0, %v3535
      %v3537 = vpop.f32.mrf.mxu0
      %3538 = vmatprep.mubr.f32.mxu0 0.0
      %3539 = vmatmul.mubr.f32.gmra.mxu0 %v3430
      %v3540 = vpop.f32.mrf.mxu0
      %v3541 = vadd.f32 0.0, %v3540
      %v3542 = vpop.f32.mrf.mxu0
      %3543 = vmatprep.mubr.f32.mxu0 0.0
      %3544 = vmatmul.mubr.f32.gmra.mxu0 %v3432
      %v3545 = vpop.f32.mrf.mxu0
      %v3546 = vadd.f32 0.0, %v3545
      %v3547 = vpop.f32.mrf.mxu0
      %3548 = vmatprep.mubr.f32.mxu0 0.0
      %3549 = vmatmul.mubr.f32.gmra.mxu0 %v3434
      %v3550 = vpop.f32.mrf.mxu0
      %v3551 = vadd.f32 0.0, %v3550
      %v3552 = vpop.f32.mrf.mxu0
      %3553 = vmatprep.mubr.f32.mxu0 0.0
      %3554 = vmatmul.mubr.f32.gmra.mxu0 %v3436
      %v3555 = vpop.f32.mrf.mxu0
      %v3556 = vadd.f32 0.0, %v3555
      %v3557 = vpop.f32.mrf.mxu0
      %3558 = vmatprep.mubr.f32.mxu0 0.0
      %3559 = vmatmul.mubr.f32.gmra.mxu0 %v3438
      %v3560 = vpop.f32.mrf.mxu0
      %v3561 = vadd.f32 0.0, %v3560
      %v3562 = vpop.f32.mrf.mxu0
      %3563 = vmatprep.mubr.f32.mxu0 0.0
      %3564 = vmatmul.mubr.f32.gmra.mxu0 %v3440
      %v3565 = vpop.f32.mrf.mxu0
      %v3566 = vadd.f32 0.0, %v3565
      %v3567 = vpop.f32.mrf.mxu0
      %3568 = vmatprep.mubr.f32.mxu0 0.0
      %3569 = vmatmul.mubr.f32.gmra.mxu0 %v3442
      %v3570 = vpop.f32.mrf.mxu0
      %v3571 = vadd.f32 0.0, %v3570
      %v3572 = vpop.f32.mrf.mxu0
      %3573 = vmatprep.mubr.f32.mxu0 0.0
      %3574 = vmatmul.mubr.f32.gmra.mxu0 %v3444
      %v3575 = vpop.f32.mrf.mxu0
      %v3576 = vadd.f32 0.0, %v3575
      %v3577 = vpop.f32.mrf.mxu0
      %3578 = vmatprep.mubr.f32.mxu0 0.0
      %3579 = vmatmul.mubr.f32.gmra.mxu0 %v3446
      %v3580 = vpop.f32.mrf.mxu0
      %v3581 = vadd.f32 0.0, %v3580
      %v3582 = vpop.f32.mrf.mxu0
      %3583 = vmatprep.mubr.f32.mxu0 0.0
      %3584 = vmatmul.mubr.f32.gmra.mxu0 %v3448
      %v3585 = vpop.f32.mrf.mxu0
      %v3586 = vadd.f32 0.0, %v3585
      %v3587 = vpop.f32.mrf.mxu0
      %3588 = vmatprep.mubr.f32.mxu0 0.0
      %3589 = vmatmul.mubr.f32.gmra.mxu0 %v3450
      %v3590 = vpop.f32.mrf.mxu0
      %v3591 = vadd.f32 0.0, %v3590
      %v3592 = vpop.f32.mrf.mxu0
      %3593 = vmatprep.mubr.f32.mxu0 0.0
      %3594 = vmatmul.mubr.f32.gmra.mxu0 %v3452
      %v3595 = vpop.f32.mrf.mxu0
      %v3596 = vadd.f32 0.0, %v3595
      %v3597 = vpop.f32.mrf.mxu0
      %3598 = vdwg.mxu0
      %v3599 = vadd.f32 %v3362, %v3521
      %v3600 = vadd.f32 %v3363, %v3526
      %v3601 = vadd.f32 %v3364, %v3531
      %v3602 = vadd.f32 %v3365, %v3536
      %v3603 = vadd.f32 %v3366, %v3541
      %v3604 = vadd.f32 %v3367, %v3546
      %v3605 = vadd.f32 %v3368, %v3551
      %v3606 = vadd.f32 %v3369, %v3556
      %v3607 = vadd.f32 %v3370, %v3561
      %v3608 = vadd.f32 %v3371, %v3566
      %v3609 = vadd.f32 %v3372, %v3571
      %v3610 = vadd.f32 %v3373, %v3576
      %v3611 = vadd.f32 %v3374, %v3581
      %v3612 = vadd.f32 %v3375, %v3586
      %v3613 = vadd.f32 %v3376, %v3591
      %v3614 = vadd.f32 %v3377, %v3596
      %v3615 = vrot.slane %v2707, 4
      %v3616 = vrot.slane %v2669, 4
      %v3617 = vsel %vm1138, %v3615, %v3616
      %v3618 = vrot.slane %v2715, 4
      %v3619 = vsel %vm1138, %v3616, %v3618
      %v3620 = vrot.slane %v2708, 4
      %v3621 = vrot.slane %v2672, 4
      %v3622 = vsel %vm1138, %v3620, %v3621
      %v3623 = vrot.slane %v2716, 4
      %v3624 = vsel %vm1138, %v3621, %v3623
      %v3625 = vrot.slane %v2709, 4
      %v3626 = vrot.slane %v2675, 4
      %v3627 = vsel %vm1138, %v3625, %v3626
      %v3628 = vrot.slane %v2717, 4
      %v3629 = vsel %vm1138, %v3626, %v3628
      %v3630 = vrot.slane %v2710, 4
      %v3631 = vrot.slane %v2678, 4
      %v3632 = vsel %vm1138, %v3630, %v3631
      %v3633 = vrot.slane %v2718, 4
      %v3634 = vsel %vm1138, %v3631, %v3633
      %v3635 = vrot.slane %v2711, 4
      %v3636 = vrot.slane %v2681, 4
      %v3637 = vsel %vm1138, %v3635, %v3636
      %v3638 = vrot.slane %v2719, 4
      %v3639 = vsel %vm1138, %v3636, %v3638
      %v3640 = vrot.slane %v2712, 4
      %v3641 = vrot.slane %v2684, 4
      %v3642 = vsel %vm1138, %v3640, %v3641
      %v3643 = vrot.slane %v2720, 4
      %v3644 = vsel %vm1138, %v3641, %v3643
      %v3645 = vrot.slane %v2713, 4
      %v3646 = vrot.slane %v2687, 4
      %v3647 = vsel %vm1138, %v3645, %v3646
      %v3648 = vrot.slane %v2721, 4
      %v3649 = vsel %vm1138, %v3646, %v3648
      %v3650 = vrot.slane %v2714, 4
      %v3651 = vrot.slane %v2690, 4
      %v3652 = vsel %vm1138, %v3650, %v3651
      %v3653 = vrot.slane %v2722, 4
      %v3654 = vsel %vm1138, %v3651, %v3653
      %v3655 = vld [vmem:[%s2 + $0x170] sm:$0xff]
      %v3656 = vld [vmem:[%s2 + $0x178] sm:$0xff]
      %v3657 = vld [vmem:[%s2 + $0x180] sm:$0xff]
      %v3658 = vld [vmem:[%s2 + $0x188] sm:$0xff]
      %v3659 = vsel %vm1548, %v3617, 0
      %v3661 = vsel %vm1548, %v3619, 0
      %v3663 = vsel %vm1548, %v3622, 0
      %v3665 = vsel %vm1548, %v3624, 0
      %v3667 = vsel %vm1548, %v3627, 0
      %v3669 = vsel %vm1548, %v3629, 0
      %v3671 = vsel %vm1548, %v3632, 0
      %v3673 = vsel %vm1548, %v3634, 0
      %v3675 = vsel %vm1548, %v3637, 0
      %v3677 = vsel %vm1548, %v3639, 0
      %v3679 = vsel %vm1548, %v3642, 0
      %v3681 = vsel %vm1548, %v3644, 0
      %v3683 = vsel %vm1548, %v3647, 0
      %v3685 = vsel %vm1548, %v3649, 0
      %v3687 = vsel %vm1548, %v3652, 0
      %v3689 = vsel %vm1548, %v3654, 0
      %3691 = vmatprep.subr.mxu0 0.0
      %3692 = vmatpush1.msra.mxu0 0.0
      %3693 = vmatprep.subr.mxu0 0.0
      %3694 = vmatpush1.msra.mxu0 0.0
      %3695 = vmatprep.subr.mxu0 0.0
      %3696 = vmatpush1.msra.mxu0 0.0
      %3697 = vmatprep.subr.mxu0 0.0
      %3698 = vmatpush1.msra.mxu0 0.0
      %3699 = vmatprep.subr.mxu0 0.0
      %3700 = vmatpush1.msra.mxu0 0.0
      %3701 = vmatprep.subr.mxu0 0.0
      %3702 = vmatpush1.msra.mxu0 0.0
      %3703 = vmatprep.subr.mxu0 0.0
      %3704 = vmatpush1.msra.mxu0 0.0
      %3705 = vmatprep.subr.mxu0 0.0
      %3706 = vmatpush1.msra.mxu0 0.0
      %3707 = vmatprep.subr.mxu0 0.0
      %3708 = vmatpush1.msra.mxu0 0.0
      %3709 = vmatprep.subr.mxu0 0.0
      %3710 = vmatpush1.msra.mxu0 0.0
      %3711 = vmatprep.subr.mxu0 0.0
      %3712 = vmatpush1.msra.mxu0 0.0
      %3713 = vmatprep.subr.mxu0 0.0
      %3714 = vmatpush1.msra.mxu0 0.0
      %3715 = vmatprep.subr.mxu0 0.0
      %3716 = vmatpush1.msra.mxu0 %v3658
      %3717 = vmatprep.subr.mxu0 0.0
      %3718 = vmatpush1.msra.mxu0 %v3657
      %3719 = vmatprep.subr.mxu0 0.0
      %3720 = vmatpush1.msra.mxu0 %v3656
      %3721 = vmatprep.subr.mxu0 0.0
      %3722 = vmatpush1.msra.mxu0 %v3655
      %3723 = vmatprep.subr.mxu0 0.0
      %3724 = vmatpush2.msra.mxu0 0.0
      %3725 = vmatprep.subr.mxu0 0.0
      %3726 = vmatpush2.msra.mxu0 0.0
      %3727 = vmatprep.subr.mxu0 0.0
      %3728 = vmatpush2.msra.mxu0 0.0
      %3729 = vmatprep.subr.mxu0 0.0
      %3730 = vmatpush2.msra.mxu0 0.0
      %3731 = vmatprep.subr.mxu0 0.0
      %3732 = vmatpush2.msra.mxu0 0.0
      %3733 = vmatprep.subr.mxu0 0.0
      %3734 = vmatpush2.msra.mxu0 0.0
      %3735 = vmatprep.subr.mxu0 0.0
      %3736 = vmatpush2.msra.mxu0 0.0
      %3737 = vmatprep.subr.mxu0 0.0
      %3738 = vmatpush2.msra.mxu0 0.0
      %3739 = vmatprep.subr.mxu0 0.0
      %3740 = vmatpush2.msra.mxu0 0.0
      %3741 = vmatprep.subr.mxu0 0.0
      %3742 = vmatpush2.msra.mxu0 0.0
      %3743 = vmatprep.subr.mxu0 0.0
      %3744 = vmatpush2.msra.mxu0 0.0
      %3745 = vmatprep.subr.mxu0 0.0
      %3746 = vmatpush2.msra.mxu0 0.0
      %3747 = vmatprep.subr.mxu0 0.0
      %3748 = vmatpush2.msra.mxu0 0.0
      %3749 = vmatprep.subr.mxu0 0.0
      %3750 = vmatpush2.msra.mxu0 0.0
      %3751 = vmatprep.subr.mxu0 0.0
      %3752 = vmatpush2.msra.mxu0 0.0
      %3753 = vmatprep.subr.mxu0 0.0
      %3754 = vmatpush2.msra.mxu0 0.0
      %3755 = vmatprep.mubr.f32.mxu0 0.0
      %3756 = vmatmul.mubr.f32.gmra.mxu0 %v3659
      %v3757 = vpop.f32.mrf.mxu0
      %v3758 = vadd.f32 0.0, %v3757
      %v3759 = vpop.f32.mrf.mxu0
      %3760 = vmatprep.mubr.f32.mxu0 0.0
      %3761 = vmatmul.mubr.f32.gmra.mxu0 %v3661
      %v3762 = vpop.f32.mrf.mxu0
      %v3763 = vadd.f32 0.0, %v3762
      %v3764 = vpop.f32.mrf.mxu0
      %3765 = vmatprep.mubr.f32.mxu0 0.0
      %3766 = vmatmul.mubr.f32.gmra.mxu0 %v3663
      %v3767 = vpop.f32.mrf.mxu0
      %v3768 = vadd.f32 0.0, %v3767
      %v3769 = vpop.f32.mrf.mxu0
      %3770 = vmatprep.mubr.f32.mxu0 0.0
      %3771 = vmatmul.mubr.f32.gmra.mxu0 %v3665
      %v3772 = vpop.f32.mrf.mxu0
      %v3773 = vadd.f32 0.0, %v3772
      %v3774 = vpop.f32.mrf.mxu0
      %3775 = vmatprep.mubr.f32.mxu0 0.0
      %3776 = vmatmul.mubr.f32.gmra.mxu0 %v3667
      %v3777 = vpop.f32.mrf.mxu0
      %v3778 = vadd.f32 0.0, %v3777
      %v3779 = vpop.f32.mrf.mxu0
      %3780 = vmatprep.mubr.f32.mxu0 0.0
      %3781 = vmatmul.mubr.f32.gmra.mxu0 %v3669
      %v3782 = vpop.f32.mrf.mxu0
      %v3783 = vadd.f32 0.0, %v3782
      %v3784 = vpop.f32.mrf.mxu0
      %3785 = vmatprep.mubr.f32.mxu0 0.0
      %3786 = vmatmul.mubr.f32.gmra.mxu0 %v3671
      %v3787 = vpop.f32.mrf.mxu0
      %v3788 = vadd.f32 0.0, %v3787
      %v3789 = vpop.f32.mrf.mxu0
      %3790 = vmatprep.mubr.f32.mxu0 0.0
      %3791 = vmatmul.mubr.f32.gmra.mxu0 %v3673
      %v3792 = vpop.f32.mrf.mxu0
      %v3793 = vadd.f32 0.0, %v3792
      %v3794 = vpop.f32.mrf.mxu0
      %3795 = vmatprep.mubr.f32.mxu0 0.0
      %3796 = vmatmul.mubr.f32.gmra.mxu0 %v3675
      %v3797 = vpop.f32.mrf.mxu0
      %v3798 = vadd.f32 0.0, %v3797
      %v3799 = vpop.f32.mrf.mxu0
      %3800 = vmatprep.mubr.f32.mxu0 0.0
      %3801 = vmatmul.mubr.f32.gmra.mxu0 %v3677
      %v3802 = vpop.f32.mrf.mxu0
      %v3803 = vadd.f32 0.0, %v3802
      %v3804 = vpop.f32.mrf.mxu0
      %3805 = vmatprep.mubr.f32.mxu0 0.0
      %3806 = vmatmul.mubr.f32.gmra.mxu0 %v3679
      %v3807 = vpop.f32.mrf.mxu0
      %v3808 = vadd.f32 0.0, %v3807
      %v3809 = vpop.f32.mrf.mxu0
      %3810 = vmatprep.mubr.f32.mxu0 0.0
      %3811 = vmatmul.mubr.f32.gmra.mxu0 %v3681
      %v3812 = vpop.f32.mrf.mxu0
      %v3813 = vadd.f32 0.0, %v3812
      %v3814 = vpop.f32.mrf.mxu0
      %3815 = vmatprep.mubr.f32.mxu0 0.0
      %3816 = vmatmul.mubr.f32.gmra.mxu0 %v3683
      %v3817 = vpop.f32.mrf.mxu0
      %v3818 = vadd.f32 0.0, %v3817
      %v3819 = vpop.f32.mrf.mxu0
      %3820 = vmatprep.mubr.f32.mxu0 0.0
      %3821 = vmatmul.mubr.f32.gmra.mxu0 %v3685
      %v3822 = vpop.f32.mrf.mxu0
      %v3823 = vadd.f32 0.0, %v3822
      %v3824 = vpop.f32.mrf.mxu0
      %3825 = vmatprep.mubr.f32.mxu0 0.0
      %3826 = vmatmul.mubr.f32.gmra.mxu0 %v3687
      %v3827 = vpop.f32.mrf.mxu0
      %v3828 = vadd.f32 0.0, %v3827
      %v3829 = vpop.f32.mrf.mxu0
      %3830 = vmatprep.mubr.f32.mxu0 0.0
      %3831 = vmatmul.mubr.f32.gmra.mxu0 %v3689
      %v3832 = vpop.f32.mrf.mxu0
      %v3833 = vadd.f32 0.0, %v3832
      %v3834 = vpop.f32.mrf.mxu0
      %3835 = vdwg.mxu0
      %v3836 = vadd.f32 %v3599, %v3758
      %v3837 = vadd.f32 %v3600, %v3763
      %v3838 = vadd.f32 %v3601, %v3768
      %v3839 = vadd.f32 %v3602, %v3773
      %v3840 = vadd.f32 %v3603, %v3778
      %v3841 = vadd.f32 %v3604, %v3783
      %v3842 = vadd.f32 %v3605, %v3788
      %v3843 = vadd.f32 %v3606, %v3793
      %v3844 = vadd.f32 %v3607, %v3798
      %v3845 = vadd.f32 %v3608, %v3803
      %v3846 = vadd.f32 %v3609, %v3808
      %v3847 = vadd.f32 %v3610, %v3813
      %v3848 = vadd.f32 %v3611, %v3818
      %v3849 = vadd.f32 %v3612, %v3823
      %v3850 = vadd.f32 %v3613, %v3828
      %v3851 = vadd.f32 %v3614, %v3833
      %v3852 = vld [vmem:[%s3 + $0x2] sm:$0x1]
      %v3853 = vlaneseq
      %v3854 = vshrl.u32 %v3853, 7
      %v3855 = vsub.s32 0, %v3854
      %v3856 = vrot.slane %v3852, %v3855
      %v3857 = vadd.f32 %v3836, %v3856
      %v3858 = vadd.f32 %v3837, %v3856
      %v3859 = vadd.f32 %v3838, %v3856
      %v3860 = vadd.f32 %v3839, %v3856
      %v3861 = vadd.f32 %v3840, %v3856
      %v3862 = vadd.f32 %v3841, %v3856
      %v3863 = vadd.f32 %v3842, %v3856
      %v3864 = vadd.f32 %v3843, %v3856
      %v3865 = vadd.f32 %v3844, %v3856
      %v3866 = vadd.f32 %v3845, %v3856
      %v3867 = vadd.f32 %v3846, %v3856
      %v3868 = vadd.f32 %v3847, %v3856
      %v3869 = vadd.f32 %v3848, %v3856
      %v3870 = vadd.f32 %v3849, %v3856
      %v3871 = vadd.f32 %v3850, %v3856
      %v3872 = vadd.f32 %v3851, %v3856
      %v3873 = vld [vmem:[%s3 + $0x3] sm:$0x1]
      %v3874 = vlaneseq
      %v3875 = vshrl.u32 %v3874, 7
      %v3876 = vsub.s32 0, %v3875
      %v3877 = vrot.slane %v3873, %v3876
      %v3878 = vmul.f32 %v3857, %v3877
      %v3879 = vmul.f32 %v3858, %v3877
      %v3880 = vmul.f32 %v3859, %v3877
      %v3881 = vmul.f32 %v3860, %v3877
      %v3882 = vmul.f32 %v3861, %v3877
      %v3883 = vmul.f32 %v3862, %v3877
      %v3884 = vmul.f32 %v3863, %v3877
      %v3885 = vmul.f32 %v3864, %v3877
      %v3886 = vmul.f32 %v3865, %v3877
      %v3887 = vmul.f32 %v3866, %v3877
      %v3888 = vmul.f32 %v3867, %v3877
      %v3889 = vmul.f32 %v3868, %v3877
      %v3890 = vmul.f32 %v3869, %v3877
      %v3891 = vmul.f32 %v3870, %v3877
      %v3892 = vmul.f32 %v3871, %v3877
      %v3893 = vmul.f32 %v3872, %v3877
      %v3894 = vsel %vm1548, %v3878, 0.0
      %3895 = vadd.xlane.f32.xlu0 %v3894
      %v3896 = vpop.xlane.xlu0 %3895
      %v3897 = vsel %vm1548, %v3879, 0.0
      %3898 = vadd.xlane.f32.xlu0 %v3897
      %v3899 = vpop.xlane.xlu0 %3898
      %v3900 = vsel %vm1548, %v3880, 0.0
      %3901 = vadd.xlane.f32.xlu0 %v3900
      %v3902 = vpop.xlane.xlu0 %3901
      %v3903 = vsel %vm1548, %v3881, 0.0
      %3904 = vadd.xlane.f32.xlu0 %v3903
      %v3905 = vpop.xlane.xlu0 %3904
      %v3906 = vsel %vm1548, %v3882, 0.0
      %3907 = vadd.xlane.f32.xlu0 %v3906
      %v3908 = vpop.xlane.xlu0 %3907
      %v3909 = vsel %vm1548, %v3883, 0.0
      %3910 = vadd.xlane.f32.xlu0 %v3909
      %v3911 = vpop.xlane.xlu0 %3910
      %v3912 = vsel %vm1548, %v3884, 0.0
      %3913 = vadd.xlane.f32.xlu0 %v3912
      %v3914 = vpop.xlane.xlu0 %3913
      %v3915 = vsel %vm1548, %v3885, 0.0
      %3916 = vadd.xlane.f32.xlu0 %v3915
      %v3917 = vpop.xlane.xlu0 %3916
      %v3918 = vsel %vm1548, %v3886, 0.0
      %3919 = vadd.xlane.f32.xlu0 %v3918
      %v3920 = vpop.xlane.xlu0 %3919
      %v3921 = vsel %vm1548, %v3887, 0.0
      %3922 = vadd.xlane.f32.xlu0 %v3921
      %v3923 = vpop.xlane.xlu0 %3922
      %v3924 = vsel %vm1548, %v3888, 0.0
      %3925 = vadd.xlane.f32.xlu0 %v3924
      %v3926 = vpop.xlane.xlu0 %3925
      %v3927 = vsel %vm1548, %v3889, 0.0
      %3928 = vadd.xlane.f32.xlu0 %v3927
      %v3929 = vpop.xlane.xlu0 %3928
      %v3930 = vsel %vm1548, %v3890, 0.0
      %3931 = vadd.xlane.f32.xlu0 %v3930
      %v3932 = vpop.xlane.xlu0 %3931
      %v3933 = vsel %vm1548, %v3891, 0.0
      %3934 = vadd.xlane.f32.xlu0 %v3933
      %v3935 = vpop.xlane.xlu0 %3934
      %v3936 = vsel %vm1548, %v3892, 0.0
      %3937 = vadd.xlane.f32.xlu0 %v3936
      %v3938 = vpop.xlane.xlu0 %3937
      %v3939 = vsel %vm1548, %v3893, 0.0
      %3940 = vadd.xlane.f32.xlu0 %v3939
      %v3941 = vpop.xlane.xlu0 %3940
      %v3942 = vld [vmem:[%s213] sm:$0xff]
      %v3944 = vlaneseq
      %v3945 = vshrl.u32 %v3944, 7
      %v3946 = vsub.s32 0, %v3945
      %v3947 = vrot.slane %v3942, %v3946
      %3949 = vbcast.lane.b32.xlu0 %v3947, 256
      %v3950 = vpop.permute.xlu0 %3949
      %s3952 = sor.u32 256, 8
      %3953 = vbcast.lane.b32.xlu0 %v3947, %s3952
      %v3954 = vpop.permute.xlu0 %3953
      %v3955 = vlaneseq
      %v3956 = vshrl.u32 %v3955, 7
      %v3957 = vsub.s32 1, %v3956
      %v3958 = vrot.slane %v3942, %v3957
      %3960 = vbcast.lane.b32.xlu0 %v3958, 256
      %v3961 = vpop.permute.xlu0 %3960
      %s3963 = sor.u32 256, 8
      %3964 = vbcast.lane.b32.xlu0 %v3958, %s3963
      %v3965 = vpop.permute.xlu0 %3964
      %v3966 = vlaneseq
      %v3967 = vshrl.u32 %v3966, 7
      %v3968 = vsub.s32 2, %v3967
      %v3969 = vrot.slane %v3942, %v3968
      %3971 = vbcast.lane.b32.xlu0 %v3969, 256
      %v3972 = vpop.permute.xlu0 %3971
      %s3974 = sor.u32 256, 8
      %3975 = vbcast.lane.b32.xlu0 %v3969, %s3974
      %v3976 = vpop.permute.xlu0 %3975
      %v3977 = vlaneseq
      %v3978 = vshrl.u32 %v3977, 7
      %v3979 = vsub.s32 3, %v3978
      %v3980 = vrot.slane %v3942, %v3979
      %3982 = vbcast.lane.b32.xlu0 %v3980, 256
      %v3983 = vpop.permute.xlu0 %3982
      %s3985 = sor.u32 256, 8
      %3986 = vbcast.lane.b32.xlu0 %v3980, %s3985
      %v3987 = vpop.permute.xlu0 %3986
      %v3988 = vlaneseq
      %v3989 = vshrl.u32 %v3988, 7
      %v3990 = vsub.s32 4, %v3989
      %v3991 = vrot.slane %v3942, %v3990
      %3993 = vbcast.lane.b32.xlu0 %v3991, 256
      %v3994 = vpop.permute.xlu0 %3993
      %s3996 = sor.u32 256, 8
      %3997 = vbcast.lane.b32.xlu0 %v3991, %s3996
      %v3998 = vpop.permute.xlu0 %3997
      %v3999 = vlaneseq
      %v4000 = vshrl.u32 %v3999, 7
      %v4001 = vsub.s32 5, %v4000
      %v4002 = vrot.slane %v3942, %v4001
      %4004 = vbcast.lane.b32.xlu0 %v4002, 256
      %v4005 = vpop.permute.xlu0 %4004
      %s4007 = sor.u32 256, 8
      %4008 = vbcast.lane.b32.xlu0 %v4002, %s4007
      %v4009 = vpop.permute.xlu0 %4008
      %v4010 = vlaneseq
      %v4011 = vshrl.u32 %v4010, 7
      %v4012 = vsub.s32 6, %v4011
      %v4013 = vrot.slane %v3942, %v4012
      %4015 = vbcast.lane.b32.xlu0 %v4013, 256
      %v4016 = vpop.permute.xlu0 %4015
      %s4018 = sor.u32 256, 8
      %4019 = vbcast.lane.b32.xlu0 %v4013, %s4018
      %v4020 = vpop.permute.xlu0 %4019
      %v4021 = vlaneseq
      %v4022 = vshrl.u32 %v4021, 7
      %v4023 = vsub.s32 7, %v4022
      %v4024 = vrot.slane %v3942, %v4023
      %4026 = vbcast.lane.b32.xlu0 %v4024, 256
      %v4027 = vpop.permute.xlu0 %4026
      %s4029 = sor.u32 256, 8
      %4030 = vbcast.lane.b32.xlu0 %v4024, %s4029
      %v4031 = vpop.permute.xlu0 %4030
      %v4048 = vadd.f32 %v3896, %v3950
      %v4049 = vadd.f32 %v3899, %v3954
      %v4050 = vadd.f32 %v3902, %v3961
      %v4051 = vadd.f32 %v3905, %v3965
      %v4052 = vadd.f32 %v3908, %v3972
      %v4053 = vadd.f32 %v3911, %v3976
      %v4054 = vadd.f32 %v3914, %v3983
      %v4055 = vadd.f32 %v3917, %v3987
      %v4056 = vadd.f32 %v3920, %v3994
      %v4057 = vadd.f32 %v3923, %v3998
      %v4058 = vadd.f32 %v3926, %v4005
      %v4059 = vadd.f32 %v3929, %v4009
      %v4060 = vadd.f32 %v3932, %v4016
      %v4061 = vadd.f32 %v3935, %v4020
      %v4062 = vadd.f32 %v3938, %v4027
      %v4063 = vadd.f32 %v3941, %v4031
      %4080 = vset.pattern.permute.xlu0 0
      %4081 = vperm.xlu0 %4080, %v4048
      %v4082 = vpop.permute.xlu0 %4081
      %4083 = vset.pattern.permute.xlu0 0
      %4084 = vperm.xlu0 %4083, %v4049
      %v4085 = vpop.permute.xlu0 %4084
      %4086 = vset.pattern.permute.xlu0 0
      %4087 = vperm.xlu0 %4086, %v4050
      %v4088 = vpop.permute.xlu0 %4087
      %4089 = vset.pattern.permute.xlu0 0
      %4090 = vperm.xlu0 %4089, %v4051
      %v4091 = vpop.permute.xlu0 %4090
      %4092 = vset.pattern.permute.xlu0 0
      %4093 = vperm.xlu0 %4092, %v4052
      %v4094 = vpop.permute.xlu0 %4093
      %4095 = vset.pattern.permute.xlu0 0
      %4096 = vperm.xlu0 %4095, %v4053
      %v4097 = vpop.permute.xlu0 %4096
      %4098 = vset.pattern.permute.xlu0 0
      %4099 = vperm.xlu0 %4098, %v4054
      %v4100 = vpop.permute.xlu0 %4099
      %4101 = vset.pattern.permute.xlu0 0
      %4102 = vperm.xlu0 %4101, %v4055
      %v4103 = vpop.permute.xlu0 %4102
      %4104 = vset.pattern.permute.xlu0 0
      %4105 = vperm.xlu0 %4104, %v4056
      %v4106 = vpop.permute.xlu0 %4105
      %4107 = vset.pattern.permute.xlu0 0
      %4108 = vperm.xlu0 %4107, %v4057
      %v4109 = vpop.permute.xlu0 %4108
      %4110 = vset.pattern.permute.xlu0 0
      %4111 = vperm.xlu0 %4110, %v4058
      %v4112 = vpop.permute.xlu0 %4111
      %4113 = vset.pattern.permute.xlu0 0
      %4114 = vperm.xlu0 %4113, %v4059
      %v4115 = vpop.permute.xlu0 %4114
      %4116 = vset.pattern.permute.xlu0 0
      %4117 = vperm.xlu0 %4116, %v4060
      %v4118 = vpop.permute.xlu0 %4117
      %4119 = vset.pattern.permute.xlu0 0
      %4120 = vperm.xlu0 %4119, %v4061
      %v4121 = vpop.permute.xlu0 %4120
      %4122 = vset.pattern.permute.xlu0 0
      %4123 = vperm.xlu0 %4122, %v4062
      %v4124 = vpop.permute.xlu0 %4123
      %4125 = vset.pattern.permute.xlu0 0
      %4126 = vperm.xlu0 %4125, %v4063
      %v4127 = vpop.permute.xlu0 %4126
      %v4128 = vlaneseq
      %v4129 = vand.u32 %v4128, 127
      %v4130 = vlaneseq
      %v4131 = vshrl.u32 %v4130, 7
      %v4132 = vsub.s32 %v4129, %v4131
      %v4133 = vrot.slane %v4082, %v4132
      %v4134 = vadd.s32 %v4129, 4294967288
      %v4135 = vlaneseq
      %v4136 = vshrl.u32 %v4135, 7
      %v4137 = vsub.s32 %v4134, %v4136
      %v4138 = vrot.slane %v4085, %v4137
      %vm4139 = vcmask 130112
      %v4140 = vsel %vm4139, %v4138, %v4133
      %v4141 = vlaneseq
      %v4142 = vshrl.u32 %v4141, 7
      %v4143 = vsub.s32 %v4129, %v4142
      %v4144 = vrot.slane %v4088, %v4143
      %v4145 = vlaneseq
      %v4146 = vshrl.u32 %v4145, 7
      %v4147 = vsub.s32 %v4134, %v4146
      %v4148 = vrot.slane %v4091, %v4147
      %v4149 = vsel %vm4139, %v4148, %v4144
      %v4150 = vlaneseq
      %v4151 = vshrl.u32 %v4150, 7
      %v4152 = vsub.s32 %v4129, %v4151
      %v4153 = vrot.slane %v4094, %v4152
      %v4154 = vlaneseq
      %v4155 = vshrl.u32 %v4154, 7
      %v4156 = vsub.s32 %v4134, %v4155
      %v4157 = vrot.slane %v4097, %v4156
      %v4158 = vsel %vm4139, %v4157, %v4153
      %v4159 = vlaneseq
      %v4160 = vshrl.u32 %v4159, 7
      %v4161 = vsub.s32 %v4129, %v4160
      %v4162 = vrot.slane %v4100, %v4161
      %v4163 = vlaneseq
      %v4164 = vshrl.u32 %v4163, 7
      %v4165 = vsub.s32 %v4134, %v4164
      %v4166 = vrot.slane %v4103, %v4165
      %v4167 = vsel %vm4139, %v4166, %v4162
      %v4168 = vlaneseq
      %v4169 = vshrl.u32 %v4168, 7
      %v4170 = vsub.s32 %v4129, %v4169
      %v4171 = vrot.slane %v4106, %v4170
      %v4172 = vlaneseq
      %v4173 = vshrl.u32 %v4172, 7
      %v4174 = vsub.s32 %v4134, %v4173
      %v4175 = vrot.slane %v4109, %v4174
      %v4176 = vsel %vm4139, %v4175, %v4171
      %v4177 = vlaneseq
      %v4178 = vshrl.u32 %v4177, 7
      %v4179 = vsub.s32 %v4129, %v4178
      %v4180 = vrot.slane %v4112, %v4179
      %v4181 = vlaneseq
      %v4182 = vshrl.u32 %v4181, 7
      %v4183 = vsub.s32 %v4134, %v4182
      %v4184 = vrot.slane %v4115, %v4183
      %v4185 = vsel %vm4139, %v4184, %v4180
      %v4186 = vlaneseq
      %v4187 = vshrl.u32 %v4186, 7
      %v4188 = vsub.s32 %v4129, %v4187
      %v4189 = vrot.slane %v4118, %v4188
      %v4190 = vlaneseq
      %v4191 = vshrl.u32 %v4190, 7
      %v4192 = vsub.s32 %v4134, %v4191
      %v4193 = vrot.slane %v4121, %v4192
      %v4194 = vsel %vm4139, %v4193, %v4189
      %v4195 = vlaneseq
      %v4196 = vshrl.u32 %v4195, 7
      %v4197 = vsub.s32 %v4129, %v4196
      %v4198 = vrot.slane %v4124, %v4197
      %v4199 = vlaneseq
      %v4200 = vshrl.u32 %v4199, 7
      %v4201 = vsub.s32 %v4134, %v4200
      %v4202 = vrot.slane %v4127, %v4201
      %v4203 = vsel %vm4139, %v4202, %v4198
      %vm4204 = vcmask 1041409
      %v4205 = vsel %vm4204, %v4149, %v4140
      %vm4206 = vcmask 1042434
      %v4207 = vsel %vm4206, %v4158, %v4205
      %vm4208 = vcmask 1043459
      %v4209 = vsel %vm4208, %v4167, %v4207
      %vm4210 = vcmask 1044484
      %v4211 = vsel %vm4210, %v4176, %v4209
      %vm4212 = vcmask 1045509
      %v4213 = vsel %vm4212, %v4185, %v4211
      %vm4214 = vcmask 1046534
      %v4215 = vsel %vm4214, %v4194, %v4213
      %vm4216 = vcmask 1047559
      %v4217 = vsel %vm4216, %v4203, %v4215
      %v4219 = vsel %vm311, %v4217, -inf
      %4220 = vmax.xlane.f32.xlu0 %v4219
      %v4221 = vpop.xlane.xlu0 %4220
      %v4223 = vlaneseq
      %v4224 = vshrl.u32 %v4223, 7
      %v4225 = vsub.s32 0, %v4224
      %v4226 = vrot.slane %v4221, %v4225
      %v4227 = vlaneseq
      %v4228 = vshrl.u32 %v4227, 7
      %v4229 = vsub.s32 1, %v4228
      %v4230 = vrot.slane %v4221, %v4229
      %v4231 = vlaneseq
      %v4232 = vshrl.u32 %v4231, 7
      %v4233 = vsub.s32 2, %v4232
      %v4234 = vrot.slane %v4221, %v4233
      %v4235 = vlaneseq
      %v4236 = vshrl.u32 %v4235, 7
      %v4237 = vsub.s32 3, %v4236
      %v4238 = vrot.slane %v4221, %v4237
      %v4239 = vlaneseq
      %v4240 = vshrl.u32 %v4239, 7
      %v4241 = vsub.s32 4, %v4240
      %v4242 = vrot.slane %v4221, %v4241
      %v4243 = vlaneseq
      %v4244 = vshrl.u32 %v4243, 7
      %v4245 = vsub.s32 5, %v4244
      %v4246 = vrot.slane %v4221, %v4245
      %v4247 = vlaneseq
      %v4248 = vshrl.u32 %v4247, 7
      %v4249 = vsub.s32 6, %v4248
      %v4250 = vrot.slane %v4221, %v4249
      %v4251 = vlaneseq
      %v4252 = vshrl.u32 %v4251, 7
      %v4253 = vsub.s32 7, %v4252
      %v4254 = vrot.slane %v4221, %v4253
      %v4263 = vsub.f32 %v4048, %v4226
      %v4264 = vsub.f32 %v4049, %v4226
      %v4265 = vsub.f32 %v4050, %v4230
      %v4266 = vsub.f32 %v4051, %v4230
      %v4267 = vsub.f32 %v4052, %v4234
      %v4268 = vsub.f32 %v4053, %v4234
      %v4269 = vsub.f32 %v4054, %v4238
      %v4270 = vsub.f32 %v4055, %v4238
      %v4271 = vsub.f32 %v4056, %v4242
      %v4272 = vsub.f32 %v4057, %v4242
      %v4273 = vsub.f32 %v4058, %v4246
      %v4274 = vsub.f32 %v4059, %v4246
      %v4275 = vsub.f32 %v4060, %v4250
      %v4276 = vsub.f32 %v4061, %v4250
      %v4277 = vsub.f32 %v4062, %v4254
      %v4278 = vsub.f32 %v4063, %v4254
      %v4279 = vmul.f32 %v4263, 1.442695
      %v4280 = vpow.pop %v4279
      %v4281 = vmul.f32 %v4264, 1.442695
      %v4282 = vpow.pop %v4281
      %v4283 = vmul.f32 %v4265, 1.442695
      %v4284 = vpow.pop %v4283
      %v4285 = vmul.f32 %v4266, 1.442695
      %v4286 = vpow.pop %v4285
      %v4287 = vmul.f32 %v4267, 1.442695
      %v4288 = vpow.pop %v4287
      %v4289 = vmul.f32 %v4268, 1.442695
      %v4290 = vpow.pop %v4289
      %v4291 = vmul.f32 %v4269, 1.442695
      %v4292 = vpow.pop %v4291
      %v4293 = vmul.f32 %v4270, 1.442695
      %v4294 = vpow.pop %v4293
      %v4295 = vmul.f32 %v4271, 1.442695
      %v4296 = vpow.pop %v4295
      %v4297 = vmul.f32 %v4272, 1.442695
      %v4298 = vpow.pop %v4297
      %v4299 = vmul.f32 %v4273, 1.442695
      %v4300 = vpow.pop %v4299
      %v4301 = vmul.f32 %v4274, 1.442695
      %v4302 = vpow.pop %v4301
      %v4303 = vmul.f32 %v4275, 1.442695
      %v4304 = vpow.pop %v4303
      %v4305 = vmul.f32 %v4276, 1.442695
      %v4306 = vpow.pop %v4305
      %v4307 = vmul.f32 %v4277, 1.442695
      %v4308 = vpow.pop %v4307
      %v4309 = vmul.f32 %v4278, 1.442695
      %v4310 = vpow.pop %v4309
      %4327 = vset.pattern.permute.xlu0 0
      %4328 = vperm.xlu0 %4327, %v4280
      %v4329 = vpop.permute.xlu0 %4328
      %4330 = vset.pattern.permute.xlu0 0
      %4331 = vperm.xlu0 %4330, %v4282
      %v4332 = vpop.permute.xlu0 %4331
      %4333 = vset.pattern.permute.xlu0 0
      %4334 = vperm.xlu0 %4333, %v4284
      %v4335 = vpop.permute.xlu0 %4334
      %4336 = vset.pattern.permute.xlu0 0
      %4337 = vperm.xlu0 %4336, %v4286
      %v4338 = vpop.permute.xlu0 %4337
      %4339 = vset.pattern.permute.xlu0 0
      %4340 = vperm.xlu0 %4339, %v4288
      %v4341 = vpop.permute.xlu0 %4340
      %4342 = vset.pattern.permute.xlu0 0
      %4343 = vperm.xlu0 %4342, %v4290
      %v4344 = vpop.permute.xlu0 %4343
      %4345 = vset.pattern.permute.xlu0 0
      %4346 = vperm.xlu0 %4345, %v4292
      %v4347 = vpop.permute.xlu0 %4346
      %4348 = vset.pattern.permute.xlu0 0
      %4349 = vperm.xlu0 %4348, %v4294
      %v4350 = vpop.permute.xlu0 %4349
      %4351 = vset.pattern.permute.xlu0 0
      %4352 = vperm.xlu0 %4351, %v4296
      %v4353 = vpop.permute.xlu0 %4352
      %4354 = vset.pattern.permute.xlu0 0
      %4355 = vperm.xlu0 %4354, %v4298
      %v4356 = vpop.permute.xlu0 %4355
      %4357 = vset.pattern.permute.xlu0 0
      %4358 = vperm.xlu0 %4357, %v4300
      %v4359 = vpop.permute.xlu0 %4358
      %4360 = vset.pattern.permute.xlu0 0
      %4361 = vperm.xlu0 %4360, %v4302
      %v4362 = vpop.permute.xlu0 %4361
      %4363 = vset.pattern.permute.xlu0 0
      %4364 = vperm.xlu0 %4363, %v4304
      %v4365 = vpop.permute.xlu0 %4364
      %4366 = vset.pattern.permute.xlu0 0
      %4367 = vperm.xlu0 %4366, %v4306
      %v4368 = vpop.permute.xlu0 %4367
      %4369 = vset.pattern.permute.xlu0 0
      %4370 = vperm.xlu0 %4369, %v4308
      %v4371 = vpop.permute.xlu0 %4370
      %4372 = vset.pattern.permute.xlu0 0
      %4373 = vperm.xlu0 %4372, %v4310
      %v4374 = vpop.permute.xlu0 %4373
      %v4375 = vlaneseq
      %v4376 = vshrl.u32 %v4375, 7
      %v4377 = vsub.s32 %v4129, %v4376
      %v4378 = vrot.slane %v4329, %v4377
      %v4379 = vlaneseq
      %v4380 = vshrl.u32 %v4379, 7
      %v4381 = vsub.s32 %v4134, %v4380
      %v4382 = vrot.slane %v4332, %v4381
      %v4383 = vsel %vm4139, %v4382, %v4378
      %v4384 = vlaneseq
      %v4385 = vshrl.u32 %v4384, 7
      %v4386 = vsub.s32 %v4129, %v4385
      %v4387 = vrot.slane %v4335, %v4386
      %v4388 = vlaneseq
      %v4389 = vshrl.u32 %v4388, 7
      %v4390 = vsub.s32 %v4134, %v4389
      %v4391 = vrot.slane %v4338, %v4390
      %v4392 = vsel %vm4139, %v4391, %v4387
      %v4393 = vlaneseq
      %v4394 = vshrl.u32 %v4393, 7
      %v4395 = vsub.s32 %v4129, %v4394
      %v4396 = vrot.slane %v4341, %v4395
      %v4397 = vlaneseq
      %v4398 = vshrl.u32 %v4397, 7
      %v4399 = vsub.s32 %v4134, %v4398
      %v4400 = vrot.slane %v4344, %v4399
      %v4401 = vsel %vm4139, %v4400, %v4396
      %v4402 = vlaneseq
      %v4403 = vshrl.u32 %v4402, 7
      %v4404 = vsub.s32 %v4129, %v4403
      %v4405 = vrot.slane %v4347, %v4404
      %v4406 = vlaneseq
      %v4407 = vshrl.u32 %v4406, 7
      %v4408 = vsub.s32 %v4134, %v4407
      %v4409 = vrot.slane %v4350, %v4408
      %v4410 = vsel %vm4139, %v4409, %v4405
      %v4411 = vlaneseq
      %v4412 = vshrl.u32 %v4411, 7
      %v4413 = vsub.s32 %v4129, %v4412
      %v4414 = vrot.slane %v4353, %v4413
      %v4415 = vlaneseq
      %v4416 = vshrl.u32 %v4415, 7
      %v4417 = vsub.s32 %v4134, %v4416
      %v4418 = vrot.slane %v4356, %v4417
      %v4419 = vsel %vm4139, %v4418, %v4414
      %v4420 = vlaneseq
      %v4421 = vshrl.u32 %v4420, 7
      %v4422 = vsub.s32 %v4129, %v4421
      %v4423 = vrot.slane %v4359, %v4422
      %v4424 = vlaneseq
      %v4425 = vshrl.u32 %v4424, 7
      %v4426 = vsub.s32 %v4134, %v4425
      %v4427 = vrot.slane %v4362, %v4426
      %v4428 = vsel %vm4139, %v4427, %v4423
      %v4429 = vlaneseq
      %v4430 = vshrl.u32 %v4429, 7
      %v4431 = vsub.s32 %v4129, %v4430
      %v4432 = vrot.slane %v4365, %v4431
      %v4433 = vlaneseq
      %v4434 = vshrl.u32 %v4433, 7
      %v4435 = vsub.s32 %v4134, %v4434
      %v4436 = vrot.slane %v4368, %v4435
      %v4437 = vsel %vm4139, %v4436, %v4432
      %v4438 = vlaneseq
      %v4439 = vshrl.u32 %v4438, 7
      %v4440 = vsub.s32 %v4129, %v4439
      %v4441 = vrot.slane %v4371, %v4440
      %v4442 = vlaneseq
      %v4443 = vshrl.u32 %v4442, 7
      %v4444 = vsub.s32 %v4134, %v4443
      %v4445 = vrot.slane %v4374, %v4444
      %v4446 = vsel %vm4139, %v4445, %v4441
      %v4447 = vsel %vm4204, %v4392, %v4383
      %v4448 = vsel %vm4206, %v4401, %v4447
      %v4449 = vsel %vm4208, %v4410, %v4448
      %v4450 = vsel %vm4210, %v4419, %v4449
      %v4451 = vsel %vm4212, %v4428, %v4450
      %v4452 = vsel %vm4214, %v4437, %v4451
      %v4453 = vsel %vm4216, %v4446, %v4452
      %v4455 = vsel %vm311, %v4453, 0.0
      %4456 = vadd.xlane.f32.xlu0 %v4455
      %v4457 = vpop.xlane.xlu0 %4456
      %v4459 = vlaneseq
      %v4460 = vshrl.u32 %v4459, 7
      %v4461 = vsub.s32 0, %v4460
      %v4462 = vrot.slane %v4457, %v4461
      %v4463 = vlaneseq
      %v4464 = vshrl.u32 %v4463, 7
      %v4465 = vsub.s32 1, %v4464
      %v4466 = vrot.slane %v4457, %v4465
      %v4467 = vlaneseq
      %v4468 = vshrl.u32 %v4467, 7
      %v4469 = vsub.s32 2, %v4468
      %v4470 = vrot.slane %v4457, %v4469
      %v4471 = vlaneseq
      %v4472 = vshrl.u32 %v4471, 7
      %v4473 = vsub.s32 3, %v4472
      %v4474 = vrot.slane %v4457, %v4473
      %v4475 = vlaneseq
      %v4476 = vshrl.u32 %v4475, 7
      %v4477 = vsub.s32 4, %v4476
      %v4478 = vrot.slane %v4457, %v4477
      %v4479 = vlaneseq
      %v4480 = vshrl.u32 %v4479, 7
      %v4481 = vsub.s32 5, %v4480
      %v4482 = vrot.slane %v4457, %v4481
      %v4483 = vlaneseq
      %v4484 = vshrl.u32 %v4483, 7
      %v4485 = vsub.s32 6, %v4484
      %v4486 = vrot.slane %v4457, %v4485
      %v4487 = vlaneseq
      %v4488 = vshrl.u32 %v4487, 7
      %v4489 = vsub.s32 7, %v4488
      %v4490 = vrot.slane %v4457, %v4489
      %v4499 = vrcp.pop %v4462
      %v4500 = vmul.f32 %v4280, %v4499
      %v4501 = vmul.f32 %v4282, %v4499
      %v4502 = vrcp.pop %v4466
      %v4503 = vmul.f32 %v4284, %v4502
      %v4504 = vmul.f32 %v4286, %v4502
      %v4505 = vrcp.pop %v4470
      %v4506 = vmul.f32 %v4288, %v4505
      %v4507 = vmul.f32 %v4290, %v4505
      %v4508 = vrcp.pop %v4474
      %v4509 = vmul.f32 %v4292, %v4508
      %v4510 = vmul.f32 %v4294, %v4508
      %v4511 = vrcp.pop %v4478
      %v4512 = vmul.f32 %v4296, %v4511
      %v4513 = vmul.f32 %v4298, %v4511
      %v4514 = vrcp.pop %v4482
      %v4515 = vmul.f32 %v4300, %v4514
      %v4516 = vmul.f32 %v4302, %v4514
      %v4517 = vrcp.pop %v4486
      %v4518 = vmul.f32 %v4304, %v4517
      %v4519 = vmul.f32 %v4306, %v4517
      %v4520 = vrcp.pop %v4490
      %v4521 = vmul.f32 %v4308, %v4520
      %v4522 = vmul.f32 %v4310, %v4520
      %4524 = vset.pattern.permute.xlu0 0
      %4525 = vperm.xlu0 %4524, %v4500
      %v4526 = vpop.permute.xlu0 %4525
      %4529 = vset.pattern.permute.xlu0 0
      %4530 = vperm.xlu0 %4529, %v4501
      %v4531 = vpop.permute.xlu0 %4530
      %4534 = vset.pattern.permute.xlu0 0
      %4535 = vperm.xlu0 %4534, %v4503
      %v4536 = vpop.permute.xlu0 %4535
      %4539 = vset.pattern.permute.xlu0 0
      %4540 = vperm.xlu0 %4539, %v4504
      %v4541 = vpop.permute.xlu0 %4540
      %4544 = vset.pattern.permute.xlu0 0
      %4545 = vperm.xlu0 %4544, %v4506
      %v4546 = vpop.permute.xlu0 %4545
      %4549 = vset.pattern.permute.xlu0 0
      %4550 = vperm.xlu0 %4549, %v4507
      %v4551 = vpop.permute.xlu0 %4550
      %4554 = vset.pattern.permute.xlu0 0
      %4555 = vperm.xlu0 %4554, %v4509
      %v4556 = vpop.permute.xlu0 %4555
      %4559 = vset.pattern.permute.xlu0 0
      %4560 = vperm.xlu0 %4559, %v4510
      %v4561 = vpop.permute.xlu0 %4560
      %4564 = vset.pattern.permute.xlu0 0
      %4565 = vperm.xlu0 %4564, %v4512
      %v4566 = vpop.permute.xlu0 %4565
      %4569 = vset.pattern.permute.xlu0 0
      %4570 = vperm.xlu0 %4569, %v4513
      %v4571 = vpop.permute.xlu0 %4570
      %4574 = vset.pattern.permute.xlu0 0
      %4575 = vperm.xlu0 %4574, %v4515
      %v4576 = vpop.permute.xlu0 %4575
      %4579 = vset.pattern.permute.xlu0 0
      %4580 = vperm.xlu0 %4579, %v4516
      %v4581 = vpop.permute.xlu0 %4580
      %4584 = vset.pattern.permute.xlu0 0
      %4585 = vperm.xlu0 %4584, %v4518
      %v4586 = vpop.permute.xlu0 %4585
      %4589 = vset.pattern.permute.xlu0 0
      %4590 = vperm.xlu0 %4589, %v4519
      %v4591 = vpop.permute.xlu0 %4590
      %4594 = vset.pattern.permute.xlu0 0
      %4595 = vperm.xlu0 %4594, %v4521
      %v4596 = vpop.permute.xlu0 %4595
      %4599 = vset.pattern.permute.xlu0 0
      %4600 = vperm.xlu0 %4599, %v4522
      %v4601 = vpop.permute.xlu0 %4600
      %v4603 = vmul.f32 %v3857, %v4526
      %v4604 = vmul.f32 %v3858, %v4531
      %v4605 = vmul.f32 %v3859, %v4536
      %v4606 = vmul.f32 %v3860, %v4541
      %v4607 = vmul.f32 %v3861, %v4546
      %v4608 = vmul.f32 %v3862, %v4551
      %v4609 = vmul.f32 %v3863, %v4556
      %v4610 = vmul.f32 %v3864, %v4561
      %v4611 = vmul.f32 %v3865, %v4566
      %v4612 = vmul.f32 %v3866, %v4571
      %v4613 = vmul.f32 %v3867, %v4576
      %v4614 = vmul.f32 %v3868, %v4581
      %v4615 = vmul.f32 %v3869, %v4586
      %v4616 = vmul.f32 %v3870, %v4591
      %v4617 = vmul.f32 %v3871, %v4596
      %v4618 = vmul.f32 %v3872, %v4601
      %v4619 = vsel %vm1548, %v4603, 0.0
      %v4620 = vsel %vm1548, %v4604, 0.0
      %v4621 = vadd.f32 %v4619, %v4620
      %v4622 = vrot.slane %v4621, 4
      %v4623 = vadd.f32 %v4621, %v4622
      %v4624 = vrot.slane %v4623, 2
      %v4625 = vadd.f32 %v4623, %v4624
      %v4626 = vrot.slane %v4625, 1
      %v4627 = vadd.f32 %v4625, %v4626
      %v4628 = vsel %vm1548, %v4605, 0.0
      %v4629 = vsel %vm1548, %v4606, 0.0
      %v4630 = vadd.f32 %v4628, %v4629
      %v4631 = vrot.slane %v4630, 4
      %v4632 = vadd.f32 %v4630, %v4631
      %v4633 = vrot.slane %v4632, 2
      %v4634 = vadd.f32 %v4632, %v4633
      %v4635 = vrot.slane %v4634, 1
      %v4636 = vadd.f32 %v4634, %v4635
      %v4637 = vsel %vm1548, %v4607, 0.0
      %v4638 = vsel %vm1548, %v4608, 0.0
      %v4639 = vadd.f32 %v4637, %v4638
      %v4640 = vrot.slane %v4639, 4
      %v4641 = vadd.f32 %v4639, %v4640
      %v4642 = vrot.slane %v4641, 2
      %v4643 = vadd.f32 %v4641, %v4642
      %v4644 = vrot.slane %v4643, 1
      %v4645 = vadd.f32 %v4643, %v4644
      %v4646 = vsel %vm1548, %v4609, 0.0
      %v4647 = vsel %vm1548, %v4610, 0.0
      %v4648 = vadd.f32 %v4646, %v4647
      %v4649 = vrot.slane %v4648, 4
      %v4650 = vadd.f32 %v4648, %v4649
      %v4651 = vrot.slane %v4650, 2
      %v4652 = vadd.f32 %v4650, %v4651
      %v4653 = vrot.slane %v4652, 1
      %v4654 = vadd.f32 %v4652, %v4653
      %v4655 = vsel %vm1548, %v4611, 0.0
      %v4656 = vsel %vm1548, %v4612, 0.0
      %v4657 = vadd.f32 %v4655, %v4656
      %v4658 = vrot.slane %v4657, 4
      %v4659 = vadd.f32 %v4657, %v4658
      %v4660 = vrot.slane %v4659, 2
      %v4661 = vadd.f32 %v4659, %v4660
      %v4662 = vrot.slane %v4661, 1
      %v4663 = vadd.f32 %v4661, %v4662
      %v4664 = vsel %vm1548, %v4613, 0.0
      %v4665 = vsel %vm1548, %v4614, 0.0
      %v4666 = vadd.f32 %v4664, %v4665
      %v4667 = vrot.slane %v4666, 4
      %v4668 = vadd.f32 %v4666, %v4667
      %v4669 = vrot.slane %v4668, 2
      %v4670 = vadd.f32 %v4668, %v4669
      %v4671 = vrot.slane %v4670, 1
      %v4672 = vadd.f32 %v4670, %v4671
      %v4673 = vsel %vm1548, %v4615, 0.0
      %v4674 = vsel %vm1548, %v4616, 0.0
      %v4675 = vadd.f32 %v4673, %v4674
      %v4676 = vrot.slane %v4675, 4
      %v4677 = vadd.f32 %v4675, %v4676
      %v4678 = vrot.slane %v4677, 2
      %v4679 = vadd.f32 %v4677, %v4678
      %v4680 = vrot.slane %v4679, 1
      %v4681 = vadd.f32 %v4679, %v4680
      %v4682 = vsel %vm1548, %v4617, 0.0
      %v4683 = vsel %vm1548, %v4618, 0.0
      %v4684 = vadd.f32 %v4682, %v4683
      %v4685 = vrot.slane %v4684, 4
      %v4686 = vadd.f32 %v4684, %v4685
      %v4687 = vrot.slane %v4686, 2
      %v4688 = vadd.f32 %v4686, %v4687
      %v4689 = vrot.slane %v4688, 1
      %v4690 = vadd.f32 %v4688, %v4689
      %v4691 = vld [vmem:[%s2 + $0x190] sm:$0xff]
      %v4692 = vld [vmem:[%s2 + $0x198] sm:$0xff]
      %v4693 = vld [vmem:[%s2 + $0x1a0] sm:$0xff]
      %v4694 = vld [vmem:[%s2 + $0x1a8] sm:$0xff]
      %v4695 = vld [vmem:[%s3 + $0x4] sm:$0x1]
      %v4696 = vlaneseq
      %v4697 = vshrl.u32 %v4696, 7
      %v4698 = vsub.s32 0, %v4697
      %v4699 = vrot.slane %v4695, %v4698
      %v4708 = vsel %vm4204, %v4636, %v4627
      %v4709 = vsel %vm4206, %v4645, %v4708
      %v4710 = vsel %vm4208, %v4654, %v4709
      %v4711 = vsel %vm4210, %v4663, %v4710
      %v4712 = vsel %vm4212, %v4672, %v4711
      %v4713 = vsel %vm4214, %v4681, %v4712
      %v4714 = vsel %vm4216, %v4690, %v4713
      %v4715 = vsel %vm1548, %v4714, 0
      %4717 = vmatprep.subr.mxu0 0.0
      %4718 = vmatpush1.msra.mxu0 0.0
      %4719 = vmatprep.subr.mxu0 0.0
      %4720 = vmatpush1.msra.mxu0 0.0
      %4721 = vmatprep.subr.mxu0 0.0
      %4722 = vmatpush1.msra.mxu0 0.0
      %4723 = vmatprep.subr.mxu0 0.0
      %4724 = vmatpush1.msra.mxu0 0.0
      %4725 = vmatprep.subr.mxu0 0.0
      %4726 = vmatpush1.msra.mxu0 0.0
      %4727 = vmatprep.subr.mxu0 0.0
      %4728 = vmatpush1.msra.mxu0 0.0
      %4729 = vmatprep.subr.mxu0 0.0
      %4730 = vmatpush1.msra.mxu0 0.0
      %4731 = vmatprep.subr.mxu0 0.0
      %4732 = vmatpush1.msra.mxu0 0.0
      %4733 = vmatprep.subr.mxu0 0.0
      %4734 = vmatpush1.msra.mxu0 0.0
      %4735 = vmatprep.subr.mxu0 0.0
      %4736 = vmatpush1.msra.mxu0 0.0
      %4737 = vmatprep.subr.mxu0 0.0
      %4738 = vmatpush1.msra.mxu0 0.0
      %4739 = vmatprep.subr.mxu0 0.0
      %4740 = vmatpush1.msra.mxu0 0.0
      %4741 = vmatprep.subr.mxu0 0.0
      %4742 = vmatpush1.msra.mxu0 %v4694
      %4743 = vmatprep.subr.mxu0 0.0
      %4744 = vmatpush1.msra.mxu0 %v4693
      %4745 = vmatprep.subr.mxu0 0.0
      %4746 = vmatpush1.msra.mxu0 %v4692
      %4747 = vmatprep.subr.mxu0 0.0
      %4748 = vmatpush1.msra.mxu0 %v4691
      %4749 = vmatprep.subr.mxu0 0.0
      %4750 = vmatpush2.msra.mxu0 0.0
      %4751 = vmatprep.subr.mxu0 0.0
      %4752 = vmatpush2.msra.mxu0 0.0
      %4753 = vmatprep.subr.mxu0 0.0
      %4754 = vmatpush2.msra.mxu0 0.0
      %4755 = vmatprep.subr.mxu0 0.0
      %4756 = vmatpush2.msra.mxu0 0.0
      %4757 = vmatprep.subr.mxu0 0.0
      %4758 = vmatpush2.msra.mxu0 0.0
      %4759 = vmatprep.subr.mxu0 0.0
      %4760 = vmatpush2.msra.mxu0 0.0
      %4761 = vmatprep.subr.mxu0 0.0
      %4762 = vmatpush2.msra.mxu0 0.0
      %4763 = vmatprep.subr.mxu0 0.0
      %4764 = vmatpush2.msra.mxu0 0.0
      %4765 = vmatprep.subr.mxu0 0.0
      %4766 = vmatpush2.msra.mxu0 0.0
      %4767 = vmatprep.subr.mxu0 0.0
      %4768 = vmatpush2.msra.mxu0 0.0
      %4769 = vmatprep.subr.mxu0 0.0
      %4770 = vmatpush2.msra.mxu0 0.0
      %4771 = vmatprep.subr.mxu0 0.0
      %4772 = vmatpush2.msra.mxu0 0.0
      %4773 = vmatprep.subr.mxu0 0.0
      %4774 = vmatpush2.msra.mxu0 0.0
      %4775 = vmatprep.subr.mxu0 0.0
      %4776 = vmatpush2.msra.mxu0 0.0
      %4777 = vmatprep.subr.mxu0 0.0
      %4778 = vmatpush2.msra.mxu0 0.0
      %4779 = vmatprep.subr.mxu0 0.0
      %4780 = vmatpush2.msra.mxu0 0.0
      %4781 = vmatprep.mubr.f32.mxu0 0.0
      %4782 = vmatmul.mubr.f32.gmra.mxu0 %v4715
      %v4783 = vpop.f32.mrf.mxu0
      %v4784 = vadd.f32 %v4699, %v4783
      %v4785 = vpop.f32.mrf.mxu0
      %4786 = vdwg.mxu0
      %v4787 = vmax.f32 %v4784, 0.0
      %v4788 = vld [vmem:[%s2 + $0x1b0] sm:$0xff]
      %v4789 = vld [vmem:[%s2 + $0x1b8] sm:$0xff]
      %v4790 = vld [vmem:[%s2 + $0x1c0] sm:$0xff]
      %v4791 = vld [vmem:[%s2 + $0x1c8] sm:$0xff]
      %v4792 = vld [vmem:[%s3 + $0x5] sm:$0x1]
      %v4793 = vlaneseq
      %v4794 = vshrl.u32 %v4793, 7
      %v4795 = vsub.s32 0, %v4794
      %v4796 = vrot.slane %v4792, %v4795
      %v4798 = vsel %vm1548, %v4787, 0
      %4800 = vmatprep.subr.mxu0 0.0
      %4801 = vmatpush1.msra.mxu0 0.0
      %4802 = vmatprep.subr.mxu0 0.0
      %4803 = vmatpush1.msra.mxu0 0.0
      %4804 = vmatprep.subr.mxu0 0.0
      %4805 = vmatpush1.msra.mxu0 0.0
      %4806 = vmatprep.subr.mxu0 0.0
      %4807 = vmatpush1.msra.mxu0 0.0
      %4808 = vmatprep.subr.mxu0 0.0
      %4809 = vmatpush1.msra.mxu0 0.0
      %4810 = vmatprep.subr.mxu0 0.0
      %4811 = vmatpush1.msra.mxu0 0.0
      %4812 = vmatprep.subr.mxu0 0.0
      %4813 = vmatpush1.msra.mxu0 0.0
      %4814 = vmatprep.subr.mxu0 0.0
      %4815 = vmatpush1.msra.mxu0 0.0
      %4816 = vmatprep.subr.mxu0 0.0
      %4817 = vmatpush1.msra.mxu0 0.0
      %4818 = vmatprep.subr.mxu0 0.0
      %4819 = vmatpush1.msra.mxu0 0.0
      %4820 = vmatprep.subr.mxu0 0.0
      %4821 = vmatpush1.msra.mxu0 0.0
      %4822 = vmatprep.subr.mxu0 0.0
      %4823 = vmatpush1.msra.mxu0 0.0
      %4824 = vmatprep.subr.mxu0 0.0
      %4825 = vmatpush1.msra.mxu0 %v4791
      %4826 = vmatprep.subr.mxu0 0.0
      %4827 = vmatpush1.msra.mxu0 %v4790
      %4828 = vmatprep.subr.mxu0 0.0
      %4829 = vmatpush1.msra.mxu0 %v4789
      %4830 = vmatprep.subr.mxu0 0.0
      %4831 = vmatpush1.msra.mxu0 %v4788
      %4832 = vmatprep.subr.mxu0 0.0
      %4833 = vmatpush2.msra.mxu0 0.0
      %4834 = vmatprep.subr.mxu0 0.0
      %4835 = vmatpush2.msra.mxu0 0.0
      %4836 = vmatprep.subr.mxu0 0.0
      %4837 = vmatpush2.msra.mxu0 0.0
      %4838 = vmatprep.subr.mxu0 0.0
      %4839 = vmatpush2.msra.mxu0 0.0
      %4840 = vmatprep.subr.mxu0 0.0
      %4841 = vmatpush2.msra.mxu0 0.0
      %4842 = vmatprep.subr.mxu0 0.0
      %4843 = vmatpush2.msra.mxu0 0.0
      %4844 = vmatprep.subr.mxu0 0.0
      %4845 = vmatpush2.msra.mxu0 0.0
      %4846 = vmatprep.subr.mxu0 0.0
      %4847 = vmatpush2.msra.mxu0 0.0
      %4848 = vmatprep.subr.mxu0 0.0
      %4849 = vmatpush2.msra.mxu0 0.0
      %4850 = vmatprep.subr.mxu0 0.0
      %4851 = vmatpush2.msra.mxu0 0.0
      %4852 = vmatprep.subr.mxu0 0.0
      %4853 = vmatpush2.msra.mxu0 0.0
      %4854 = vmatprep.subr.mxu0 0.0
      %4855 = vmatpush2.msra.mxu0 0.0
      %4856 = vmatprep.subr.mxu0 0.0
      %4857 = vmatpush2.msra.mxu0 0.0
      %4858 = vmatprep.subr.mxu0 0.0
      %4859 = vmatpush2.msra.mxu0 0.0
      %4860 = vmatprep.subr.mxu0 0.0
      %4861 = vmatpush2.msra.mxu0 0.0
      %4862 = vmatprep.subr.mxu0 0.0
      %4863 = vmatpush2.msra.mxu0 0.0
      %4864 = vmatprep.mubr.f32.mxu0 0.0
      %4865 = vmatmul.mubr.f32.gmra.mxu0 %v4798
      %v4866 = vpop.f32.mrf.mxu0
      %v4867 = vadd.f32 %v4796, %v4866
      %v4868 = vpop.f32.mrf.mxu0
      %4869 = vdwg.mxu0
      %vm4870 = vcmask 64512
      %4871 = vst.msk [vmem:[%s217] sm:$0xff] %vm4870, %v4867
      %p4872 = scmp.lt.s32.totalorder %s15, 1
      %s4873 = scalar_select %p4872, %s15, 1
      %s4874 = smul.addr %s4873, 8
      %s4875 = scalar_lea.vmem %s4, %s4874
      // Predicated region
      $region37: #{tpu_custom_call.1} parent=35 // pred_check
        %p4876 = pneg %p127
      $region38: #{tpu_custom_call.1} parent=35 // pred_check_branch
        %4878 = sbr.rel (%p4876) target = $region40
      $region39: #{tpu_custom_call.1} parent=35 // pred_region
        _
      $region40: #{tpu_custom_call.1} parent=35 // pred_fallthru
        _
    $region36: #{tpu_custom_call.1} parent=5 // pred_fallthru
      _
    %p4879 = scmp.le.s32.totalorder 2, %s10
    // Predicated region
    $region41: #{tpu_custom_call.1} parent=5 // pred_check
      %p4880 = pneg %p4879
    $region42: #{tpu_custom_call.1} parent=5 // pred_check_branch
      %4882 = sbr.rel (%p4880) target = $region44
    $region43: #{tpu_custom_call.1} parent=5 // pred_region
      %s4883 = ssub.s32 %s10, 2
      // Predicated region
      $region45: #{tpu_custom_call.1} parent=43 // pred_check
        %p4884 = pneg %p133
      $region46: #{tpu_custom_call.1} parent=43 // pred_check_branch
        %4886 = sbr.rel (%p4884) target = $region48
      $region47: #{tpu_custom_call.1} parent=43 // pred_region
        %p4887 = scmp.lt.s32.totalorder %s16, 1
        %s4888 = scalar_select %p4887, %s16, 1
        %s4889 = smul.addr %s4888, 8
        %s4890 = scalar_lea.vmem %s4, %s4889
      $region48: #{tpu_custom_call.1} parent=43 // pred_fallthru
        _
    $region44: #{tpu_custom_call.1} parent=5 // pred_fallthru
      _
  $region6: #{tpu_custom_call.1} parent=0 // loop_footer
    %s14 = sadd.s32 1, %s10
  $region7: #{tpu_custom_call.1} parent=0 // loop_footer_branch
    %9 = sbr.rel target = $region3
  $region8: #{tpu_custom_call.1} parent=0 // loop_exit
    _

</llo_original>
